<compile_context>
chip_gen: v7x
topology: tpu7x:2x2x1
jax: 0.10.0
libtpu: 0.0.40
codegen_flags: <defaults>
</compile_context>

<pallas_src>
import numpy as np
import jax
import jax.numpy as jnp
from jax import lax
from jax.experimental import pallas as pl
from jax.experimental.pallas import tpu as pltpu


# ---------------------------------------------------------------------------
# Fused kernel: 3 x LSTM layer + Linear head, single invocation, no grid.
# ---------------------------------------------------------------------------
def fused_lstm_linear_kernel(
        x_ref,                        # (T*B, D_in)  time-major flattened input
        wih0_ref, whh0_ref, b0_ref,   # layer 0: (D_in,4H), (H,4H), (1,4H)
        wih1_ref, whh1_ref, b1_ref,   # layer 1: (H,4H),   (H,4H), (1,4H)
        wih2_ref, whh2_ref, b2_ref,   # layer 2: (H,4H),   (H,4H), (1,4H)
        wlin_ref, blin_ref,           # (H,1), (1,1)
        out_ref,                      # (B, 1)  final output
        gx_scr,                       # (T*B, 4H) VMEM scratch: hoisted gates
        hseq_scr):                    # (T*B, H)  VMEM scratch: hidden sequence
    H = whh0_ref.shape[0]
    B = out_ref.shape[0]
    TB = hseq_scr.shape[0]
    T = TB // B

    def run_layer(x_flat, wih_ref, whh_ref, b_ref):
        # Hoisted input->hidden matmul for ALL timesteps at once:
        # replaces T tiny matmuls on the serial path with one bigger one.
        gx_scr[...] = (
            jnp.dot(x_flat, wih_ref[...], preferred_element_type=jnp.float32)
            + b_ref[...]
        )
        whh = whh_ref[...]

        def step(t, carry):
            h, c = carry
            gates = gx_scr[pl.ds(t * B, B), :] + jnp.dot(
                h, whh, preferred_element_type=jnp.float32)          # (B, 4H)
            i = jax.nn.sigmoid(gates[:, 0 * H:1 * H])
            f = jax.nn.sigmoid(gates[:, 1 * H:2 * H])
            g = jnp.tanh(gates[:, 2 * H:3 * H])
            o = jax.nn.sigmoid(gates[:, 3 * H:4 * H])
            c_new = f * c + i * g
            h_new = o * jnp.tanh(c_new)
            hseq_scr[pl.ds(t * B, B), :] = h_new   # feeds the next layer
            return h_new, c_new

        h0 = jnp.zeros((B, H), jnp.float32)
        c0 = jnp.zeros((B, H), jnp.float32)
        # T is tiny (8): fully unroll so the LLO scheduler sees the whole chain.
        h_last, _ = lax.fori_loop(0, T, step, (h0, c0), unroll=True)
        return h_last

    # Layer 0 consumes the raw input; layers 1/2 consume the previous layer's
    # hidden sequence straight out of VMEM scratch (no HBM round-trip).
    h_last = run_layer(x_ref[...], wih0_ref, whh0_ref, b0_ref)
    h_last = run_layer(hseq_scr[...], wih1_ref, whh1_ref, b1_ref)
    h_last = run_layer(hseq_scr[...], wih2_ref, whh2_ref, b2_ref)

    # Fused Linear head on the last timestep of the last layer only.
    out_ref[...] = (
        jnp.dot(h_last, wlin_ref[...], preferred_element_type=jnp.float32)
        + blin_ref[...]
    )


# ---------------------------------------------------------------------------
# Wrappers
# ---------------------------------------------------------------------------
def prepare_params(params):
    """One-time prep (NOT per forward): transpose weights, pre-sum biases."""
    layers = []
    for lyr in params["lstm"]:
        H = lyr["w_hh"].shape[1]
        layers.append(dict(
            wih_t=jnp.transpose(lyr["w_ih"]),                     # (D_in, 4H)
            whh_t=jnp.transpose(lyr["w_hh"]),                     # (H, 4H)
            bias=(lyr["b_ih"] + lyr["b_hh"]).reshape(1, 4 * H),   # (1, 4H)
        ))
    return dict(
        lstm=layers,
        lin_w_t=jnp.transpose(params["lin_w"]),                   # (H, 1)
        lin_b=params["lin_b"].reshape(1, 1),                      # (1, 1)
    )


def my_model_forward(x_btd, prepped):
    """x_btd: (B, T, D_in) batch-first (PyTorch layout). Returns (B,)."""
    B, T, D = x_btd.shape
    assert len(prepped["lstm"]) == 3, "kernel is specialized for 3 LSTM layers"
    H = prepped["lstm"][0]["whh_t"].shape[0]

    # Time-major flatten so the whole input goes into VMEM as one small slab.
    x_flat = jnp.transpose(x_btd, (1, 0, 2)).reshape(T * B, D)

    vmem = pl.BlockSpec(memory_space=pltpu.MemorySpace.VMEM)
    args = [x_flat]
    for lyr in prepped["lstm"]:
        args += [lyr["wih_t"], lyr["whh_t"], lyr["bias"]]
    args += [prepped["lin_w_t"], prepped["lin_b"]]

    out = pl.pallas_call(
        fused_lstm_linear_kernel,
        out_shape=jax.ShapeDtypeStruct((B, 1), jnp.float32),
        in_specs=[vmem] * len(args),
        out_specs=vmem,
        scratch_shapes=[
            pltpu.VMEM((T * B, 4 * H), jnp.float32),   # gx_scr
            pltpu.VMEM((T * B, H), jnp.float32),       # hseq_scr
        ],
    )(*args)
    return out[:, 0]                                   # squeeze(1) -> (B,)


# ---------------------------------------------------------------------------
# Deterministic parameter init (PyTorch-style U(-1/sqrt(H), 1/sqrt(H)))
# ---------------------------------------------------------------------------
def init_params(key, d_in, hidden, num_layers):
    k = 1.0 / np.sqrt(hidden)
    layers = []
    for l in range(num_layers):
        in_sz = d_in if l == 0 else hidden
        key, k1, k2, k3, k4 = jax.random.split(key, 5)
        layers.append(dict(
            w_ih=jax.random.uniform(k1, (4 * hidden, in_sz), jnp.float32, -k, k),
            w_hh=jax.random.uniform(k2, (4 * hidden, hidden), jnp.float32, -k, k),
            b_ih=jax.random.uniform(k3, (4 * hidden,), jnp.float32, -k, k),
            b_hh=jax.random.uniform(k4, (4 * hidden,), jnp.float32, -k, k),
        ))
    key, k5, k6 = jax.random.split(key, 3)
    lin_w = jax.random.uniform(k5, (1, hidden), jnp.float32, -k, k)
    lin_b = jax.random.uniform(k6, (1,), jnp.float32, -k, k)
    return dict(lstm=layers, lin_w=lin_w, lin_b=lin_b)


# ---------------------------------------------------------------------------
# Pure-JAX reference (for correctness check)
# ---------------------------------------------------------------------------
def reference_forward(x_btd, params):
    B, T, _ = x_btd.shape
    seq = x_btd
    for layer in params["lstm"]:
        H = layer["w_hh"].shape[1]
        h = jnp.zeros((B, H), jnp.float32)
        c = jnp.zeros((B, H), jnp.float32)
        outs = []
        for t in range(T):
            gates = (seq[:, t, :] @ layer["w_ih"].T
                     + h @ layer["w_hh"].T
                     + layer["b_ih"] + layer["b_hh"])
            i = jax.nn.sigmoid(gates[:, 0 * H:1 * H])
            f = jax.nn.sigmoid(gates[:, 1 * H:2 * H])
            g = jnp.tanh(gates[:, 2 * H:3 * H])
            o = jax.nn.sigmoid(gates[:, 3 * H:4 * H])
            c = f * c + i * g
            h = o * jnp.tanh(c)
            outs.append(h)
        seq = jnp.stack(outs, axis=1)
    out = seq[:, -1, :] @ params["lin_w"].T + params["lin_b"]
    return out[:, 0]


# ---------------------------------------------------------------------------
if __name__ == "__main__":
    B, T, D_IN, LINE, NUM_LAYERS = 2, 8, 8, 32, 3

    key = jax.random.PRNGKey(0)
    key, kx, kp = jax.random.split(key, 3)
    x = jax.random.normal(kx, (B, T, D_IN), jnp.float32)
    params = init_params(kp, D_IN, LINE, NUM_LAYERS)
    prepped = prepare_params(params)   # one-time weight transpose / bias sum

    fwd = jax.jit(my_model_forward)
    out = jax.block_until_ready(fwd(x, prepped))

    ref = reference_forward(x, params)
    np.testing.assert_allclose(np.asarray(out), np.asarray(ref),
                               rtol=1e-4, atol=1e-5)
    assert out.shape == (B,)

    print("KERNEL_OK")
</pallas_src>

<mosaic_0001>
module attributes {stable_mosaic.version = 11 : i64} {
  func.func @fused_lstm_linear_kernel(%arg0: memref<16x8xf32, #tpu.memory_space<vmem>>, %arg1: memref<8x128xf32, #tpu.memory_space<vmem>>, %arg2: memref<32x128xf32, #tpu.memory_space<vmem>>, %arg3: memref<1x128xf32, #tpu.memory_space<vmem>>, %arg4: memref<32x128xf32, #tpu.memory_space<vmem>>, %arg5: memref<32x128xf32, #tpu.memory_space<vmem>>, %arg6: memref<1x128xf32, #tpu.memory_space<vmem>>, %arg7: memref<32x128xf32, #tpu.memory_space<vmem>>, %arg8: memref<32x128xf32, #tpu.memory_space<vmem>>, %arg9: memref<1x128xf32, #tpu.memory_space<vmem>>, %arg10: memref<32x1xf32, #tpu.memory_space<vmem>>, %arg11: memref<1x1xf32, #tpu.memory_space<vmem>>, %arg12: memref<2x1xf32, #tpu.memory_space<vmem>>, %arg13: memref<16x128xf32, #tpu.memory_space<vmem>>, %arg14: memref<16x32xf32, #tpu.memory_space<vmem>>) attributes {dimension_semantics = [], scalar_prefetch = 0 : i64, scratch_operands = 2 : i64, tpu.core_type = #tpu.core_type<tc>} {
    %c0 = arith.constant 0 : index
    %c0_0 = arith.constant 0 : index
    %0 = vector.load %arg0[%c0, %c0_0] : memref<16x8xf32, #tpu.memory_space<vmem>>, vector<16x8xf32>
    %c0_1 = arith.constant 0 : index
    %c0_2 = arith.constant 0 : index
    %1 = vector.load %arg1[%c0_1, %c0_2] : memref<8x128xf32, #tpu.memory_space<vmem>>, vector<8x128xf32>
    %cst = arith.constant dense<0.000000e+00> : vector<16x128xf32>
    %2 = tpu.matmul %0, %1, %cst {dimension_numbers = #tpu.dot_dimension_numbers<[1], [0], [0], [1], [0, 0, 1, 1], [], []>} : vector<16x8xf32>, vector<8x128xf32>, vector<16x128xf32> -> vector<16x128xf32>
    %c0_3 = arith.constant 0 : index
    %c0_4 = arith.constant 0 : index
    %3 = vector.load %arg3[%c0_3, %c0_4] : memref<1x128xf32, #tpu.memory_space<vmem>>, vector<1x128xf32>
    %4 = vector.broadcast %3 : vector<1x128xf32> to vector<16x128xf32>
    %5 = arith.addf %2, %4 : vector<16x128xf32>
    %c0_5 = arith.constant 0 : index
    %c0_6 = arith.constant 0 : index
    %6 = vector.load %arg13[%c0_5, %c0_6] : memref<16x128xf32, #tpu.memory_space<vmem>>, vector<16x128xf32>
    tpu.vector_store %arg13[%c0_5, %c0_6], %5 {strides = array<i32>} : memref<16x128xf32, #tpu.memory_space<vmem>>, vector<16x128xf32>,
    %c0_7 = arith.constant 0 : index
    %c0_8 = arith.constant 0 : index
    %7 = vector.load %arg2[%c0_7, %c0_8] : memref<32x128xf32, #tpu.memory_space<vmem>>, vector<32x128xf32>
    %cst_9 = arith.constant 0.000000e+00 : f32
    %8 = vector.broadcast %cst_9 : f32 to vector<2x32xf32>
    %cst_10 = arith.constant 0.000000e+00 : f32
    %9 = vector.broadcast %cst_10 : f32 to vector<2x32xf32>
    %c0_i32 = arith.constant 0 : i32
    %c2_i32 = arith.constant 2 : i32
    %10 = arith.muli %c0_i32, %c2_i32 : i32
    %11 = arith.index_cast %10 : i32 to index
    %c0_11 = arith.constant 0 : index
    %12 = vector.load %arg13[%11, %c0_11] : memref<16x128xf32, #tpu.memory_space<vmem>>, vector<2x128xf32>
    %cst_12 = arith.constant dense<0.000000e+00> : vector<2x128xf32>
    %13 = tpu.matmul %8, %7, %cst_12 {dimension_numbers = #tpu.dot_dimension_numbers<[1], [0], [0], [1], [0, 0, 1, 1], [], []>} : vector<2x32xf32>, vector<32x128xf32>, vector<2x128xf32> -> vector<2x128xf32>
    %14 = arith.addf %12, %13 : vector<2x128xf32>
    %15 = vector.extract_strided_slice %14 {offsets = [0, 0], sizes = [2, 32], strides = [1, 1]} : vector<2x128xf32> to vector<2x32xf32>
    %16 = arith.negf %15 : vector<2x32xf32>
    %17 = math.exp %16 : vector<2x32xf32>
    %cst_13 = arith.constant 1.000000e+00 : f32
    %18 = vector.broadcast %cst_13 : f32 to vector<2x32xf32>
    %19 = arith.addf %18, %17 : vector<2x32xf32>
    %20 = arith.divf %18, %19 : vector<2x32xf32>
    %21 = vector.extract_strided_slice %14 {offsets = [0, 32], sizes = [2, 32], strides = [1, 1]} : vector<2x128xf32> to vector<2x32xf32>
    %22 = arith.negf %21 : vector<2x32xf32>
    %23 = math.exp %22 : vector<2x32xf32>
    %cst_14 = arith.constant 1.000000e+00 : f32
    %24 = vector.broadcast %cst_14 : f32 to vector<2x32xf32>
    %25 = arith.addf %24, %23 : vector<2x32xf32>
    %26 = arith.divf %24, %25 : vector<2x32xf32>
    %27 = vector.extract_strided_slice %14 {offsets = [0, 64], sizes = [2, 32], strides = [1, 1]} : vector<2x128xf32> to vector<2x32xf32>
    %28 = math.tanh %27 : vector<2x32xf32>
    %29 = vector.extract_strided_slice %14 {offsets = [0, 96], sizes = [2, 32], strides = [1, 1]} : vector<2x128xf32> to vector<2x32xf32>
    %30 = arith.negf %29 : vector<2x32xf32>
    %31 = math.exp %30 : vector<2x32xf32>
    %cst_15 = arith.constant 1.000000e+00 : f32
    %32 = vector.broadcast %cst_15 : f32 to vector<2x32xf32>
    %33 = arith.addf %32, %31 : vector<2x32xf32>
    %34 = arith.divf %32, %33 : vector<2x32xf32>
    %35 = arith.mulf %26, %9 : vector<2x32xf32>
    %36 = arith.mulf %20, %28 : vector<2x32xf32>
    %37 = arith.addf %35, %36 : vector<2x32xf32>
    %38 = math.tanh %37 : vector<2x32xf32>
    %39 = arith.mulf %34, %38 : vector<2x32xf32>
    %c2_i32_16 = arith.constant 2 : i32
    %40 = arith.muli %c0_i32, %c2_i32_16 : i32
    %41 = arith.index_cast %40 : i32 to index
    %c0_17 = arith.constant 0 : index
    %42 = vector.load %arg14[%41, %c0_17] : memref<16x32xf32, #tpu.memory_space<vmem>>, vector<2x32xf32>
    tpu.vector_store %arg14[%41, %c0_17], %39 {strides = array<i32>} : memref<16x32xf32, #tpu.memory_space<vmem>>, vector<2x32xf32>,
    %c1_i32 = arith.constant 1 : i32
    %c2_i32_18 = arith.constant 2 : i32
    %43 = arith.muli %c1_i32, %c2_i32_18 : i32
    %44 = arith.index_cast %43 : i32 to index
    %c0_19 = arith.constant 0 : index
    %45 = vector.load %arg13[%44, %c0_19] : memref<16x128xf32, #tpu.memory_space<vmem>>, vector<2x128xf32>
    %cst_20 = arith.constant dense<0.000000e+00> : vector<2x128xf32>
    %46 = tpu.matmul %39, %7, %cst_20 {dimension_numbers = #tpu.dot_dimension_numbers<[1], [0], [0], [1], [0, 0, 1, 1], [], []>} : vector<2x32xf32>, vector<32x128xf32>, vector<2x128xf32> -> vector<2x128xf32>
    %47 = arith.addf %45, %46 : vector<2x128xf32>
    %48 = vector.extract_strided_slice %47 {offsets = [0, 0], sizes = [2, 32], strides = [1, 1]} : vector<2x128xf32> to vector<2x32xf32>
    %49 = arith.negf %48 : vector<2x32xf32>
    %50 = math.exp %49 : vector<2x32xf32>
    %cst_21 = arith.constant 1.000000e+00 : f32
    %51 = vector.broadcast %cst_21 : f32 to vector<2x32xf32>
    %52 = arith.addf %51, %50 : vector<2x32xf32>
    %53 = arith.divf %51, %52 : vector<2x32xf32>
    %54 = vector.extract_strided_slice %47 {offsets = [0, 32], sizes = [2, 32], strides = [1, 1]} : vector<2x128xf32> to vector<2x32xf32>
    %55 = arith.negf %54 : vector<2x32xf32>
    %56 = math.exp %55 : vector<2x32xf32>
    %cst_22 = arith.constant 1.000000e+00 : f32
    %57 = vector.broadcast %cst_22 : f32 to vector<2x32xf32>
    %58 = arith.addf %57, %56 : vector<2x32xf32>
    %59 = arith.divf %57, %58 : vector<2x32xf32>
    %60 = vector.extract_strided_slice %47 {offsets = [0, 64], sizes = [2, 32], strides = [1, 1]} : vector<2x128xf32> to vector<2x32xf32>
    %61 = math.tanh %60 : vector<2x32xf32>
    %62 = vector.extract_strided_slice %47 {offsets = [0, 96], sizes = [2, 32], strides = [1, 1]} : vector<2x128xf32> to vector<2x32xf32>
    %63 = arith.negf %62 : vector<2x32xf32>
    %64 = math.exp %63 : vector<2x32xf32>
    %cst_23 = arith.constant 1.000000e+00 : f32
    %65 = vector.broadcast %cst_23 : f32 to vector<2x32xf32>
    %66 = arith.addf %65, %64 : vector<2x32xf32>
    %67 = arith.divf %65, %66 : vector<2x32xf32>
    %68 = arith.mulf %59, %37 : vector<2x32xf32>
    %69 = arith.mulf %53, %61 : vector<2x32xf32>
    %70 = arith.addf %68, %69 : vector<2x32xf32>
    %71 = math.tanh %70 : vector<2x32xf32>
    %72 = arith.mulf %67, %71 : vector<2x32xf32>
    %c2_i32_24 = arith.constant 2 : i32
    %73 = arith.muli %c1_i32, %c2_i32_24 : i32
    %74 = arith.index_cast %73 : i32 to index
    %c0_25 = arith.constant 0 : index
    %75 = vector.load %arg14[%74, %c0_25] : memref<16x32xf32, #tpu.memory_space<vmem>>, vector<2x32xf32>
    tpu.vector_store %arg14[%74, %c0_25], %72 {strides = array<i32>} : memref<16x32xf32, #tpu.memory_space<vmem>>, vector<2x32xf32>,
    %c2_i32_26 = arith.constant 2 : i32
    %c2_i32_27 = arith.constant 2 : i32
    %76 = arith.muli %c2_i32_26, %c2_i32_27 : i32
    %77 = arith.index_cast %76 : i32 to index
    %c0_28 = arith.constant 0 : index
    %78 = vector.load %arg13[%77, %c0_28] : memref<16x128xf32, #tpu.memory_space<vmem>>, vector<2x128xf32>
    %cst_29 = arith.constant dense<0.000000e+00> : vector<2x128xf32>
    %79 = tpu.matmul %72, %7, %cst_29 {dimension_numbers = #tpu.dot_dimension_numbers<[1], [0], [0], [1], [0, 0, 1, 1], [], []>} : vector<2x32xf32>, vector<32x128xf32>, vector<2x128xf32> -> vector<2x128xf32>
    %80 = arith.addf %78, %79 : vector<2x128xf32>
    %81 = vector.extract_strided_slice %80 {offsets = [0, 0], sizes = [2, 32], strides = [1, 1]} : vector<2x128xf32> to vector<2x32xf32>
    %82 = arith.negf %81 : vector<2x32xf32>
    %83 = math.exp %82 : vector<2x32xf32>
    %cst_30 = arith.constant 1.000000e+00 : f32
    %84 = vector.broadcast %cst_30 : f32 to vector<2x32xf32>
    %85 = arith.addf %84, %83 : vector<2x32xf32>
    %86 = arith.divf %84, %85 : vector<2x32xf32>
    %87 = vector.extract_strided_slice %80 {offsets = [0, 32], sizes = [2, 32], strides = [1, 1]} : vector<2x128xf32> to vector<2x32xf32>
    %88 = arith.negf %87 : vector<2x32xf32>
    %89 = math.exp %88 : vector<2x32xf32>
    %cst_31 = arith.constant 1.000000e+00 : f32
    %90 = vector.broadcast %cst_31 : f32 to vector<2x32xf32>
    %91 = arith.addf %90, %89 : vector<2x32xf32>
    %92 = arith.divf %90, %91 : vector<2x32xf32>
    %93 = vector.extract_strided_slice %80 {offsets = [0, 64], sizes = [2, 32], strides = [1, 1]} : vector<2x128xf32> to vector<2x32xf32>
    %94 = math.tanh %93 : vector<2x32xf32>
    %95 = vector.extract_strided_slice %80 {offsets = [0, 96], sizes = [2, 32], strides = [1, 1]} : vector<2x128xf32> to vector<2x32xf32>
    %96 = arith.negf %95 : vector<2x32xf32>
    %97 = math.exp %96 : vector<2x32xf32>
    %cst_32 = arith.constant 1.000000e+00 : f32
    %98 = vector.broadcast %cst_32 : f32 to vector<2x32xf32>
    %99 = arith.addf %98, %97 : vector<2x32xf32>
    %100 = arith.divf %98, %99 : vector<2x32xf32>
    %101 = arith.mulf %92, %70 : vector<2x32xf32>
    %102 = arith.mulf %86, %94 : vector<2x32xf32>
    %103 = arith.addf %101, %102 : vector<2x32xf32>
    %104 = math.tanh %103 : vector<2x32xf32>
    %105 = arith.mulf %100, %104 : vector<2x32xf32>
    %c2_i32_33 = arith.constant 2 : i32
    %106 = arith.muli %c2_i32_26, %c2_i32_33 : i32
    %107 = arith.index_cast %106 : i32 to index
    %c0_34 = arith.constant 0 : index
    %108 = vector.load %arg14[%107, %c0_34] : memref<16x32xf32, #tpu.memory_space<vmem>>, vector<2x32xf32>
    tpu.vector_store %arg14[%107, %c0_34], %105 {strides = array<i32>} : memref<16x32xf32, #tpu.memory_space<vmem>>, vector<2x32xf32>,
    %c3_i32 = arith.constant 3 : i32
    %c2_i32_35 = arith.constant 2 : i32
    %109 = arith.muli %c3_i32, %c2_i32_35 : i32
    %110 = arith.index_cast %109 : i32 to index
    %c0_36 = arith.constant 0 : index
    %111 = vector.load %arg13[%110, %c0_36] : memref<16x128xf32, #tpu.memory_space<vmem>>, vector<2x128xf32>
    %cst_37 = arith.constant dense<0.000000e+00> : vector<2x128xf32>
    %112 = tpu.matmul %105, %7, %cst_37 {dimension_numbers = #tpu.dot_dimension_numbers<[1], [0], [0], [1], [0, 0, 1, 1], [], []>} : vector<2x32xf32>, vector<32x128xf32>, vector<2x128xf32> -> vector<2x128xf32>
    %113 = arith.addf %111, %112 : vector<2x128xf32>
    %114 = vector.extract_strided_slice %113 {offsets = [0, 0], sizes = [2, 32], strides = [1, 1]} : vector<2x128xf32> to vector<2x32xf32>
    %115 = arith.negf %114 : vector<2x32xf32>
    %116 = math.exp %115 : vector<2x32xf32>
    %cst_38 = arith.constant 1.000000e+00 : f32
    %117 = vector.broadcast %cst_38 : f32 to vector<2x32xf32>
    %118 = arith.addf %117, %116 : vector<2x32xf32>
    %119 = arith.divf %117, %118 : vector<2x32xf32>
    %120 = vector.extract_strided_slice %113 {offsets = [0, 32], sizes = [2, 32], strides = [1, 1]} : vector<2x128xf32> to vector<2x32xf32>
    %121 = arith.negf %120 : vector<2x32xf32>
    %122 = math.exp %121 : vector<2x32xf32>
    %cst_39 = arith.constant 1.000000e+00 : f32
    %123 = vector.broadcast %cst_39 : f32 to vector<2x32xf32>
    %124 = arith.addf %123, %122 : vector<2x32xf32>
    %125 = arith.divf %123, %124 : vector<2x32xf32>
    %126 = vector.extract_strided_slice %113 {offsets = [0, 64], sizes = [2, 32], strides = [1, 1]} : vector<2x128xf32> to vector<2x32xf32>
    %127 = math.tanh %126 : vector<2x32xf32>
    %128 = vector.extract_strided_slice %113 {offsets = [0, 96], sizes = [2, 32], strides = [1, 1]} : vector<2x128xf32> to vector<2x32xf32>
    %129 = arith.negf %128 : vector<2x32xf32>
    %130 = math.exp %129 : vector<2x32xf32>
    %cst_40 = arith.constant 1.000000e+00 : f32
    %131 = vector.broadcast %cst_40 : f32 to vector<2x32xf32>
    %132 = arith.addf %131, %130 : vector<2x32xf32>
    %133 = arith.divf %131, %132 : vector<2x32xf32>
    %134 = arith.mulf %125, %103 : vector<2x32xf32>
    %135 = arith.mulf %119, %127 : vector<2x32xf32>
    %136 = arith.addf %134, %135 : vector<2x32xf32>
    %137 = math.tanh %136 : vector<2x32xf32>
    %138 = arith.mulf %133, %137 : vector<2x32xf32>
    %c2_i32_41 = arith.constant 2 : i32
    %139 = arith.muli %c3_i32, %c2_i32_41 : i32
    %140 = arith.index_cast %139 : i32 to index
    %c0_42 = arith.constant 0 : index
    %141 = vector.load %arg14[%140, %c0_42] : memref<16x32xf32, #tpu.memory_space<vmem>>, vector<2x32xf32>
    tpu.vector_store %arg14[%140, %c0_42], %138 {strides = array<i32>} : memref<16x32xf32, #tpu.memory_space<vmem>>, vector<2x32xf32>,
    %c4_i32 = arith.constant 4 : i32
    %c2_i32_43 = arith.constant 2 : i32
    %142 = arith.muli %c4_i32, %c2_i32_43 : i32
    %143 = arith.index_cast %142 : i32 to index
    %c0_44 = arith.constant 0 : index
    %144 = vector.load %arg13[%143, %c0_44] : memref<16x128xf32, #tpu.memory_space<vmem>>, vector<2x128xf32>
    %cst_45 = arith.constant dense<0.000000e+00> : vector<2x128xf32>
    %145 = tpu.matmul %138, %7, %cst_45 {dimension_numbers = #tpu.dot_dimension_numbers<[1], [0], [0], [1], [0, 0, 1, 1], [], []>} : vector<2x32xf32>, vector<32x128xf32>, vector<2x128xf32> -> vector<2x128xf32>
    %146 = arith.addf %144, %145 : vector<2x128xf32>
    %147 = vector.extract_strided_slice %146 {offsets = [0, 0], sizes = [2, 32], strides = [1, 1]} : vector<2x128xf32> to vector<2x32xf32>
    %148 = arith.negf %147 : vector<2x32xf32>
    %149 = math.exp %148 : vector<2x32xf32>
    %cst_46 = arith.constant 1.000000e+00 : f32
    %150 = vector.broadcast %cst_46 : f32 to vector<2x32xf32>
    %151 = arith.addf %150, %149 : vector<2x32xf32>
    %152 = arith.divf %150, %151 : vector<2x32xf32>
    %153 = vector.extract_strided_slice %146 {offsets = [0, 32], sizes = [2, 32], strides = [1, 1]} : vector<2x128xf32> to vector<2x32xf32>
    %154 = arith.negf %153 : vector<2x32xf32>
    %155 = math.exp %154 : vector<2x32xf32>
    %cst_47 = arith.constant 1.000000e+00 : f32
    %156 = vector.broadcast %cst_47 : f32 to vector<2x32xf32>
    %157 = arith.addf %156, %155 : vector<2x32xf32>
    %158 = arith.divf %156, %157 : vector<2x32xf32>
    %159 = vector.extract_strided_slice %146 {offsets = [0, 64], sizes = [2, 32], strides = [1, 1]} : vector<2x128xf32> to vector<2x32xf32>
    %160 = math.tanh %159 : vector<2x32xf32>
    %161 = vector.extract_strided_slice %146 {offsets = [0, 96], sizes = [2, 32], strides = [1, 1]} : vector<2x128xf32> to vector<2x32xf32>
    %162 = arith.negf %161 : vector<2x32xf32>
    %163 = math.exp %162 : vector<2x32xf32>
    %cst_48 = arith.constant 1.000000e+00 : f32
    %164 = vector.broadcast %cst_48 : f32 to vector<2x32xf32>
    %165 = arith.addf %164, %163 : vector<2x32xf32>
    %166 = arith.divf %164, %165 : vector<2x32xf32>
    %167 = arith.mulf %158, %136 : vector<2x32xf32>
    %168 = arith.mulf %152, %160 : vector<2x32xf32>
    %169 = arith.addf %167, %168 : vector<2x32xf32>
    %170 = math.tanh %169 : vector<2x32xf32>
    %171 = arith.mulf %166, %170 : vector<2x32xf32>
    %c2_i32_49 = arith.constant 2 : i32
    %172 = arith.muli %c4_i32, %c2_i32_49 : i32
    %173 = arith.index_cast %172 : i32 to index
    %c0_50 = arith.constant 0 : index
    %174 = vector.load %arg14[%173, %c0_50] : memref<16x32xf32, #tpu.memory_space<vmem>>, vector<2x32xf32>
    tpu.vector_store %arg14[%173, %c0_50], %171 {strides = array<i32>} : memref<16x32xf32, #tpu.memory_space<vmem>>, vector<2x32xf32>,
    %c5_i32 = arith.constant 5 : i32
    %c2_i32_51 = arith.constant 2 : i32
    %175 = arith.muli %c5_i32, %c2_i32_51 : i32
    %176 = arith.index_cast %175 : i32 to index
    %c0_52 = arith.constant 0 : index
    %177 = vector.load %arg13[%176, %c0_52] : memref<16x128xf32, #tpu.memory_space<vmem>>, vector<2x128xf32>
    %cst_53 = arith.constant dense<0.000000e+00> : vector<2x128xf32>
    %178 = tpu.matmul %171, %7, %cst_53 {dimension_numbers = #tpu.dot_dimension_numbers<[1], [0], [0], [1], [0, 0, 1, 1], [], []>} : vector<2x32xf32>, vector<32x128xf32>, vector<2x128xf32> -> vector<2x128xf32>
    %179 = arith.addf %177, %178 : vector<2x128xf32>
    %180 = vector.extract_strided_slice %179 {offsets = [0, 0], sizes = [2, 32], strides = [1, 1]} : vector<2x128xf32> to vector<2x32xf32>
    %181 = arith.negf %180 : vector<2x32xf32>
    %182 = math.exp %181 : vector<2x32xf32>
    %cst_54 = arith.constant 1.000000e+00 : f32
    %183 = vector.broadcast %cst_54 : f32 to vector<2x32xf32>
    %184 = arith.addf %183, %182 : vector<2x32xf32>
    %185 = arith.divf %183, %184 : vector<2x32xf32>
    %186 = vector.extract_strided_slice %179 {offsets = [0, 32], sizes = [2, 32], strides = [1, 1]} : vector<2x128xf32> to vector<2x32xf32>
    %187 = arith.negf %186 : vector<2x32xf32>
    %188 = math.exp %187 : vector<2x32xf32>
    %cst_55 = arith.constant 1.000000e+00 : f32
    %189 = vector.broadcast %cst_55 : f32 to vector<2x32xf32>
    %190 = arith.addf %189, %188 : vector<2x32xf32>
    %191 = arith.divf %189, %190 : vector<2x32xf32>
    %192 = vector.extract_strided_slice %179 {offsets = [0, 64], sizes = [2, 32], strides = [1, 1]} : vector<2x128xf32> to vector<2x32xf32>
    %193 = math.tanh %192 : vector<2x32xf32>
    %194 = vector.extract_strided_slice %179 {offsets = [0, 96], sizes = [2, 32], strides = [1, 1]} : vector<2x128xf32> to vector<2x32xf32>
    %195 = arith.negf %194 : vector<2x32xf32>
    %196 = math.exp %195 : vector<2x32xf32>
    %cst_56 = arith.constant 1.000000e+00 : f32
    %197 = vector.broadcast %cst_56 : f32 to vector<2x32xf32>
    %198 = arith.addf %197, %196 : vector<2x32xf32>
    %199 = arith.divf %197, %198 : vector<2x32xf32>
    %200 = arith.mulf %191, %169 : vector<2x32xf32>
    %201 = arith.mulf %185, %193 : vector<2x32xf32>
    %202 = arith.addf %200, %201 : vector<2x32xf32>
    %203 = math.tanh %202 : vector<2x32xf32>
    %204 = arith.mulf %199, %203 : vector<2x32xf32>
    %c2_i32_57 = arith.constant 2 : i32
    %205 = arith.muli %c5_i32, %c2_i32_57 : i32
    %206 = arith.index_cast %205 : i32 to index
    %c0_58 = arith.constant 0 : index
    %207 = vector.load %arg14[%206, %c0_58] : memref<16x32xf32, #tpu.memory_space<vmem>>, vector<2x32xf32>
    tpu.vector_store %arg14[%206, %c0_58], %204 {strides = array<i32>} : memref<16x32xf32, #tpu.memory_space<vmem>>, vector<2x32xf32>,
    %c6_i32 = arith.constant 6 : i32
    %c2_i32_59 = arith.constant 2 : i32
    %208 = arith.muli %c6_i32, %c2_i32_59 : i32
    %209 = arith.index_cast %208 : i32 to index
    %c0_60 = arith.constant 0 : index
    %210 = vector.load %arg13[%209, %c0_60] : memref<16x128xf32, #tpu.memory_space<vmem>>, vector<2x128xf32>
    %cst_61 = arith.constant dense<0.000000e+00> : vector<2x128xf32>
    %211 = tpu.matmul %204, %7, %cst_61 {dimension_numbers = #tpu.dot_dimension_numbers<[1], [0], [0], [1], [0, 0, 1, 1], [], []>} : vector<2x32xf32>, vector<32x128xf32>, vector<2x128xf32> -> vector<2x128xf32>
    %212 = arith.addf %210, %211 : vector<2x128xf32>
    %213 = vector.extract_strided_slice %212 {offsets = [0, 0], sizes = [2, 32], strides = [1, 1]} : vector<2x128xf32> to vector<2x32xf32>
    %214 = arith.negf %213 : vector<2x32xf32>
    %215 = math.exp %214 : vector<2x32xf32>
    %cst_62 = arith.constant 1.000000e+00 : f32
    %216 = vector.broadcast %cst_62 : f32 to vector<2x32xf32>
    %217 = arith.addf %216, %215 : vector<2x32xf32>
    %218 = arith.divf %216, %217 : vector<2x32xf32>
    %219 = vector.extract_strided_slice %212 {offsets = [0, 32], sizes = [2, 32], strides = [1, 1]} : vector<2x128xf32> to vector<2x32xf32>
    %220 = arith.negf %219 : vector<2x32xf32>
    %221 = math.exp %220 : vector<2x32xf32>
    %cst_63 = arith.constant 1.000000e+00 : f32
    %222 = vector.broadcast %cst_63 : f32 to vector<2x32xf32>
    %223 = arith.addf %222, %221 : vector<2x32xf32>
    %224 = arith.divf %222, %223 : vector<2x32xf32>
    %225 = vector.extract_strided_slice %212 {offsets = [0, 64], sizes = [2, 32], strides = [1, 1]} : vector<2x128xf32> to vector<2x32xf32>
    %226 = math.tanh %225 : vector<2x32xf32>
    %227 = vector.extract_strided_slice %212 {offsets = [0, 96], sizes = [2, 32], strides = [1, 1]} : vector<2x128xf32> to vector<2x32xf32>
    %228 = arith.negf %227 : vector<2x32xf32>
    %229 = math.exp %228 : vector<2x32xf32>
    %cst_64 = arith.constant 1.000000e+00 : f32
    %230 = vector.broadcast %cst_64 : f32 to vector<2x32xf32>
    %231 = arith.addf %230, %229 : vector<2x32xf32>
    %232 = arith.divf %230, %231 : vector<2x32xf32>
    %233 = arith.mulf %224, %202 : vector<2x32xf32>
    %234 = arith.mulf %218, %226 : vector<2x32xf32>
    %235 = arith.addf %233, %234 : vector<2x32xf32>
    %236 = math.tanh %235 : vector<2x32xf32>
    %237 = arith.mulf %232, %236 : vector<2x32xf32>
    %c2_i32_65 = arith.constant 2 : i32
    %238 = arith.muli %c6_i32, %c2_i32_65 : i32
    %239 = arith.index_cast %238 : i32 to index
    %c0_66 = arith.constant 0 : index
    %240 = vector.load %arg14[%239, %c0_66] : memref<16x32xf32, #tpu.memory_space<vmem>>, vector<2x32xf32>
    tpu.vector_store %arg14[%239, %c0_66], %237 {strides = array<i32>} : memref<16x32xf32, #tpu.memory_space<vmem>>, vector<2x32xf32>,
    %c7_i32 = arith.constant 7 : i32
    %c2_i32_67 = arith.constant 2 : i32
    %241 = arith.muli %c7_i32, %c2_i32_67 : i32
    %242 = arith.index_cast %241 : i32 to index
    %c0_68 = arith.constant 0 : index
    %243 = vector.load %arg13[%242, %c0_68] : memref<16x128xf32, #tpu.memory_space<vmem>>, vector<2x128xf32>
    %cst_69 = arith.constant dense<0.000000e+00> : vector<2x128xf32>
    %244 = tpu.matmul %237, %7, %cst_69 {dimension_numbers = #tpu.dot_dimension_numbers<[1], [0], [0], [1], [0, 0, 1, 1], [], []>} : vector<2x32xf32>, vector<32x128xf32>, vector<2x128xf32> -> vector<2x128xf32>
    %245 = arith.addf %243, %244 : vector<2x128xf32>
    %246 = vector.extract_strided_slice %245 {offsets = [0, 0], sizes = [2, 32], strides = [1, 1]} : vector<2x128xf32> to vector<2x32xf32>
    %247 = arith.negf %246 : vector<2x32xf32>
    %248 = math.exp %247 : vector<2x32xf32>
    %cst_70 = arith.constant 1.000000e+00 : f32
    %249 = vector.broadcast %cst_70 : f32 to vector<2x32xf32>
    %250 = arith.addf %249, %248 : vector<2x32xf32>
    %251 = arith.divf %249, %250 : vector<2x32xf32>
    %252 = vector.extract_strided_slice %245 {offsets = [0, 32], sizes = [2, 32], strides = [1, 1]} : vector<2x128xf32> to vector<2x32xf32>
    %253 = arith.negf %252 : vector<2x32xf32>
    %254 = math.exp %253 : vector<2x32xf32>
    %cst_71 = arith.constant 1.000000e+00 : f32
    %255 = vector.broadcast %cst_71 : f32 to vector<2x32xf32>
    %256 = arith.addf %255, %254 : vector<2x32xf32>
    %257 = arith.divf %255, %256 : vector<2x32xf32>
    %258 = vector.extract_strided_slice %245 {offsets = [0, 64], sizes = [2, 32], strides = [1, 1]} : vector<2x128xf32> to vector<2x32xf32>
    %259 = math.tanh %258 : vector<2x32xf32>
    %260 = vector.extract_strided_slice %245 {offsets = [0, 96], sizes = [2, 32], strides = [1, 1]} : vector<2x128xf32> to vector<2x32xf32>
    %261 = arith.negf %260 : vector<2x32xf32>
    %262 = math.exp %261 : vector<2x32xf32>
    %cst_72 = arith.constant 1.000000e+00 : f32
    %263 = vector.broadcast %cst_72 : f32 to vector<2x32xf32>
    %264 = arith.addf %263, %262 : vector<2x32xf32>
    %265 = arith.divf %263, %264 : vector<2x32xf32>
    %266 = arith.mulf %257, %235 : vector<2x32xf32>
    %267 = arith.mulf %251, %259 : vector<2x32xf32>
    %268 = arith.addf %266, %267 : vector<2x32xf32>
    %269 = math.tanh %268 : vector<2x32xf32>
    %270 = arith.mulf %265, %269 : vector<2x32xf32>
    %c2_i32_73 = arith.constant 2 : i32
    %271 = arith.muli %c7_i32, %c2_i32_73 : i32
    %272 = arith.index_cast %271 : i32 to index
    %c0_74 = arith.constant 0 : index
    %273 = vector.load %arg14[%272, %c0_74] : memref<16x32xf32, #tpu.memory_space<vmem>>, vector<2x32xf32>
    tpu.vector_store %arg14[%272, %c0_74], %270 {strides = array<i32>} : memref<16x32xf32, #tpu.memory_space<vmem>>, vector<2x32xf32>,
    %c8_i32 = arith.constant 8 : i32
    %c0_75 = arith.constant 0 : index
    %c0_76 = arith.constant 0 : index
    %274 = vector.load %arg14[%c0_75, %c0_76] : memref<16x32xf32, #tpu.memory_space<vmem>>, vector<16x32xf32>
    %c0_77 = arith.constant 0 : index
    %c0_78 = arith.constant 0 : index
    %275 = vector.load %arg4[%c0_77, %c0_78] : memref<32x128xf32, #tpu.memory_space<vmem>>, vector<32x128xf32>
    %cst_79 = arith.constant dense<0.000000e+00> : vector<16x128xf32>
    %276 = tpu.matmul %274, %275, %cst_79 {dimension_numbers = #tpu.dot_dimension_numbers<[1], [0], [0], [1], [0, 0, 1, 1], [], []>} : vector<16x32xf32>, vector<32x128xf32>, vector<16x128xf32> -> vector<16x128xf32>
    %c0_80 = arith.constant 0 : index
    %c0_81 = arith.constant 0 : index
    %277 = vector.load %arg6[%c0_80, %c0_81] : memref<1x128xf32, #tpu.memory_space<vmem>>, vector<1x128xf32>
    %278 = vector.broadcast %277 : vector<1x128xf32> to vector<16x128xf32>
    %279 = arith.addf %276, %278 : vector<16x128xf32>
    %c0_82 = arith.constant 0 : index
    %c0_83 = arith.constant 0 : index
    %280 = vector.load %arg13[%c0_82, %c0_83] : memref<16x128xf32, #tpu.memory_space<vmem>>, vector<16x128xf32>
    tpu.vector_store %arg13[%c0_82, %c0_83], %279 {strides = array<i32>} : memref<16x128xf32, #tpu.memory_space<vmem>>, vector<16x128xf32>,
    %c0_84 = arith.constant 0 : index
    %c0_85 = arith.constant 0 : index
    %281 = vector.load %arg5[%c0_84, %c0_85] : memref<32x128xf32, #tpu.memory_space<vmem>>, vector<32x128xf32>
    %cst_86 = arith.constant 0.000000e+00 : f32
    %282 = vector.broadcast %cst_86 : f32 to vector<2x32xf32>
    %cst_87 = arith.constant 0.000000e+00 : f32
    %283 = vector.broadcast %cst_87 : f32 to vector<2x32xf32>
    %c0_i32_88 = arith.constant 0 : i32
    %c2_i32_89 = arith.constant 2 : i32
    %284 = arith.muli %c0_i32_88, %c2_i32_89 : i32
    %285 = arith.index_cast %284 : i32 to index
    %c0_90 = arith.constant 0 : index
    %286 = vector.load %arg13[%285, %c0_90] : memref<16x128xf32, #tpu.memory_space<vmem>>, vector<2x128xf32>
    %cst_91 = arith.constant dense<0.000000e+00> : vector<2x128xf32>
    %287 = tpu.matmul %282, %281, %cst_91 {dimension_numbers = #tpu.dot_dimension_numbers<[1], [0], [0], [1], [0, 0, 1, 1], [], []>} : vector<2x32xf32>, vector<32x128xf32>, vector<2x128xf32> -> vector<2x128xf32>
    %288 = arith.addf %286, %287 : vector<2x128xf32>
    %289 = vector.extract_strided_slice %288 {offsets = [0, 0], sizes = [2, 32], strides = [1, 1]} : vector<2x128xf32> to vector<2x32xf32>
    %290 = arith.negf %289 : vector<2x32xf32>
    %291 = math.exp %290 : vector<2x32xf32>
    %cst_92 = arith.constant 1.000000e+00 : f32
    %292 = vector.broadcast %cst_92 : f32 to vector<2x32xf32>
    %293 = arith.addf %292, %291 : vector<2x32xf32>
    %294 = arith.divf %292, %293 : vector<2x32xf32>
    %295 = vector.extract_strided_slice %288 {offsets = [0, 32], sizes = [2, 32], strides = [1, 1]} : vector<2x128xf32> to vector<2x32xf32>
    %296 = arith.negf %295 : vector<2x32xf32>
    %297 = math.exp %296 : vector<2x32xf32>
    %cst_93 = arith.constant 1.000000e+00 : f32
    %298 = vector.broadcast %cst_93 : f32 to vector<2x32xf32>
    %299 = arith.addf %298, %297 : vector<2x32xf32>
    %300 = arith.divf %298, %299 : vector<2x32xf32>
    %301 = vector.extract_strided_slice %288 {offsets = [0, 64], sizes = [2, 32], strides = [1, 1]} : vector<2x128xf32> to vector<2x32xf32>
    %302 = math.tanh %301 : vector<2x32xf32>
    %303 = vector.extract_strided_slice %288 {offsets = [0, 96], sizes = [2, 32], strides = [1, 1]} : vector<2x128xf32> to vector<2x32xf32>
    %304 = arith.negf %303 : vector<2x32xf32>
    %305 = math.exp %304 : vector<2x32xf32>
    %cst_94 = arith.constant 1.000000e+00 : f32
    %306 = vector.broadcast %cst_94 : f32 to vector<2x32xf32>
    %307 = arith.addf %306, %305 : vector<2x32xf32>
    %308 = arith.divf %306, %307 : vector<2x32xf32>
    %309 = arith.mulf %300, %283 : vector<2x32xf32>
    %310 = arith.mulf %294, %302 : vector<2x32xf32>
    %311 = arith.addf %309, %310 : vector<2x32xf32>
    %312 = math.tanh %311 : vector<2x32xf32>
    %313 = arith.mulf %308, %312 : vector<2x32xf32>
    %c2_i32_95 = arith.constant 2 : i32
    %314 = arith.muli %c0_i32_88, %c2_i32_95 : i32
    %315 = arith.index_cast %314 : i32 to index
    %c0_96 = arith.constant 0 : index
    %316 = vector.load %arg14[%315, %c0_96] : memref<16x32xf32, #tpu.memory_space<vmem>>, vector<2x32xf32>
    tpu.vector_store %arg14[%315, %c0_96], %313 {strides = array<i32>} : memref<16x32xf32, #tpu.memory_space<vmem>>, vector<2x32xf32>,
    %c1_i32_97 = arith.constant 1 : i32
    %c2_i32_98 = arith.constant 2 : i32
    %317 = arith.muli %c1_i32_97, %c2_i32_98 : i32
    %318 = arith.index_cast %317 : i32 to index
    %c0_99 = arith.constant 0 : index
    %319 = vector.load %arg13[%318, %c0_99] : memref<16x128xf32, #tpu.memory_space<vmem>>, vector<2x128xf32>
    %cst_100 = arith.constant dense<0.000000e+00> : vector<2x128xf32>
    %320 = tpu.matmul %313, %281, %cst_100 {dimension_numbers = #tpu.dot_dimension_numbers<[1], [0], [0], [1], [0, 0, 1, 1], [], []>} : vector<2x32xf32>, vector<32x128xf32>, vector<2x128xf32> -> vector<2x128xf32>
    %321 = arith.addf %319, %320 : vector<2x128xf32>
    %322 = vector.extract_strided_slice %321 {offsets = [0, 0], sizes = [2, 32], strides = [1, 1]} : vector<2x128xf32> to vector<2x32xf32>
    %323 = arith.negf %322 : vector<2x32xf32>
    %324 = math.exp %323 : vector<2x32xf32>
    %cst_101 = arith.constant 1.000000e+00 : f32
    %325 = vector.broadcast %cst_101 : f32 to vector<2x32xf32>
    %326 = arith.addf %325, %324 : vector<2x32xf32>
    %327 = arith.divf %325, %326 : vector<2x32xf32>
    %328 = vector.extract_strided_slice %321 {offsets = [0, 32], sizes = [2, 32], strides = [1, 1]} : vector<2x128xf32> to vector<2x32xf32>
    %329 = arith.negf %328 : vector<2x32xf32>
    %330 = math.exp %329 : vector<2x32xf32>
    %cst_102 = arith.constant 1.000000e+00 : f32
    %331 = vector.broadcast %cst_102 : f32 to vector<2x32xf32>
    %332 = arith.addf %331, %330 : vector<2x32xf32>
    %333 = arith.divf %331, %332 : vector<2x32xf32>
    %334 = vector.extract_strided_slice %321 {offsets = [0, 64], sizes = [2, 32], strides = [1, 1]} : vector<2x128xf32> to vector<2x32xf32>
    %335 = math.tanh %334 : vector<2x32xf32>
    %336 = vector.extract_strided_slice %321 {offsets = [0, 96], sizes = [2, 32], strides = [1, 1]} : vector<2x128xf32> to vector<2x32xf32>
    %337 = arith.negf %336 : vector<2x32xf32>
    %338 = math.exp %337 : vector<2x32xf32>
    %cst_103 = arith.constant 1.000000e+00 : f32
    %339 = vector.broadcast %cst_103 : f32 to vector<2x32xf32>
    %340 = arith.addf %339, %338 : vector<2x32xf32>
    %341 = arith.divf %339, %340 : vector<2x32xf32>
    %342 = arith.mulf %333, %311 : vector<2x32xf32>
    %343 = arith.mulf %327, %335 : vector<2x32xf32>
    %344 = arith.addf %342, %343 : vector<2x32xf32>
    %345 = math.tanh %344 : vector<2x32xf32>
    %346 = arith.mulf %341, %345 : vector<2x32xf32>
    %c2_i32_104 = arith.constant 2 : i32
    %347 = arith.muli %c1_i32_97, %c2_i32_104 : i32
    %348 = arith.index_cast %347 : i32 to index
    %c0_105 = arith.constant 0 : index
    %349 = vector.load %arg14[%348, %c0_105] : memref<16x32xf32, #tpu.memory_space<vmem>>, vector<2x32xf32>
    tpu.vector_store %arg14[%348, %c0_105], %346 {strides = array<i32>} : memref<16x32xf32, #tpu.memory_space<vmem>>, vector<2x32xf32>,
    %c2_i32_106 = arith.constant 2 : i32
    %c2_i32_107 = arith.constant 2 : i32
    %350 = arith.muli %c2_i32_106, %c2_i32_107 : i32
    %351 = arith.index_cast %350 : i32 to index
    %c0_108 = arith.constant 0 : index
    %352 = vector.load %arg13[%351, %c0_108] : memref<16x128xf32, #tpu.memory_space<vmem>>, vector<2x128xf32>
    %cst_109 = arith.constant dense<0.000000e+00> : vector<2x128xf32>
    %353 = tpu.matmul %346, %281, %cst_109 {dimension_numbers = #tpu.dot_dimension_numbers<[1], [0], [0], [1], [0, 0, 1, 1], [], []>} : vector<2x32xf32>, vector<32x128xf32>, vector<2x128xf32> -> vector<2x128xf32>
    %354 = arith.addf %352, %353 : vector<2x128xf32>
    %355 = vector.extract_strided_slice %354 {offsets = [0, 0], sizes = [2, 32], strides = [1, 1]} : vector<2x128xf32> to vector<2x32xf32>
    %356 = arith.negf %355 : vector<2x32xf32>
    %357 = math.exp %356 : vector<2x32xf32>
    %cst_110 = arith.constant 1.000000e+00 : f32
    %358 = vector.broadcast %cst_110 : f32 to vector<2x32xf32>
    %359 = arith.addf %358, %357 : vector<2x32xf32>
    %360 = arith.divf %358, %359 : vector<2x32xf32>
    %361 = vector.extract_strided_slice %354 {offsets = [0, 32], sizes = [2, 32], strides = [1, 1]} : vector<2x128xf32> to vector<2x32xf32>
    %362 = arith.negf %361 : vector<2x32xf32>
    %363 = math.exp %362 : vector<2x32xf32>
    %cst_111 = arith.constant 1.000000e+00 : f32
    %364 = vector.broadcast %cst_111 : f32 to vector<2x32xf32>
    %365 = arith.addf %364, %363 : vector<2x32xf32>
    %366 = arith.divf %364, %365 : vector<2x32xf32>
    %367 = vector.extract_strided_slice %354 {offsets = [0, 64], sizes = [2, 32], strides = [1, 1]} : vector<2x128xf32> to vector<2x32xf32>
    %368 = math.tanh %367 : vector<2x32xf32>
    %369 = vector.extract_strided_slice %354 {offsets = [0, 96], sizes = [2, 32], strides = [1, 1]} : vector<2x128xf32> to vector<2x32xf32>
    %370 = arith.negf %369 : vector<2x32xf32>
    %371 = math.exp %370 : vector<2x32xf32>
    %cst_112 = arith.constant 1.000000e+00 : f32
    %372 = vector.broadcast %cst_112 : f32 to vector<2x32xf32>
    %373 = arith.addf %372, %371 : vector<2x32xf32>
    %374 = arith.divf %372, %373 : vector<2x32xf32>
    %375 = arith.mulf %366, %344 : vector<2x32xf32>
    %376 = arith.mulf %360, %368 : vector<2x32xf32>
    %377 = arith.addf %375, %376 : vector<2x32xf32>
    %378 = math.tanh %377 : vector<2x32xf32>
    %379 = arith.mulf %374, %378 : vector<2x32xf32>
    %c2_i32_113 = arith.constant 2 : i32
    %380 = arith.muli %c2_i32_106, %c2_i32_113 : i32
    %381 = arith.index_cast %380 : i32 to index
    %c0_114 = arith.constant 0 : index
    %382 = vector.load %arg14[%381, %c0_114] : memref<16x32xf32, #tpu.memory_space<vmem>>, vector<2x32xf32>
    tpu.vector_store %arg14[%381, %c0_114], %379 {strides = array<i32>} : memref<16x32xf32, #tpu.memory_space<vmem>>, vector<2x32xf32>,
    %c3_i32_115 = arith.constant 3 : i32
    %c2_i32_116 = arith.constant 2 : i32
    %383 = arith.muli %c3_i32_115, %c2_i32_116 : i32
    %384 = arith.index_cast %383 : i32 to index
    %c0_117 = arith.constant 0 : index
    %385 = vector.load %arg13[%384, %c0_117] : memref<16x128xf32, #tpu.memory_space<vmem>>, vector<2x128xf32>
    %cst_118 = arith.constant dense<0.000000e+00> : vector<2x128xf32>
    %386 = tpu.matmul %379, %281, %cst_118 {dimension_numbers = #tpu.dot_dimension_numbers<[1], [0], [0], [1], [0, 0, 1, 1], [], []>} : vector<2x32xf32>, vector<32x128xf32>, vector<2x128xf32> -> vector<2x128xf32>
    %387 = arith.addf %385, %386 : vector<2x128xf32>
    %388 = vector.extract_strided_slice %387 {offsets = [0, 0], sizes = [2, 32], strides = [1, 1]} : vector<2x128xf32> to vector<2x32xf32>
    %389 = arith.negf %388 : vector<2x32xf32>
    %390 = math.exp %389 : vector<2x32xf32>
    %cst_119 = arith.constant 1.000000e+00 : f32
    %391 = vector.broadcast %cst_119 : f32 to vector<2x32xf32>
    %392 = arith.addf %391, %390 : vector<2x32xf32>
    %393 = arith.divf %391, %392 : vector<2x32xf32>
    %394 = vector.extract_strided_slice %387 {offsets = [0, 32], sizes = [2, 32], strides = [1, 1]} : vector<2x128xf32> to vector<2x32xf32>
    %395 = arith.negf %394 : vector<2x32xf32>
    %396 = math.exp %395 : vector<2x32xf32>
    %cst_120 = arith.constant 1.000000e+00 : f32
    %397 = vector.broadcast %cst_120 : f32 to vector<2x32xf32>
    %398 = arith.addf %397, %396 : vector<2x32xf32>
    %399 = arith.divf %397, %398 : vector<2x32xf32>
    %400 = vector.extract_strided_slice %387 {offsets = [0, 64], sizes = [2, 32], strides = [1, 1]} : vector<2x128xf32> to vector<2x32xf32>
    %401 = math.tanh %400 : vector<2x32xf32>
    %402 = vector.extract_strided_slice %387 {offsets = [0, 96], sizes = [2, 32], strides = [1, 1]} : vector<2x128xf32> to vector<2x32xf32>
    %403 = arith.negf %402 : vector<2x32xf32>
    %404 = math.exp %403 : vector<2x32xf32>
    %cst_121 = arith.constant 1.000000e+00 : f32
    %405 = vector.broadcast %cst_121 : f32 to vector<2x32xf32>
    %406 = arith.addf %405, %404 : vector<2x32xf32>
    %407 = arith.divf %405, %406 : vector<2x32xf32>
    %408 = arith.mulf %399, %377 : vector<2x32xf32>
    %409 = arith.mulf %393, %401 : vector<2x32xf32>
    %410 = arith.addf %408, %409 : vector<2x32xf32>
    %411 = math.tanh %410 : vector<2x32xf32>
    %412 = arith.mulf %407, %411 : vector<2x32xf32>
    %c2_i32_122 = arith.constant 2 : i32
    %413 = arith.muli %c3_i32_115, %c2_i32_122 : i32
    %414 = arith.index_cast %413 : i32 to index
    %c0_123 = arith.constant 0 : index
    %415 = vector.load %arg14[%414, %c0_123] : memref<16x32xf32, #tpu.memory_space<vmem>>, vector<2x32xf32>
    tpu.vector_store %arg14[%414, %c0_123], %412 {strides = array<i32>} : memref<16x32xf32, #tpu.memory_space<vmem>>, vector<2x32xf32>,
    %c4_i32_124 = arith.constant 4 : i32
    %c2_i32_125 = arith.constant 2 : i32
    %416 = arith.muli %c4_i32_124, %c2_i32_125 : i32
    %417 = arith.index_cast %416 : i32 to index
    %c0_126 = arith.constant 0 : index
    %418 = vector.load %arg13[%417, %c0_126] : memref<16x128xf32, #tpu.memory_space<vmem>>, vector<2x128xf32>
    %cst_127 = arith.constant dense<0.000000e+00> : vector<2x128xf32>
    %419 = tpu.matmul %412, %281, %cst_127 {dimension_numbers = #tpu.dot_dimension_numbers<[1], [0], [0], [1], [0, 0, 1, 1], [], []>} : vector<2x32xf32>, vector<32x128xf32>, vector<2x128xf32> -> vector<2x128xf32>
    %420 = arith.addf %418, %419 : vector<2x128xf32>
    %421 = vector.extract_strided_slice %420 {offsets = [0, 0], sizes = [2, 32], strides = [1, 1]} : vector<2x128xf32> to vector<2x32xf32>
    %422 = arith.negf %421 : vector<2x32xf32>
    %423 = math.exp %422 : vector<2x32xf32>
    %cst_128 = arith.constant 1.000000e+00 : f32
    %424 = vector.broadcast %cst_128 : f32 to vector<2x32xf32>
    %425 = arith.addf %424, %423 : vector<2x32xf32>
    %426 = arith.divf %424, %425 : vector<2x32xf32>
    %427 = vector.extract_strided_slice %420 {offsets = [0, 32], sizes = [2, 32], strides = [1, 1]} : vector<2x128xf32> to vector<2x32xf32>
    %428 = arith.negf %427 : vector<2x32xf32>
    %429 = math.exp %428 : vector<2x32xf32>
    %cst_129 = arith.constant 1.000000e+00 : f32
    %430 = vector.broadcast %cst_129 : f32 to vector<2x32xf32>
    %431 = arith.addf %430, %429 : vector<2x32xf32>
    %432 = arith.divf %430, %431 : vector<2x32xf32>
    %433 = vector.extract_strided_slice %420 {offsets = [0, 64], sizes = [2, 32], strides = [1, 1]} : vector<2x128xf32> to vector<2x32xf32>
    %434 = math.tanh %433 : vector<2x32xf32>
    %435 = vector.extract_strided_slice %420 {offsets = [0, 96], sizes = [2, 32], strides = [1, 1]} : vector<2x128xf32> to vector<2x32xf32>
    %436 = arith.negf %435 : vector<2x32xf32>
    %437 = math.exp %436 : vector<2x32xf32>
    %cst_130 = arith.constant 1.000000e+00 : f32
    %438 = vector.broadcast %cst_130 : f32 to vector<2x32xf32>
    %439 = arith.addf %438, %437 : vector<2x32xf32>
    %440 = arith.divf %438, %439 : vector<2x32xf32>
    %441 = arith.mulf %432, %410 : vector<2x32xf32>
    %442 = arith.mulf %426, %434 : vector<2x32xf32>
    %443 = arith.addf %441, %442 : vector<2x32xf32>
    %444 = math.tanh %443 : vector<2x32xf32>
    %445 = arith.mulf %440, %444 : vector<2x32xf32>
    %c2_i32_131 = arith.constant 2 : i32
    %446 = arith.muli %c4_i32_124, %c2_i32_131 : i32
    %447 = arith.index_cast %446 : i32 to index
    %c0_132 = arith.constant 0 : index
    %448 = vector.load %arg14[%447, %c0_132] : memref<16x32xf32, #tpu.memory_space<vmem>>, vector<2x32xf32>
    tpu.vector_store %arg14[%447, %c0_132], %445 {strides = array<i32>} : memref<16x32xf32, #tpu.memory_space<vmem>>, vector<2x32xf32>,
    %c5_i32_133 = arith.constant 5 : i32
    %c2_i32_134 = arith.constant 2 : i32
    %449 = arith.muli %c5_i32_133, %c2_i32_134 : i32
    %450 = arith.index_cast %449 : i32 to index
    %c0_135 = arith.constant 0 : index
    %451 = vector.load %arg13[%450, %c0_135] : memref<16x128xf32, #tpu.memory_space<vmem>>, vector<2x128xf32>
    %cst_136 = arith.constant dense<0.000000e+00> : vector<2x128xf32>
    %452 = tpu.matmul %445, %281, %cst_136 {dimension_numbers = #tpu.dot_dimension_numbers<[1], [0], [0], [1], [0, 0, 1, 1], [], []>} : vector<2x32xf32>, vector<32x128xf32>, vector<2x128xf32> -> vector<2x128xf32>
    %453 = arith.addf %451, %452 : vector<2x128xf32>
    %454 = vector.extract_strided_slice %453 {offsets = [0, 0], sizes = [2, 32], strides = [1, 1]} : vector<2x128xf32> to vector<2x32xf32>
    %455 = arith.negf %454 : vector<2x32xf32>
    %456 = math.exp %455 : vector<2x32xf32>
    %cst_137 = arith.constant 1.000000e+00 : f32
    %457 = vector.broadcast %cst_137 : f32 to vector<2x32xf32>
    %458 = arith.addf %457, %456 : vector<2x32xf32>
    %459 = arith.divf %457, %458 : vector<2x32xf32>
    %460 = vector.extract_strided_slice %453 {offsets = [0, 32], sizes = [2, 32], strides = [1, 1]} : vector<2x128xf32> to vector<2x32xf32>
    %461 = arith.negf %460 : vector<2x32xf32>
    %462 = math.exp %461 : vector<2x32xf32>
    %cst_138 = arith.constant 1.000000e+00 : f32
    %463 = vector.broadcast %cst_138 : f32 to vector<2x32xf32>
    %464 = arith.addf %463, %462 : vector<2x32xf32>
    %465 = arith.divf %463, %464 : vector<2x32xf32>
    %466 = vector.extract_strided_slice %453 {offsets = [0, 64], sizes = [2, 32], strides = [1, 1]} : vector<2x128xf32> to vector<2x32xf32>
    %467 = math.tanh %466 : vector<2x32xf32>
    %468 = vector.extract_strided_slice %453 {offsets = [0, 96], sizes = [2, 32], strides = [1, 1]} : vector<2x128xf32> to vector<2x32xf32>
    %469 = arith.negf %468 : vector<2x32xf32>
    %470 = math.exp %469 : vector<2x32xf32>
    %cst_139 = arith.constant 1.000000e+00 : f32
    %471 = vector.broadcast %cst_139 : f32 to vector<2x32xf32>
    %472 = arith.addf %471, %470 : vector<2x32xf32>
    %473 = arith.divf %471, %472 : vector<2x32xf32>
    %474 = arith.mulf %465, %443 : vector<2x32xf32>
    %475 = arith.mulf %459, %467 : vector<2x32xf32>
    %476 = arith.addf %474, %475 : vector<2x32xf32>
    %477 = math.tanh %476 : vector<2x32xf32>
    %478 = arith.mulf %473, %477 : vector<2x32xf32>
    %c2_i32_140 = arith.constant 2 : i32
    %479 = arith.muli %c5_i32_133, %c2_i32_140 : i32
    %480 = arith.index_cast %479 : i32 to index
    %c0_141 = arith.constant 0 : index
    %481 = vector.load %arg14[%480, %c0_141] : memref<16x32xf32, #tpu.memory_space<vmem>>, vector<2x32xf32>
    tpu.vector_store %arg14[%480, %c0_141], %478 {strides = array<i32>} : memref<16x32xf32, #tpu.memory_space<vmem>>, vector<2x32xf32>,
    %c6_i32_142 = arith.constant 6 : i32
    %c2_i32_143 = arith.constant 2 : i32
    %482 = arith.muli %c6_i32_142, %c2_i32_143 : i32
    %483 = arith.index_cast %482 : i32 to index
    %c0_144 = arith.constant 0 : index
    %484 = vector.load %arg13[%483, %c0_144] : memref<16x128xf32, #tpu.memory_space<vmem>>, vector<2x128xf32>
    %cst_145 = arith.constant dense<0.000000e+00> : vector<2x128xf32>
    %485 = tpu.matmul %478, %281, %cst_145 {dimension_numbers = #tpu.dot_dimension_numbers<[1], [0], [0], [1], [0, 0, 1, 1], [], []>} : vector<2x32xf32>, vector<32x128xf32>, vector<2x128xf32> -> vector<2x128xf32>
    %486 = arith.addf %484, %485 : vector<2x128xf32>
    %487 = vector.extract_strided_slice %486 {offsets = [0, 0], sizes = [2, 32], strides = [1, 1]} : vector<2x128xf32> to vector<2x32xf32>
    %488 = arith.negf %487 : vector<2x32xf32>
    %489 = math.exp %488 : vector<2x32xf32>
    %cst_146 = arith.constant 1.000000e+00 : f32
    %490 = vector.broadcast %cst_146 : f32 to vector<2x32xf32>
    %491 = arith.addf %490, %489 : vector<2x32xf32>
    %492 = arith.divf %490, %491 : vector<2x32xf32>
    %493 = vector.extract_strided_slice %486 {offsets = [0, 32], sizes = [2, 32], strides = [1, 1]} : vector<2x128xf32> to vector<2x32xf32>
    %494 = arith.negf %493 : vector<2x32xf32>
    %495 = math.exp %494 : vector<2x32xf32>
    %cst_147 = arith.constant 1.000000e+00 : f32
    %496 = vector.broadcast %cst_147 : f32 to vector<2x32xf32>
    %497 = arith.addf %496, %495 : vector<2x32xf32>
    %498 = arith.divf %496, %497 : vector<2x32xf32>
    %499 = vector.extract_strided_slice %486 {offsets = [0, 64], sizes = [2, 32], strides = [1, 1]} : vector<2x128xf32> to vector<2x32xf32>
    %500 = math.tanh %499 : vector<2x32xf32>
    %501 = vector.extract_strided_slice %486 {offsets = [0, 96], sizes = [2, 32], strides = [1, 1]} : vector<2x128xf32> to vector<2x32xf32>
    %502 = arith.negf %501 : vector<2x32xf32>
    %503 = math.exp %502 : vector<2x32xf32>
    %cst_148 = arith.constant 1.000000e+00 : f32
    %504 = vector.broadcast %cst_148 : f32 to vector<2x32xf32>
    %505 = arith.addf %504, %503 : vector<2x32xf32>
    %506 = arith.divf %504, %505 : vector<2x32xf32>
    %507 = arith.mulf %498, %476 : vector<2x32xf32>
    %508 = arith.mulf %492, %500 : vector<2x32xf32>
    %509 = arith.addf %507, %508 : vector<2x32xf32>
    %510 = math.tanh %509 : vector<2x32xf32>
    %511 = arith.mulf %506, %510 : vector<2x32xf32>
    %c2_i32_149 = arith.constant 2 : i32
    %512 = arith.muli %c6_i32_142, %c2_i32_149 : i32
    %513 = arith.index_cast %512 : i32 to index
    %c0_150 = arith.constant 0 : index
    %514 = vector.load %arg14[%513, %c0_150] : memref<16x32xf32, #tpu.memory_space<vmem>>, vector<2x32xf32>
    tpu.vector_store %arg14[%513, %c0_150], %511 {strides = array<i32>} : memref<16x32xf32, #tpu.memory_space<vmem>>, vector<2x32xf32>,
    %c7_i32_151 = arith.constant 7 : i32
    %c2_i32_152 = arith.constant 2 : i32
    %515 = arith.muli %c7_i32_151, %c2_i32_152 : i32
    %516 = arith.index_cast %515 : i32 to index
    %c0_153 = arith.constant 0 : index
    %517 = vector.load %arg13[%516, %c0_153] : memref<16x128xf32, #tpu.memory_space<vmem>>, vector<2x128xf32>
    %cst_154 = arith.constant dense<0.000000e+00> : vector<2x128xf32>
    %518 = tpu.matmul %511, %281, %cst_154 {dimension_numbers = #tpu.dot_dimension_numbers<[1], [0], [0], [1], [0, 0, 1, 1], [], []>} : vector<2x32xf32>, vector<32x128xf32>, vector<2x128xf32> -> vector<2x128xf32>
    %519 = arith.addf %517, %518 : vector<2x128xf32>
    %520 = vector.extract_strided_slice %519 {offsets = [0, 0], sizes = [2, 32], strides = [1, 1]} : vector<2x128xf32> to vector<2x32xf32>
    %521 = arith.negf %520 : vector<2x32xf32>
    %522 = math.exp %521 : vector<2x32xf32>
    %cst_155 = arith.constant 1.000000e+00 : f32
    %523 = vector.broadcast %cst_155 : f32 to vector<2x32xf32>
    %524 = arith.addf %523, %522 : vector<2x32xf32>
    %525 = arith.divf %523, %524 : vector<2x32xf32>
    %526 = vector.extract_strided_slice %519 {offsets = [0, 32], sizes = [2, 32], strides = [1, 1]} : vector<2x128xf32> to vector<2x32xf32>
    %527 = arith.negf %526 : vector<2x32xf32>
    %528 = math.exp %527 : vector<2x32xf32>
    %cst_156 = arith.constant 1.000000e+00 : f32
    %529 = vector.broadcast %cst_156 : f32 to vector<2x32xf32>
    %530 = arith.addf %529, %528 : vector<2x32xf32>
    %531 = arith.divf %529, %530 : vector<2x32xf32>
    %532 = vector.extract_strided_slice %519 {offsets = [0, 64], sizes = [2, 32], strides = [1, 1]} : vector<2x128xf32> to vector<2x32xf32>
    %533 = math.tanh %532 : vector<2x32xf32>
    %534 = vector.extract_strided_slice %519 {offsets = [0, 96], sizes = [2, 32], strides = [1, 1]} : vector<2x128xf32> to vector<2x32xf32>
    %535 = arith.negf %534 : vector<2x32xf32>
    %536 = math.exp %535 : vector<2x32xf32>
    %cst_157 = arith.constant 1.000000e+00 : f32
    %537 = vector.broadcast %cst_157 : f32 to vector<2x32xf32>
    %538 = arith.addf %537, %536 : vector<2x32xf32>
    %539 = arith.divf %537, %538 : vector<2x32xf32>
    %540 = arith.mulf %531, %509 : vector<2x32xf32>
    %541 = arith.mulf %525, %533 : vector<2x32xf32>
    %542 = arith.addf %540, %541 : vector<2x32xf32>
    %543 = math.tanh %542 : vector<2x32xf32>
    %544 = arith.mulf %539, %543 : vector<2x32xf32>
    %c2_i32_158 = arith.constant 2 : i32
    %545 = arith.muli %c7_i32_151, %c2_i32_158 : i32
    %546 = arith.index_cast %545 : i32 to index
    %c0_159 = arith.constant 0 : index
    %547 = vector.load %arg14[%546, %c0_159] : memref<16x32xf32, #tpu.memory_space<vmem>>, vector<2x32xf32>
    tpu.vector_store %arg14[%546, %c0_159], %544 {strides = array<i32>} : memref<16x32xf32, #tpu.memory_space<vmem>>, vector<2x32xf32>,
    %c8_i32_160 = arith.constant 8 : i32
    %c0_161 = arith.constant 0 : index
    %c0_162 = arith.constant 0 : index
    %548 = vector.load %arg14[%c0_161, %c0_162] : memref<16x32xf32, #tpu.memory_space<vmem>>, vector<16x32xf32>
    %c0_163 = arith.constant 0 : index
    %c0_164 = arith.constant 0 : index
    %549 = vector.load %arg7[%c0_163, %c0_164] : memref<32x128xf32, #tpu.memory_space<vmem>>, vector<32x128xf32>
    %cst_165 = arith.constant dense<0.000000e+00> : vector<16x128xf32>
    %550 = tpu.matmul %548, %549, %cst_165 {dimension_numbers = #tpu.dot_dimension_numbers<[1], [0], [0], [1], [0, 0, 1, 1], [], []>} : vector<16x32xf32>, vector<32x128xf32>, vector<16x128xf32> -> vector<16x128xf32>
    %c0_166 = arith.constant 0 : index
    %c0_167 = arith.constant 0 : index
    %551 = vector.load %arg9[%c0_166, %c0_167] : memref<1x128xf32, #tpu.memory_space<vmem>>, vector<1x128xf32>
    %552 = vector.broadcast %551 : vector<1x128xf32> to vector<16x128xf32>
    %553 = arith.addf %550, %552 : vector<16x128xf32>
    %c0_168 = arith.constant 0 : index
    %c0_169 = arith.constant 0 : index
    %554 = vector.load %arg13[%c0_168, %c0_169] : memref<16x128xf32, #tpu.memory_space<vmem>>, vector<16x128xf32>
    tpu.vector_store %arg13[%c0_168, %c0_169], %553 {strides = array<i32>} : memref<16x128xf32, #tpu.memory_space<vmem>>, vector<16x128xf32>,
    %c0_170 = arith.constant 0 : index
    %c0_171 = arith.constant 0 : index
    %555 = vector.load %arg8[%c0_170, %c0_171] : memref<32x128xf32, #tpu.memory_space<vmem>>, vector<32x128xf32>
    %cst_172 = arith.constant 0.000000e+00 : f32
    %556 = vector.broadcast %cst_172 : f32 to vector<2x32xf32>
    %cst_173 = arith.constant 0.000000e+00 : f32
    %557 = vector.broadcast %cst_173 : f32 to vector<2x32xf32>
    %c0_i32_174 = arith.constant 0 : i32
    %c2_i32_175 = arith.constant 2 : i32
    %558 = arith.muli %c0_i32_174, %c2_i32_175 : i32
    %559 = arith.index_cast %558 : i32 to index
    %c0_176 = arith.constant 0 : index
    %560 = vector.load %arg13[%559, %c0_176] : memref<16x128xf32, #tpu.memory_space<vmem>>, vector<2x128xf32>
    %cst_177 = arith.constant dense<0.000000e+00> : vector<2x128xf32>
    %561 = tpu.matmul %556, %555, %cst_177 {dimension_numbers = #tpu.dot_dimension_numbers<[1], [0], [0], [1], [0, 0, 1, 1], [], []>} : vector<2x32xf32>, vector<32x128xf32>, vector<2x128xf32> -> vector<2x128xf32>
    %562 = arith.addf %560, %561 : vector<2x128xf32>
    %563 = vector.extract_strided_slice %562 {offsets = [0, 0], sizes = [2, 32], strides = [1, 1]} : vector<2x128xf32> to vector<2x32xf32>
    %564 = arith.negf %563 : vector<2x32xf32>
    %565 = math.exp %564 : vector<2x32xf32>
    %cst_178 = arith.constant 1.000000e+00 : f32
    %566 = vector.broadcast %cst_178 : f32 to vector<2x32xf32>
    %567 = arith.addf %566, %565 : vector<2x32xf32>
    %568 = arith.divf %566, %567 : vector<2x32xf32>
    %569 = vector.extract_strided_slice %562 {offsets = [0, 32], sizes = [2, 32], strides = [1, 1]} : vector<2x128xf32> to vector<2x32xf32>
    %570 = arith.negf %569 : vector<2x32xf32>
    %571 = math.exp %570 : vector<2x32xf32>
    %cst_179 = arith.constant 1.000000e+00 : f32
    %572 = vector.broadcast %cst_179 : f32 to vector<2x32xf32>
    %573 = arith.addf %572, %571 : vector<2x32xf32>
    %574 = arith.divf %572, %573 : vector<2x32xf32>
    %575 = vector.extract_strided_slice %562 {offsets = [0, 64], sizes = [2, 32], strides = [1, 1]} : vector<2x128xf32> to vector<2x32xf32>
    %576 = math.tanh %575 : vector<2x32xf32>
    %577 = vector.extract_strided_slice %562 {offsets = [0, 96], sizes = [2, 32], strides = [1, 1]} : vector<2x128xf32> to vector<2x32xf32>
    %578 = arith.negf %577 : vector<2x32xf32>
    %579 = math.exp %578 : vector<2x32xf32>
    %cst_180 = arith.constant 1.000000e+00 : f32
    %580 = vector.broadcast %cst_180 : f32 to vector<2x32xf32>
    %581 = arith.addf %580, %579 : vector<2x32xf32>
    %582 = arith.divf %580, %581 : vector<2x32xf32>
    %583 = arith.mulf %574, %557 : vector<2x32xf32>
    %584 = arith.mulf %568, %576 : vector<2x32xf32>
    %585 = arith.addf %583, %584 : vector<2x32xf32>
    %586 = math.tanh %585 : vector<2x32xf32>
    %587 = arith.mulf %582, %586 : vector<2x32xf32>
    %c2_i32_181 = arith.constant 2 : i32
    %588 = arith.muli %c0_i32_174, %c2_i32_181 : i32
    %589 = arith.index_cast %588 : i32 to index
    %c0_182 = arith.constant 0 : index
    %590 = vector.load %arg14[%589, %c0_182] : memref<16x32xf32, #tpu.memory_space<vmem>>, vector<2x32xf32>
    tpu.vector_store %arg14[%589, %c0_182], %587 {strides = array<i32>} : memref<16x32xf32, #tpu.memory_space<vmem>>, vector<2x32xf32>,
    %c1_i32_183 = arith.constant 1 : i32
    %c2_i32_184 = arith.constant 2 : i32
    %591 = arith.muli %c1_i32_183, %c2_i32_184 : i32
    %592 = arith.index_cast %591 : i32 to index
    %c0_185 = arith.constant 0 : index
    %593 = vector.load %arg13[%592, %c0_185] : memref<16x128xf32, #tpu.memory_space<vmem>>, vector<2x128xf32>
    %cst_186 = arith.constant dense<0.000000e+00> : vector<2x128xf32>
    %594 = tpu.matmul %587, %555, %cst_186 {dimension_numbers = #tpu.dot_dimension_numbers<[1], [0], [0], [1], [0, 0, 1, 1], [], []>} : vector<2x32xf32>, vector<32x128xf32>, vector<2x128xf32> -> vector<2x128xf32>
    %595 = arith.addf %593, %594 : vector<2x128xf32>
    %596 = vector.extract_strided_slice %595 {offsets = [0, 0], sizes = [2, 32], strides = [1, 1]} : vector<2x128xf32> to vector<2x32xf32>
    %597 = arith.negf %596 : vector<2x32xf32>
    %598 = math.exp %597 : vector<2x32xf32>
    %cst_187 = arith.constant 1.000000e+00 : f32
    %599 = vector.broadcast %cst_187 : f32 to vector<2x32xf32>
    %600 = arith.addf %599, %598 : vector<2x32xf32>
    %601 = arith.divf %599, %600 : vector<2x32xf32>
    %602 = vector.extract_strided_slice %595 {offsets = [0, 32], sizes = [2, 32], strides = [1, 1]} : vector<2x128xf32> to vector<2x32xf32>
    %603 = arith.negf %602 : vector<2x32xf32>
    %604 = math.exp %603 : vector<2x32xf32>
    %cst_188 = arith.constant 1.000000e+00 : f32
    %605 = vector.broadcast %cst_188 : f32 to vector<2x32xf32>
    %606 = arith.addf %605, %604 : vector<2x32xf32>
    %607 = arith.divf %605, %606 : vector<2x32xf32>
    %608 = vector.extract_strided_slice %595 {offsets = [0, 64], sizes = [2, 32], strides = [1, 1]} : vector<2x128xf32> to vector<2x32xf32>
    %609 = math.tanh %608 : vector<2x32xf32>
    %610 = vector.extract_strided_slice %595 {offsets = [0, 96], sizes = [2, 32], strides = [1, 1]} : vector<2x128xf32> to vector<2x32xf32>
    %611 = arith.negf %610 : vector<2x32xf32>
    %612 = math.exp %611 : vector<2x32xf32>
    %cst_189 = arith.constant 1.000000e+00 : f32
    %613 = vector.broadcast %cst_189 : f32 to vector<2x32xf32>
    %614 = arith.addf %613, %612 : vector<2x32xf32>
    %615 = arith.divf %613, %614 : vector<2x32xf32>
    %616 = arith.mulf %607, %585 : vector<2x32xf32>
    %617 = arith.mulf %601, %609 : vector<2x32xf32>
    %618 = arith.addf %616, %617 : vector<2x32xf32>
    %619 = math.tanh %618 : vector<2x32xf32>
    %620 = arith.mulf %615, %619 : vector<2x32xf32>
    %c2_i32_190 = arith.constant 2 : i32
    %621 = arith.muli %c1_i32_183, %c2_i32_190 : i32
    %622 = arith.index_cast %621 : i32 to index
    %c0_191 = arith.constant 0 : index
    %623 = vector.load %arg14[%622, %c0_191] : memref<16x32xf32, #tpu.memory_space<vmem>>, vector<2x32xf32>
    tpu.vector_store %arg14[%622, %c0_191], %620 {strides = array<i32>} : memref<16x32xf32, #tpu.memory_space<vmem>>, vector<2x32xf32>,
    %c2_i32_192 = arith.constant 2 : i32
    %c2_i32_193 = arith.constant 2 : i32
    %624 = arith.muli %c2_i32_192, %c2_i32_193 : i32
    %625 = arith.index_cast %624 : i32 to index
    %c0_194 = arith.constant 0 : index
    %626 = vector.load %arg13[%625, %c0_194] : memref<16x128xf32, #tpu.memory_space<vmem>>, vector<2x128xf32>
    %cst_195 = arith.constant dense<0.000000e+00> : vector<2x128xf32>
    %627 = tpu.matmul %620, %555, %cst_195 {dimension_numbers = #tpu.dot_dimension_numbers<[1], [0], [0], [1], [0, 0, 1, 1], [], []>} : vector<2x32xf32>, vector<32x128xf32>, vector<2x128xf32> -> vector<2x128xf32>
    %628 = arith.addf %626, %627 : vector<2x128xf32>
    %629 = vector.extract_strided_slice %628 {offsets = [0, 0], sizes = [2, 32], strides = [1, 1]} : vector<2x128xf32> to vector<2x32xf32>
    %630 = arith.negf %629 : vector<2x32xf32>
    %631 = math.exp %630 : vector<2x32xf32>
    %cst_196 = arith.constant 1.000000e+00 : f32
    %632 = vector.broadcast %cst_196 : f32 to vector<2x32xf32>
    %633 = arith.addf %632, %631 : vector<2x32xf32>
    %634 = arith.divf %632, %633 : vector<2x32xf32>
    %635 = vector.extract_strided_slice %628 {offsets = [0, 32], sizes = [2, 32], strides = [1, 1]} : vector<2x128xf32> to vector<2x32xf32>
    %636 = arith.negf %635 : vector<2x32xf32>
    %637 = math.exp %636 : vector<2x32xf32>
    %cst_197 = arith.constant 1.000000e+00 : f32
    %638 = vector.broadcast %cst_197 : f32 to vector<2x32xf32>
    %639 = arith.addf %638, %637 : vector<2x32xf32>
    %640 = arith.divf %638, %639 : vector<2x32xf32>
    %641 = vector.extract_strided_slice %628 {offsets = [0, 64], sizes = [2, 32], strides = [1, 1]} : vector<2x128xf32> to vector<2x32xf32>
    %642 = math.tanh %641 : vector<2x32xf32>
    %643 = vector.extract_strided_slice %628 {offsets = [0, 96], sizes = [2, 32], strides = [1, 1]} : vector<2x128xf32> to vector<2x32xf32>
    %644 = arith.negf %643 : vector<2x32xf32>
    %645 = math.exp %644 : vector<2x32xf32>
    %cst_198 = arith.constant 1.000000e+00 : f32
    %646 = vector.broadcast %cst_198 : f32 to vector<2x32xf32>
    %647 = arith.addf %646, %645 : vector<2x32xf32>
    %648 = arith.divf %646, %647 : vector<2x32xf32>
    %649 = arith.mulf %640, %618 : vector<2x32xf32>
    %650 = arith.mulf %634, %642 : vector<2x32xf32>
    %651 = arith.addf %649, %650 : vector<2x32xf32>
    %652 = math.tanh %651 : vector<2x32xf32>
    %653 = arith.mulf %648, %652 : vector<2x32xf32>
    %c2_i32_199 = arith.constant 2 : i32
    %654 = arith.muli %c2_i32_192, %c2_i32_199 : i32
    %655 = arith.index_cast %654 : i32 to index
    %c0_200 = arith.constant 0 : index
    %656 = vector.load %arg14[%655, %c0_200] : memref<16x32xf32, #tpu.memory_space<vmem>>, vector<2x32xf32>
    tpu.vector_store %arg14[%655, %c0_200], %653 {strides = array<i32>} : memref<16x32xf32, #tpu.memory_space<vmem>>, vector<2x32xf32>,
    %c3_i32_201 = arith.constant 3 : i32
    %c2_i32_202 = arith.constant 2 : i32
    %657 = arith.muli %c3_i32_201, %c2_i32_202 : i32
    %658 = arith.index_cast %657 : i32 to index
    %c0_203 = arith.constant 0 : index
    %659 = vector.load %arg13[%658, %c0_203] : memref<16x128xf32, #tpu.memory_space<vmem>>, vector<2x128xf32>
    %cst_204 = arith.constant dense<0.000000e+00> : vector<2x128xf32>
    %660 = tpu.matmul %653, %555, %cst_204 {dimension_numbers = #tpu.dot_dimension_numbers<[1], [0], [0], [1], [0, 0, 1, 1], [], []>} : vector<2x32xf32>, vector<32x128xf32>, vector<2x128xf32> -> vector<2x128xf32>
    %661 = arith.addf %659, %660 : vector<2x128xf32>
    %662 = vector.extract_strided_slice %661 {offsets = [0, 0], sizes = [2, 32], strides = [1, 1]} : vector<2x128xf32> to vector<2x32xf32>
    %663 = arith.negf %662 : vector<2x32xf32>
    %664 = math.exp %663 : vector<2x32xf32>
    %cst_205 = arith.constant 1.000000e+00 : f32
    %665 = vector.broadcast %cst_205 : f32 to vector<2x32xf32>
    %666 = arith.addf %665, %664 : vector<2x32xf32>
    %667 = arith.divf %665, %666 : vector<2x32xf32>
    %668 = vector.extract_strided_slice %661 {offsets = [0, 32], sizes = [2, 32], strides = [1, 1]} : vector<2x128xf32> to vector<2x32xf32>
    %669 = arith.negf %668 : vector<2x32xf32>
    %670 = math.exp %669 : vector<2x32xf32>
    %cst_206 = arith.constant 1.000000e+00 : f32
    %671 = vector.broadcast %cst_206 : f32 to vector<2x32xf32>
    %672 = arith.addf %671, %670 : vector<2x32xf32>
    %673 = arith.divf %671, %672 : vector<2x32xf32>
    %674 = vector.extract_strided_slice %661 {offsets = [0, 64], sizes = [2, 32], strides = [1, 1]} : vector<2x128xf32> to vector<2x32xf32>
    %675 = math.tanh %674 : vector<2x32xf32>
    %676 = vector.extract_strided_slice %661 {offsets = [0, 96], sizes = [2, 32], strides = [1, 1]} : vector<2x128xf32> to vector<2x32xf32>
    %677 = arith.negf %676 : vector<2x32xf32>
    %678 = math.exp %677 : vector<2x32xf32>
    %cst_207 = arith.constant 1.000000e+00 : f32
    %679 = vector.broadcast %cst_207 : f32 to vector<2x32xf32>
    %680 = arith.addf %679, %678 : vector<2x32xf32>
    %681 = arith.divf %679, %680 : vector<2x32xf32>
    %682 = arith.mulf %673, %651 : vector<2x32xf32>
    %683 = arith.mulf %667, %675 : vector<2x32xf32>
    %684 = arith.addf %682, %683 : vector<2x32xf32>
    %685 = math.tanh %684 : vector<2x32xf32>
    %686 = arith.mulf %681, %685 : vector<2x32xf32>
    %c2_i32_208 = arith.constant 2 : i32
    %687 = arith.muli %c3_i32_201, %c2_i32_208 : i32
    %688 = arith.index_cast %687 : i32 to index
    %c0_209 = arith.constant 0 : index
    %689 = vector.load %arg14[%688, %c0_209] : memref<16x32xf32, #tpu.memory_space<vmem>>, vector<2x32xf32>
    tpu.vector_store %arg14[%688, %c0_209], %686 {strides = array<i32>} : memref<16x32xf32, #tpu.memory_space<vmem>>, vector<2x32xf32>,
    %c4_i32_210 = arith.constant 4 : i32
    %c2_i32_211 = arith.constant 2 : i32
    %690 = arith.muli %c4_i32_210, %c2_i32_211 : i32
    %691 = arith.index_cast %690 : i32 to index
    %c0_212 = arith.constant 0 : index
    %692 = vector.load %arg13[%691, %c0_212] : memref<16x128xf32, #tpu.memory_space<vmem>>, vector<2x128xf32>
    %cst_213 = arith.constant dense<0.000000e+00> : vector<2x128xf32>
    %693 = tpu.matmul %686, %555, %cst_213 {dimension_numbers = #tpu.dot_dimension_numbers<[1], [0], [0], [1], [0, 0, 1, 1], [], []>} : vector<2x32xf32>, vector<32x128xf32>, vector<2x128xf32> -> vector<2x128xf32>
    %694 = arith.addf %692, %693 : vector<2x128xf32>
    %695 = vector.extract_strided_slice %694 {offsets = [0, 0], sizes = [2, 32], strides = [1, 1]} : vector<2x128xf32> to vector<2x32xf32>
    %696 = arith.negf %695 : vector<2x32xf32>
    %697 = math.exp %696 : vector<2x32xf32>
    %cst_214 = arith.constant 1.000000e+00 : f32
    %698 = vector.broadcast %cst_214 : f32 to vector<2x32xf32>
    %699 = arith.addf %698, %697 : vector<2x32xf32>
    %700 = arith.divf %698, %699 : vector<2x32xf32>
    %701 = vector.extract_strided_slice %694 {offsets = [0, 32], sizes = [2, 32], strides = [1, 1]} : vector<2x128xf32> to vector<2x32xf32>
    %702 = arith.negf %701 : vector<2x32xf32>
    %703 = math.exp %702 : vector<2x32xf32>
    %cst_215 = arith.constant 1.000000e+00 : f32
    %704 = vector.broadcast %cst_215 : f32 to vector<2x32xf32>
    %705 = arith.addf %704, %703 : vector<2x32xf32>
    %706 = arith.divf %704, %705 : vector<2x32xf32>
    %707 = vector.extract_strided_slice %694 {offsets = [0, 64], sizes = [2, 32], strides = [1, 1]} : vector<2x128xf32> to vector<2x32xf32>
    %708 = math.tanh %707 : vector<2x32xf32>
    %709 = vector.extract_strided_slice %694 {offsets = [0, 96], sizes = [2, 32], strides = [1, 1]} : vector<2x128xf32> to vector<2x32xf32>
    %710 = arith.negf %709 : vector<2x32xf32>
    %711 = math.exp %710 : vector<2x32xf32>
    %cst_216 = arith.constant 1.000000e+00 : f32
    %712 = vector.broadcast %cst_216 : f32 to vector<2x32xf32>
    %713 = arith.addf %712, %711 : vector<2x32xf32>
    %714 = arith.divf %712, %713 : vector<2x32xf32>
    %715 = arith.mulf %706, %684 : vector<2x32xf32>
    %716 = arith.mulf %700, %708 : vector<2x32xf32>
    %717 = arith.addf %715, %716 : vector<2x32xf32>
    %718 = math.tanh %717 : vector<2x32xf32>
    %719 = arith.mulf %714, %718 : vector<2x32xf32>
    %c2_i32_217 = arith.constant 2 : i32
    %720 = arith.muli %c4_i32_210, %c2_i32_217 : i32
    %721 = arith.index_cast %720 : i32 to index
    %c0_218 = arith.constant 0 : index
    %722 = vector.load %arg14[%721, %c0_218] : memref<16x32xf32, #tpu.memory_space<vmem>>, vector<2x32xf32>
    tpu.vector_store %arg14[%721, %c0_218], %719 {strides = array<i32>} : memref<16x32xf32, #tpu.memory_space<vmem>>, vector<2x32xf32>,
    %c5_i32_219 = arith.constant 5 : i32
    %c2_i32_220 = arith.constant 2 : i32
    %723 = arith.muli %c5_i32_219, %c2_i32_220 : i32
    %724 = arith.index_cast %723 : i32 to index
    %c0_221 = arith.constant 0 : index
    %725 = vector.load %arg13[%724, %c0_221] : memref<16x128xf32, #tpu.memory_space<vmem>>, vector<2x128xf32>
    %cst_222 = arith.constant dense<0.000000e+00> : vector<2x128xf32>
    %726 = tpu.matmul %719, %555, %cst_222 {dimension_numbers = #tpu.dot_dimension_numbers<[1], [0], [0], [1], [0, 0, 1, 1], [], []>} : vector<2x32xf32>, vector<32x128xf32>, vector<2x128xf32> -> vector<2x128xf32>
    %727 = arith.addf %725, %726 : vector<2x128xf32>
    %728 = vector.extract_strided_slice %727 {offsets = [0, 0], sizes = [2, 32], strides = [1, 1]} : vector<2x128xf32> to vector<2x32xf32>
    %729 = arith.negf %728 : vector<2x32xf32>
    %730 = math.exp %729 : vector<2x32xf32>
    %cst_223 = arith.constant 1.000000e+00 : f32
    %731 = vector.broadcast %cst_223 : f32 to vector<2x32xf32>
    %732 = arith.addf %731, %730 : vector<2x32xf32>
    %733 = arith.divf %731, %732 : vector<2x32xf32>
    %734 = vector.extract_strided_slice %727 {offsets = [0, 32], sizes = [2, 32], strides = [1, 1]} : vector<2x128xf32> to vector<2x32xf32>
    %735 = arith.negf %734 : vector<2x32xf32>
    %736 = math.exp %735 : vector<2x32xf32>
    %cst_224 = arith.constant 1.000000e+00 : f32
    %737 = vector.broadcast %cst_224 : f32 to vector<2x32xf32>
    %738 = arith.addf %737, %736 : vector<2x32xf32>
    %739 = arith.divf %737, %738 : vector<2x32xf32>
    %740 = vector.extract_strided_slice %727 {offsets = [0, 64], sizes = [2, 32], strides = [1, 1]} : vector<2x128xf32> to vector<2x32xf32>
    %741 = math.tanh %740 : vector<2x32xf32>
    %742 = vector.extract_strided_slice %727 {offsets = [0, 96], sizes = [2, 32], strides = [1, 1]} : vector<2x128xf32> to vector<2x32xf32>
    %743 = arith.negf %742 : vector<2x32xf32>
    %744 = math.exp %743 : vector<2x32xf32>
    %cst_225 = arith.constant 1.000000e+00 : f32
    %745 = vector.broadcast %cst_225 : f32 to vector<2x32xf32>
    %746 = arith.addf %745, %744 : vector<2x32xf32>
    %747 = arith.divf %745, %746 : vector<2x32xf32>
    %748 = arith.mulf %739, %717 : vector<2x32xf32>
    %749 = arith.mulf %733, %741 : vector<2x32xf32>
    %750 = arith.addf %748, %749 : vector<2x32xf32>
    %751 = math.tanh %750 : vector<2x32xf32>
    %752 = arith.mulf %747, %751 : vector<2x32xf32>
    %c2_i32_226 = arith.constant 2 : i32
    %753 = arith.muli %c5_i32_219, %c2_i32_226 : i32
    %754 = arith.index_cast %753 : i32 to index
    %c0_227 = arith.constant 0 : index
    %755 = vector.load %arg14[%754, %c0_227] : memref<16x32xf32, #tpu.memory_space<vmem>>, vector<2x32xf32>
    tpu.vector_store %arg14[%754, %c0_227], %752 {strides = array<i32>} : memref<16x32xf32, #tpu.memory_space<vmem>>, vector<2x32xf32>,
    %c6_i32_228 = arith.constant 6 : i32
    %c2_i32_229 = arith.constant 2 : i32
    %756 = arith.muli %c6_i32_228, %c2_i32_229 : i32
    %757 = arith.index_cast %756 : i32 to index
    %c0_230 = arith.constant 0 : index
    %758 = vector.load %arg13[%757, %c0_230] : memref<16x128xf32, #tpu.memory_space<vmem>>, vector<2x128xf32>
    %cst_231 = arith.constant dense<0.000000e+00> : vector<2x128xf32>
    %759 = tpu.matmul %752, %555, %cst_231 {dimension_numbers = #tpu.dot_dimension_numbers<[1], [0], [0], [1], [0, 0, 1, 1], [], []>} : vector<2x32xf32>, vector<32x128xf32>, vector<2x128xf32> -> vector<2x128xf32>
    %760 = arith.addf %758, %759 : vector<2x128xf32>
    %761 = vector.extract_strided_slice %760 {offsets = [0, 0], sizes = [2, 32], strides = [1, 1]} : vector<2x128xf32> to vector<2x32xf32>
    %762 = arith.negf %761 : vector<2x32xf32>
    %763 = math.exp %762 : vector<2x32xf32>
    %cst_232 = arith.constant 1.000000e+00 : f32
    %764 = vector.broadcast %cst_232 : f32 to vector<2x32xf32>
    %765 = arith.addf %764, %763 : vector<2x32xf32>
    %766 = arith.divf %764, %765 : vector<2x32xf32>
    %767 = vector.extract_strided_slice %760 {offsets = [0, 32], sizes = [2, 32], strides = [1, 1]} : vector<2x128xf32> to vector<2x32xf32>
    %768 = arith.negf %767 : vector<2x32xf32>
    %769 = math.exp %768 : vector<2x32xf32>
    %cst_233 = arith.constant 1.000000e+00 : f32
    %770 = vector.broadcast %cst_233 : f32 to vector<2x32xf32>
    %771 = arith.addf %770, %769 : vector<2x32xf32>
    %772 = arith.divf %770, %771 : vector<2x32xf32>
    %773 = vector.extract_strided_slice %760 {offsets = [0, 64], sizes = [2, 32], strides = [1, 1]} : vector<2x128xf32> to vector<2x32xf32>
    %774 = math.tanh %773 : vector<2x32xf32>
    %775 = vector.extract_strided_slice %760 {offsets = [0, 96], sizes = [2, 32], strides = [1, 1]} : vector<2x128xf32> to vector<2x32xf32>
    %776 = arith.negf %775 : vector<2x32xf32>
    %777 = math.exp %776 : vector<2x32xf32>
    %cst_234 = arith.constant 1.000000e+00 : f32
    %778 = vector.broadcast %cst_234 : f32 to vector<2x32xf32>
    %779 = arith.addf %778, %777 : vector<2x32xf32>
    %780 = arith.divf %778, %779 : vector<2x32xf32>
    %781 = arith.mulf %772, %750 : vector<2x32xf32>
    %782 = arith.mulf %766, %774 : vector<2x32xf32>
    %783 = arith.addf %781, %782 : vector<2x32xf32>
    %784 = math.tanh %783 : vector<2x32xf32>
    %785 = arith.mulf %780, %784 : vector<2x32xf32>
    %c2_i32_235 = arith.constant 2 : i32
    %786 = arith.muli %c6_i32_228, %c2_i32_235 : i32
    %787 = arith.index_cast %786 : i32 to index
    %c0_236 = arith.constant 0 : index
    %788 = vector.load %arg14[%787, %c0_236] : memref<16x32xf32, #tpu.memory_space<vmem>>, vector<2x32xf32>
    tpu.vector_store %arg14[%787, %c0_236], %785 {strides = array<i32>} : memref<16x32xf32, #tpu.memory_space<vmem>>, vector<2x32xf32>,
    %c7_i32_237 = arith.constant 7 : i32
    %c2_i32_238 = arith.constant 2 : i32
    %789 = arith.muli %c7_i32_237, %c2_i32_238 : i32
    %790 = arith.index_cast %789 : i32 to index
    %c0_239 = arith.constant 0 : index
    %791 = vector.load %arg13[%790, %c0_239] : memref<16x128xf32, #tpu.memory_space<vmem>>, vector<2x128xf32>
    %cst_240 = arith.constant dense<0.000000e+00> : vector<2x128xf32>
    %792 = tpu.matmul %785, %555, %cst_240 {dimension_numbers = #tpu.dot_dimension_numbers<[1], [0], [0], [1], [0, 0, 1, 1], [], []>} : vector<2x32xf32>, vector<32x128xf32>, vector<2x128xf32> -> vector<2x128xf32>
    %793 = arith.addf %791, %792 : vector<2x128xf32>
    %794 = vector.extract_strided_slice %793 {offsets = [0, 0], sizes = [2, 32], strides = [1, 1]} : vector<2x128xf32> to vector<2x32xf32>
    %795 = arith.negf %794 : vector<2x32xf32>
    %796 = math.exp %795 : vector<2x32xf32>
    %cst_241 = arith.constant 1.000000e+00 : f32
    %797 = vector.broadcast %cst_241 : f32 to vector<2x32xf32>
    %798 = arith.addf %797, %796 : vector<2x32xf32>
    %799 = arith.divf %797, %798 : vector<2x32xf32>
    %800 = vector.extract_strided_slice %793 {offsets = [0, 32], sizes = [2, 32], strides = [1, 1]} : vector<2x128xf32> to vector<2x32xf32>
    %801 = arith.negf %800 : vector<2x32xf32>
    %802 = math.exp %801 : vector<2x32xf32>
    %cst_242 = arith.constant 1.000000e+00 : f32
    %803 = vector.broadcast %cst_242 : f32 to vector<2x32xf32>
    %804 = arith.addf %803, %802 : vector<2x32xf32>
    %805 = arith.divf %803, %804 : vector<2x32xf32>
    %806 = vector.extract_strided_slice %793 {offsets = [0, 64], sizes = [2, 32], strides = [1, 1]} : vector<2x128xf32> to vector<2x32xf32>
    %807 = math.tanh %806 : vector<2x32xf32>
    %808 = vector.extract_strided_slice %793 {offsets = [0, 96], sizes = [2, 32], strides = [1, 1]} : vector<2x128xf32> to vector<2x32xf32>
    %809 = arith.negf %808 : vector<2x32xf32>
    %810 = math.exp %809 : vector<2x32xf32>
    %cst_243 = arith.constant 1.000000e+00 : f32
    %811 = vector.broadcast %cst_243 : f32 to vector<2x32xf32>
    %812 = arith.addf %811, %810 : vector<2x32xf32>
    %813 = arith.divf %811, %812 : vector<2x32xf32>
    %814 = arith.mulf %805, %783 : vector<2x32xf32>
    %815 = arith.mulf %799, %807 : vector<2x32xf32>
    %816 = arith.addf %814, %815 : vector<2x32xf32>
    %817 = math.tanh %816 : vector<2x32xf32>
    %818 = arith.mulf %813, %817 : vector<2x32xf32>
    %c2_i32_244 = arith.constant 2 : i32
    %819 = arith.muli %c7_i32_237, %c2_i32_244 : i32
    %820 = arith.index_cast %819 : i32 to index
    %c0_245 = arith.constant 0 : index
    %821 = vector.load %arg14[%820, %c0_245] : memref<16x32xf32, #tpu.memory_space<vmem>>, vector<2x32xf32>
    tpu.vector_store %arg14[%820, %c0_245], %818 {strides = array<i32>} : memref<16x32xf32, #tpu.memory_space<vmem>>, vector<2x32xf32>,
    %c8_i32_246 = arith.constant 8 : i32
    %c0_247 = arith.constant 0 : index
    %c0_248 = arith.constant 0 : index
    %822 = vector.load %arg10[%c0_247, %c0_248] : memref<32x1xf32, #tpu.memory_space<vmem>>, vector<32x1xf32>
    %cst_249 = arith.constant dense<0.000000e+00> : vector<2x1xf32>
    %823 = tpu.matmul %818, %822, %cst_249 {dimension_numbers = #tpu.dot_dimension_numbers<[1], [0], [0], [1], [0, 0, 1, 1], [], []>} : vector<2x32xf32>, vector<32x1xf32>, vector<2x1xf32> -> vector<2x1xf32>
    %c0_250 = arith.constant 0 : index
    %c0_251 = arith.constant 0 : index
    %824 = vector.load %arg11[%c0_250, %c0_251] : memref<1x1xf32, #tpu.memory_space<vmem>>, vector<1x1xf32>
    %825 = vector.broadcast %824 : vector<1x1xf32> to vector<2x1xf32>
    %826 = arith.addf %823, %825 : vector<2x1xf32>
    %c0_252 = arith.constant 0 : index
    %c0_253 = arith.constant 0 : index
    %827 = vector.load %arg12[%c0_252, %c0_253] : memref<2x1xf32, #tpu.memory_space<vmem>>, vector<2x1xf32>
    tpu.vector_store %arg12[%c0_252, %c0_253], %826 {strides = array<i32>} : memref<2x1xf32, #tpu.memory_space<vmem>>, vector<2x1xf32>,
    return
  }
}

</mosaic_0001>

<llo_original>
// kernel: my_model_forward.1
$region0: #{my_model_forward.1}
  #allocation0 [shape = 'u32[]', space=smem, size = 0x4, offset = 0x4, fixed_abs, tag = 'smem constant byte address 0x4 - core index']
  #allocation1 [shape = 'u32[144,128]{1,0:T(1,128)}', space=vmem, size = 0x12000, scoped, tag = 'internal scratch']
  #allocation2 [shape = 'f32[16,128]{1,0:T(8,128)}', space=vmem, size = 0x2000, scoped, tag = 'scratch operand']
  #allocation3 [shape = 'f32[16,32]{1,0:T(8,128)}', space=vmem, size = 0x2000, scoped, tag = 'scratch operand']
  #allocation4 [shape = 'f32[1,1]{1,0:T(1,128)S(1)}', space=vmem, size = 0x200, scoped, tag = 'scoped memory for my_model_forward.1']
  %s0 = inlined_call_operand.vmem [shape: f32[16,8], index: 0, kind: input, shape index: {}]
  %s1 = inlined_call_operand.hbm [shape: f32[8,128], index: 1, kind: input, shape index: {}]
  %s2 = inlined_call_operand.vmem [shape: f32[32,128], index: 2, kind: input, shape index: {}]
  %s3 = inlined_call_operand.vmem [shape: f32[1,128], index: 3, kind: input, shape index: {}]
  %s4 = inlined_call_operand.vmem [shape: f32[32,128], index: 4, kind: input, shape index: {}]
  %s5 = inlined_call_operand.vmem [shape: f32[32,128], index: 5, kind: input, shape index: {}]
  %s6 = inlined_call_operand.vmem [shape: f32[1,128], index: 6, kind: input, shape index: {}]
  %s7 = inlined_call_operand.hbm [shape: f32[32,128], index: 7, kind: input, shape index: {}]
  %s8 = inlined_call_operand.hbm [shape: f32[32,128], index: 8, kind: input, shape index: {}]
  %s9 = inlined_call_operand.vmem [shape: f32[1,128], index: 9, kind: input, shape index: {}]
  %s10 = inlined_call_operand.vmem [shape: f32[32,1], index: 10, kind: input, shape index: {}]
  %s11 = inlined_call_operand.<no memory space> [shape: f32[1,1], index: 11, kind: input, shape index: {}]
  %s12 = inlined_call_operand.vmem [shape: f32[2,1], index: 12, kind: output, shape index: {}]
  %s13 = sld [smem:[#allocation0]]
  $region70: #{my_model_forward.1} parent=0
    _
  %s15 = ssub.s32 1, %s13
  %s16 = scalar_select 0, %s15, %s13
  %v17 = vstv %s11
  %18 = vst [vmem:[#allocation4] sm:$0x1] %v17
  $region1: #{my_model_forward.1} parent=0
    #allocation5 [shape = 'u8[4096]{0}', space=vmem, size = 0x1000, scoped, tag = 'input window, operand 1, single buffered']
    #allocation6 [shape = 's32[1]{0}', space=sflag, size = 0x4, scoped, tag = 'scoped memory for my_model_forward.1']
    #allocation7 [shape = 'u8[16384]{0}', space=vmem, size = 0x4000, scoped, tag = 'input window, operand 7, single buffered']
    #allocation8 [shape = 's32[1]{0}', space=sflag, size = 0x4, scoped, tag = 'scoped memory for my_model_forward.1']
    #allocation9 [shape = 'u8[16384]{0}', space=vmem, size = 0x4000, scoped, tag = 'input window, operand 8, single buffered']
    %19 = vsyncpa [#allocation6], 0
    %20 = vsyncpa [#allocation8], 0
    // Predicated region
    $region2: #{my_model_forward.1} parent=1 // pred_check
      _
    $region3: #{my_model_forward.1} parent=1 // pred_check_branch
      %22 = sbr.rel (0) target = $region5
    $region4: #{my_model_forward.1} parent=1 // pred_region
      _
    $region5: #{my_model_forward.1} parent=1 // pred_fallthru
      _
    // Predicated region
    $region6: #{my_model_forward.1} parent=1 // pred_check
      _
    $region7: #{my_model_forward.1} parent=1 // pred_check_branch
      %24 = sbr.rel (0) target = $region9
    $region8: #{my_model_forward.1} parent=1 // pred_region
      %s26 = ssub.s32 128, 128
      %27 = vsyncadd [#allocation6], %s26
      %s29 = sshll.u32 [#allocation5], 4
      %s30 = int_to_ptr.vmem [resolvable:$true] %s29
      %32 = dma.hbm_to_vmem [thread:$0]  %s1, 128, %s30, [#allocation6]
    $region9: #{my_model_forward.1} parent=1 // pred_fallthru
      _
    // Predicated region
    $region10: #{my_model_forward.1} parent=1 // pred_check
      _
    $region11: #{my_model_forward.1} parent=1 // pred_check_branch
      %34 = sbr.rel (0) target = $region13
    $region12: #{my_model_forward.1} parent=1 // pred_region
      _
    $region13: #{my_model_forward.1} parent=1 // pred_fallthru
      _
    // Predicated region
    $region14: #{my_model_forward.1} parent=1 // pred_check
      _
    $region15: #{my_model_forward.1} parent=1 // pred_check_branch
      %36 = sbr.rel (0) target = $region17
    $region16: #{my_model_forward.1} parent=1 // pred_region
      _
    $region17: #{my_model_forward.1} parent=1 // pred_fallthru
      _
    // Predicated region
    $region18: #{my_model_forward.1} parent=1 // pred_check
      _
    $region19: #{my_model_forward.1} parent=1 // pred_check_branch
      %38 = sbr.rel (0) target = $region21
    $region20: #{my_model_forward.1} parent=1 // pred_region
      _
    $region21: #{my_model_forward.1} parent=1 // pred_fallthru
      _
    // Predicated region
    $region22: #{my_model_forward.1} parent=1 // pred_check
      _
    $region23: #{my_model_forward.1} parent=1 // pred_check_branch
      %40 = sbr.rel (0) target = $region25
    $region24: #{my_model_forward.1} parent=1 // pred_region
      _
    $region25: #{my_model_forward.1} parent=1 // pred_fallthru
      _
    // Predicated region
    $region26: #{my_model_forward.1} parent=1 // pred_check
      _
    $region27: #{my_model_forward.1} parent=1 // pred_check_branch
      %42 = sbr.rel (0) target = $region29
    $region28: #{my_model_forward.1} parent=1 // pred_region
      _
    $region29: #{my_model_forward.1} parent=1 // pred_fallthru
      _
    // Predicated region
    $region30: #{my_model_forward.1} parent=1 // pred_check
      _
    $region31: #{my_model_forward.1} parent=1 // pred_check_branch
      %44 = sbr.rel (0) target = $region33
    $region32: #{my_model_forward.1} parent=1 // pred_region
      %s46 = ssub.s32 512, 512
      %47 = vsyncadd [#allocation8], %s46
      %s48 = sshll.u32 [#allocation7], 4
      %s49 = int_to_ptr.vmem [resolvable:$true] %s48
      %54 = dma.hbm_to_vmem [thread:$0]  %s7, 512, %s49, [#allocation8], 128, 128, 8
    $region33: #{my_model_forward.1} parent=1 // pred_fallthru
      _
    // Predicated region
    $region34: #{my_model_forward.1} parent=1 // pred_check
      _
    $region35: #{my_model_forward.1} parent=1 // pred_check_branch
      %56 = sbr.rel (0) target = $region37
    $region36: #{my_model_forward.1} parent=1 // pred_region
      %s58 = ssub.s32 512, 512
      %59 = vsyncadd [#allocation8], %s58
      %s60 = sshll.u32 [#allocation9], 4
      %s61 = int_to_ptr.vmem [resolvable:$true] %s60
      %66 = dma.hbm_to_vmem [thread:$0]  %s8, 512, %s61, [#allocation8], 128, 128, 8
    $region37: #{my_model_forward.1} parent=1 // pred_fallthru
      _
    // Predicated region
    $region38: #{my_model_forward.1} parent=1 // pred_check
      _
    $region39: #{my_model_forward.1} parent=1 // pred_check_branch
      %68 = sbr.rel (0) target = $region41
    $region40: #{my_model_forward.1} parent=1 // pred_region
      _
    $region41: #{my_model_forward.1} parent=1 // pred_fallthru
      _
    // Predicated region
    $region42: #{my_model_forward.1} parent=1 // pred_check
      _
    $region43: #{my_model_forward.1} parent=1 // pred_check_branch
      %70 = sbr.rel (0) target = $region45
    $region44: #{my_model_forward.1} parent=1 // pred_region
      _
    $region45: #{my_model_forward.1} parent=1 // pred_fallthru
      _
    // Predicated region
    $region46: #{my_model_forward.1} parent=1 // pred_check
      _
    $region47: #{my_model_forward.1} parent=1 // pred_check_branch
      %72 = sbr.rel (0) target = $region49
    $region48: #{my_model_forward.1} parent=1 // pred_region
      _
    $region49: #{my_model_forward.1} parent=1 // pred_fallthru
      _
    // Predicated region
    $region50: #{my_model_forward.1} parent=1 // pred_check
      _
    $region51: #{my_model_forward.1} parent=1 // pred_check_branch
      %74 = sbr.rel (0) target = $region53
    $region52: #{my_model_forward.1} parent=1 // pred_region
      %75 = dma.done [#allocation6], 128
    $region53: #{my_model_forward.1} parent=1 // pred_fallthru
      _
    // Predicated region
    $region54: #{my_model_forward.1} parent=1 // pred_check
      _
    $region55: #{my_model_forward.1} parent=1 // pred_check_branch
      %77 = sbr.rel (0) target = $region57
    $region56: #{my_model_forward.1} parent=1 // pred_region
      %78 = dma.done [#allocation8], 512
    $region57: #{my_model_forward.1} parent=1 // pred_fallthru
      _
    // Predicated region
    $region58: #{my_model_forward.1} parent=1 // pred_check
      _
    $region59: #{my_model_forward.1} parent=1 // pred_check_branch
      %80 = sbr.rel (0) target = $region61
    $region60: #{my_model_forward.1} parent=1 // pred_region
      %81 = dma.done [#allocation8], 512
    $region61: #{my_model_forward.1} parent=1 // pred_fallthru
      _
    %v82 = vld [vmem:[%s0] sm:$0xff]
    %v83 = vld [vmem:[%s0 + $0x8] sm:$0xff]
    %v84 = vld [vmem:[#allocation5] sm:$0xff]
    %v85 = vld [vmem:[%s3] sm:$0x1]
    %v87 = vlaneseq
    %v88 = vshrl.u32 %v87, 7
    %v89 = vsub.s32 0, %v88
    %v90 = vrot.slane %v85, %v89
    %vm92 = vcmask 64512
    %v94 = vsel %vm92, %v82, 0
    %v97 = vsel %vm92, %v83, 0
    %99 = vmatprep.subr.mxu0 0.0
    %100 = vmatpush1.msra.mxu0 %v84
    %101 = vmatprep.subr.mxu0 0.0
    %102 = vmatpush1.msra.mxu0 0.0
    %103 = vmatprep.subr.mxu0 0.0
    %104 = vmatpush1.msra.mxu0 0.0
    %105 = vmatprep.subr.mxu0 0.0
    %106 = vmatpush1.msra.mxu0 0.0
    %107 = vmatprep.subr.mxu0 0.0
    %108 = vmatpush1.msra.mxu0 0.0
    %109 = vmatprep.subr.mxu0 0.0
    %110 = vmatpush1.msra.mxu0 0.0
    %111 = vmatprep.subr.mxu0 0.0
    %112 = vmatpush1.msra.mxu0 0.0
    %113 = vmatprep.subr.mxu0 0.0
    %114 = vmatpush1.msra.mxu0 0.0
    %115 = vmatprep.subr.mxu0 0.0
    %116 = vmatpush1.msra.mxu0 0.0
    %117 = vmatprep.subr.mxu0 0.0
    %118 = vmatpush1.msra.mxu0 0.0
    %119 = vmatprep.subr.mxu0 0.0
    %120 = vmatpush1.msra.mxu0 0.0
    %121 = vmatprep.subr.mxu0 0.0
    %122 = vmatpush1.msra.mxu0 0.0
    %123 = vmatprep.subr.mxu0 0.0
    %124 = vmatpush1.msra.mxu0 0.0
    %125 = vmatprep.subr.mxu0 0.0
    %126 = vmatpush1.msra.mxu0 0.0
    %127 = vmatprep.subr.mxu0 0.0
    %128 = vmatpush1.msra.mxu0 0.0
    %129 = vmatprep.subr.mxu0 0.0
    %130 = vmatpush1.msra.mxu0 0.0
    %131 = vmatprep.subr.mxu0 0.0
    %132 = vmatpush1.msra.mxu0 0.0
    %133 = vmatprep.subr.mxu0 0.0
    %134 = vmatpush1.msra.mxu0 0.0
    %135 = vmatprep.subr.mxu0 0.0
    %136 = vmatpush1.msra.mxu0 0.0
    %137 = vmatprep.subr.mxu0 0.0
    %138 = vmatpush1.msra.mxu0 0.0
    %139 = vmatprep.subr.mxu0 0.0
    %140 = vmatpush1.msra.mxu0 0.0
    %141 = vmatprep.subr.mxu0 0.0
    %142 = vmatpush1.msra.mxu0 0.0
    %143 = vmatprep.subr.mxu0 0.0
    %144 = vmatpush1.msra.mxu0 0.0
    %145 = vmatprep.subr.mxu0 0.0
    %146 = vmatpush1.msra.mxu0 0.0
    %147 = vmatprep.subr.mxu0 0.0
    %148 = vmatpush1.msra.mxu0 0.0
    %149 = vmatprep.subr.mxu0 0.0
    %150 = vmatpush1.msra.mxu0 0.0
    %151 = vmatprep.subr.mxu0 0.0
    %152 = vmatpush1.msra.mxu0 0.0
    %153 = vmatprep.subr.mxu0 0.0
    %154 = vmatpush1.msra.mxu0 0.0
    %155 = vmatprep.subr.mxu0 0.0
    %156 = vmatpush1.msra.mxu0 0.0
    %157 = vmatprep.subr.mxu0 0.0
    %158 = vmatpush1.msra.mxu0 0.0
    %159 = vmatprep.subr.mxu0 0.0
    %160 = vmatpush1.msra.mxu0 0.0
    %161 = vmatprep.subr.mxu0 0.0
    %162 = vmatpush1.msra.mxu0 0.0
    %163 = vmatprep.mubr.f32.mxu0 0.0
    %164 = vmatmul.mubr.f32.gmra.mrb[0].mxu0 %v94
    %v165 = vpop.f32.mrb[0].mxu0
    %v166 = vadd.f32 %v90, %v165
    %v167 = vpop.f32.mrb[0].mxu0
    %168 = vmatprep.mubr.f32.mxu0 0.0
    %169 = vmatmul.mubr.f32.gmra.mrb[0].mxu0 %v97
    %v170 = vpop.f32.mrb[0].mxu0
    %v171 = vadd.f32 %v90, %v170
    %v172 = vpop.f32.mrb[0].mxu0
    %173 = vdwg.mxu0
    %174 = vst [vmem:[#allocation2] sm:$0xff] %v166
    %175 = vst [vmem:[#allocation2 + $0x8] sm:$0xff] %v171
    %v176 = vld [vmem:[%s2] sm:$0xff]
    %v177 = vld [vmem:[%s2 + $0x8] sm:$0xff]
    %v178 = vld [vmem:[%s2 + $0x10] sm:$0xff]
    %v179 = vld [vmem:[%s2 + $0x18] sm:$0xff]
    %v180 = vld [vmem:[#allocation2] sm:$0x3]
    %vm181 = vcmask 261120
    %v183 = vsel %vm181, 0.0, 0
    %185 = vmatprep.subr.mxu0 0.0
    %186 = vmatpush1.msra.mxu0 %v176
    %187 = vmatprep.subr.mxu0 0.0
    %188 = vmatpush1.msra.mxu0 %v177
    %189 = vmatprep.subr.mxu0 0.0
    %190 = vmatpush1.msra.mxu0 %v178
    %191 = vmatprep.subr.mxu0 0.0
    %192 = vmatpush1.msra.mxu0 %v179
    %193 = vmatprep.subr.mxu0 0.0
    %194 = vmatpush1.msra.mxu0 0.0
    %195 = vmatprep.subr.mxu0 0.0
    %196 = vmatpush1.msra.mxu0 0.0
    %197 = vmatprep.subr.mxu0 0.0
    %198 = vmatpush1.msra.mxu0 0.0
    %199 = vmatprep.subr.mxu0 0.0
    %200 = vmatpush1.msra.mxu0 0.0
    %201 = vmatprep.subr.mxu0 0.0
    %202 = vmatpush1.msra.mxu0 0.0
    %203 = vmatprep.subr.mxu0 0.0
    %204 = vmatpush1.msra.mxu0 0.0
    %205 = vmatprep.subr.mxu0 0.0
    %206 = vmatpush1.msra.mxu0 0.0
    %207 = vmatprep.subr.mxu0 0.0
    %208 = vmatpush1.msra.mxu0 0.0
    %209 = vmatprep.subr.mxu0 0.0
    %210 = vmatpush1.msra.mxu0 0.0
    %211 = vmatprep.subr.mxu0 0.0
    %212 = vmatpush1.msra.mxu0 0.0
    %213 = vmatprep.subr.mxu0 0.0
    %214 = vmatpush1.msra.mxu0 0.0
    %215 = vmatprep.subr.mxu0 0.0
    %216 = vmatpush1.msra.mxu0 0.0
    %217 = vmatprep.subr.mxu0 0.0
    %218 = vmatpush1.msra.mxu0 0.0
    %219 = vmatprep.subr.mxu0 0.0
    %220 = vmatpush1.msra.mxu0 0.0
    %221 = vmatprep.subr.mxu0 0.0
    %222 = vmatpush1.msra.mxu0 0.0
    %223 = vmatprep.subr.mxu0 0.0
    %224 = vmatpush1.msra.mxu0 0.0
    %225 = vmatprep.subr.mxu0 0.0
    %226 = vmatpush1.msra.mxu0 0.0
    %227 = vmatprep.subr.mxu0 0.0
    %228 = vmatpush1.msra.mxu0 0.0
    %229 = vmatprep.subr.mxu0 0.0
    %230 = vmatpush1.msra.mxu0 0.0
    %231 = vmatprep.subr.mxu0 0.0
    %232 = vmatpush1.msra.mxu0 0.0
    %233 = vmatprep.subr.mxu0 0.0
    %234 = vmatpush1.msra.mxu0 0.0
    %235 = vmatprep.subr.mxu0 0.0
    %236 = vmatpush1.msra.mxu0 0.0
    %237 = vmatprep.subr.mxu0 0.0
    %238 = vmatpush1.msra.mxu0 0.0
    %239 = vmatprep.subr.mxu0 0.0
    %240 = vmatpush1.msra.mxu0 0.0
    %241 = vmatprep.subr.mxu0 0.0
    %242 = vmatpush1.msra.mxu0 0.0
    %243 = vmatprep.subr.mxu0 0.0
    %244 = vmatpush1.msra.mxu0 0.0
    %245 = vmatprep.subr.mxu0 0.0
    %246 = vmatpush1.msra.mxu0 0.0
    %247 = vmatprep.subr.mxu0 0.0
    %248 = vmatpush1.msra.mxu0 0.0
    %249 = vmatprep.mubr.f32.mxu0 0.0
    %250 = vmatmul.mubr.f32.gmra.mrb[0].mxu0 %v183
    %v251 = vpop.f32.mrb[0].mxu0
    %v252 = vadd.f32 0.0, %v251
    %v253 = vpop.f32.mrb[0].mxu0
    %254 = vdwg.mxu0
    %v255 = vadd.f32 %v180, %v252
    %v256 = vxor.u32 %v255, 2147483648
    %v257 = vmul.f32 %v256, 1.442695
    %v258 = vpow.pop %v257
    %v259 = vadd.f32 %v258, 1.0
    %v260 = vrcp.pop %v259
    %v261 = vmul.f32 1.0, %v260
    %v262 = vtanh.pop %v255
    %v263 = vmul.f32 %v261, 0.0
    %265 = vrot.lane.b32.xlu0 %v262, 64
    %v266 = vpop.permute.xlu0 %265
    %v268 = vmul.f32 %v261, %v266
    %270 = vrot.lane.b32.xlu0 %v268, 32
    %v271 = vpop.permute.xlu0 %270
    %v273 = vadd.f32 %v263, %v271
    %v274 = vtanh.pop %v273
    %276 = vrot.lane.b32.xlu0 %v274, 64
    %v277 = vpop.permute.xlu0 %276
    %v279 = vmul.f32 %v261, %v277
    %281 = vrot.lane.b32.xlu0 %v279, 32
    %v282 = vpop.permute.xlu0 %281
    %vm284 = vcmask 254976
    %285 = vst.msk [vmem:[#allocation3] sm:$0x3] %vm284, %v282
    %v286 = vld [vmem:[#allocation2 + $0x2] sm:$0x3]
    %v287 = vsel %vm181, %v282, 0
    %289 = vmatprep.subr.mxu0 0.0
    %290 = vmatpush1.msra.mxu0 %v176
    %291 = vmatprep.subr.mxu0 0.0
    %292 = vmatpush1.msra.mxu0 %v177
    %293 = vmatprep.subr.mxu0 0.0
    %294 = vmatpush1.msra.mxu0 %v178
    %295 = vmatprep.subr.mxu0 0.0
    %296 = vmatpush1.msra.mxu0 %v179
    %297 = vmatprep.subr.mxu0 0.0
    %298 = vmatpush1.msra.mxu0 0.0
    %299 = vmatprep.subr.mxu0 0.0
    %300 = vmatpush1.msra.mxu0 0.0
    %301 = vmatprep.subr.mxu0 0.0
    %302 = vmatpush1.msra.mxu0 0.0
    %303 = vmatprep.subr.mxu0 0.0
    %304 = vmatpush1.msra.mxu0 0.0
    %305 = vmatprep.subr.mxu0 0.0
    %306 = vmatpush1.msra.mxu0 0.0
    %307 = vmatprep.subr.mxu0 0.0
    %308 = vmatpush1.msra.mxu0 0.0
    %309 = vmatprep.subr.mxu0 0.0
    %310 = vmatpush1.msra.mxu0 0.0
    %311 = vmatprep.subr.mxu0 0.0
    %312 = vmatpush1.msra.mxu0 0.0
    %313 = vmatprep.subr.mxu0 0.0
    %314 = vmatpush1.msra.mxu0 0.0
    %315 = vmatprep.subr.mxu0 0.0
    %316 = vmatpush1.msra.mxu0 0.0
    %317 = vmatprep.subr.mxu0 0.0
    %318 = vmatpush1.msra.mxu0 0.0
    %319 = vmatprep.subr.mxu0 0.0
    %320 = vmatpush1.msra.mxu0 0.0
    %321 = vmatprep.subr.mxu0 0.0
    %322 = vmatpush1.msra.mxu0 0.0
    %323 = vmatprep.subr.mxu0 0.0
    %324 = vmatpush1.msra.mxu0 0.0
    %325 = vmatprep.subr.mxu0 0.0
    %326 = vmatpush1.msra.mxu0 0.0
    %327 = vmatprep.subr.mxu0 0.0
    %328 = vmatpush1.msra.mxu0 0.0
    %329 = vmatprep.subr.mxu0 0.0
    %330 = vmatpush1.msra.mxu0 0.0
    %331 = vmatprep.subr.mxu0 0.0
    %332 = vmatpush1.msra.mxu0 0.0
    %333 = vmatprep.subr.mxu0 0.0
    %334 = vmatpush1.msra.mxu0 0.0
    %335 = vmatprep.subr.mxu0 0.0
    %336 = vmatpush1.msra.mxu0 0.0
    %337 = vmatprep.subr.mxu0 0.0
    %338 = vmatpush1.msra.mxu0 0.0
    %339 = vmatprep.subr.mxu0 0.0
    %340 = vmatpush1.msra.mxu0 0.0
    %341 = vmatprep.subr.mxu0 0.0
    %342 = vmatpush1.msra.mxu0 0.0
    %343 = vmatprep.subr.mxu0 0.0
    %344 = vmatpush1.msra.mxu0 0.0
    %345 = vmatprep.subr.mxu0 0.0
    %346 = vmatpush1.msra.mxu0 0.0
    %347 = vmatprep.subr.mxu0 0.0
    %348 = vmatpush1.msra.mxu0 0.0
    %349 = vmatprep.subr.mxu0 0.0
    %350 = vmatpush1.msra.mxu0 0.0
    %351 = vmatprep.subr.mxu0 0.0
    %352 = vmatpush1.msra.mxu0 0.0
    %353 = vmatprep.mubr.f32.mxu0 0.0
    %354 = vmatmul.mubr.f32.gmra.mrb[0].mxu0 %v287
    %v355 = vpop.f32.mrb[0].mxu0
    %v356 = vadd.f32 0.0, %v355
    %v357 = vpop.f32.mrb[0].mxu0
    %358 = vdwg.mxu0
    %v359 = vadd.f32 %v286, %v356
    %v360 = vxor.u32 %v359, 2147483648
    %v361 = vmul.f32 %v360, 1.442695
    %v362 = vpow.pop %v361
    %v363 = vadd.f32 %v362, 1.0
    %v364 = vrcp.pop %v363
    %v365 = vmul.f32 1.0, %v364
    %v366 = vtanh.pop %v359
    %v367 = vmul.f32 %v365, %v273
    %369 = vrot.lane.b32.xlu0 %v366, 64
    %v370 = vpop.permute.xlu0 %369
    %v372 = vmul.f32 %v365, %v370
    %374 = vrot.lane.b32.xlu0 %v372, 32
    %v375 = vpop.permute.xlu0 %374
    %v377 = vadd.f32 %v367, %v375
    %v378 = vtanh.pop %v377
    %380 = vrot.lane.b32.xlu0 %v378, 64
    %v381 = vpop.permute.xlu0 %380
    %v383 = vmul.f32 %v365, %v381
    %385 = vrot.lane.b32.xlu0 %v383, 32
    %v386 = vpop.permute.xlu0 %385
    %388 = vst.msk [vmem:[#allocation3 + $0x2] sm:$0x3] %vm284, %v386
    %v389 = vld [vmem:[#allocation2 + $0x4] sm:$0x3]
    %v390 = vsel %vm181, %v386, 0
    %392 = vmatprep.subr.mxu0 0.0
    %393 = vmatpush1.msra.mxu0 %v176
    %394 = vmatprep.subr.mxu0 0.0
    %395 = vmatpush1.msra.mxu0 %v177
    %396 = vmatprep.subr.mxu0 0.0
    %397 = vmatpush1.msra.mxu0 %v178
    %398 = vmatprep.subr.mxu0 0.0
    %399 = vmatpush1.msra.mxu0 %v179
    %400 = vmatprep.subr.mxu0 0.0
    %401 = vmatpush1.msra.mxu0 0.0
    %402 = vmatprep.subr.mxu0 0.0
    %403 = vmatpush1.msra.mxu0 0.0
    %404 = vmatprep.subr.mxu0 0.0
    %405 = vmatpush1.msra.mxu0 0.0
    %406 = vmatprep.subr.mxu0 0.0
    %407 = vmatpush1.msra.mxu0 0.0
    %408 = vmatprep.subr.mxu0 0.0
    %409 = vmatpush1.msra.mxu0 0.0
    %410 = vmatprep.subr.mxu0 0.0
    %411 = vmatpush1.msra.mxu0 0.0
    %412 = vmatprep.subr.mxu0 0.0
    %413 = vmatpush1.msra.mxu0 0.0
    %414 = vmatprep.subr.mxu0 0.0
    %415 = vmatpush1.msra.mxu0 0.0
    %416 = vmatprep.subr.mxu0 0.0
    %417 = vmatpush1.msra.mxu0 0.0
    %418 = vmatprep.subr.mxu0 0.0
    %419 = vmatpush1.msra.mxu0 0.0
    %420 = vmatprep.subr.mxu0 0.0
    %421 = vmatpush1.msra.mxu0 0.0
    %422 = vmatprep.subr.mxu0 0.0
    %423 = vmatpush1.msra.mxu0 0.0
    %424 = vmatprep.subr.mxu0 0.0
    %425 = vmatpush1.msra.mxu0 0.0
    %426 = vmatprep.subr.mxu0 0.0
    %427 = vmatpush1.msra.mxu0 0.0
    %428 = vmatprep.subr.mxu0 0.0
    %429 = vmatpush1.msra.mxu0 0.0
    %430 = vmatprep.subr.mxu0 0.0
    %431 = vmatpush1.msra.mxu0 0.0
    %432 = vmatprep.subr.mxu0 0.0
    %433 = vmatpush1.msra.mxu0 0.0
    %434 = vmatprep.subr.mxu0 0.0
    %435 = vmatpush1.msra.mxu0 0.0
    %436 = vmatprep.subr.mxu0 0.0
    %437 = vmatpush1.msra.mxu0 0.0
    %438 = vmatprep.subr.mxu0 0.0
    %439 = vmatpush1.msra.mxu0 0.0
    %440 = vmatprep.subr.mxu0 0.0
    %441 = vmatpush1.msra.mxu0 0.0
    %442 = vmatprep.subr.mxu0 0.0
    %443 = vmatpush1.msra.mxu0 0.0
    %444 = vmatprep.subr.mxu0 0.0
    %445 = vmatpush1.msra.mxu0 0.0
    %446 = vmatprep.subr.mxu0 0.0
    %447 = vmatpush1.msra.mxu0 0.0
    %448 = vmatprep.subr.mxu0 0.0
    %449 = vmatpush1.msra.mxu0 0.0
    %450 = vmatprep.subr.mxu0 0.0
    %451 = vmatpush1.msra.mxu0 0.0
    %452 = vmatprep.subr.mxu0 0.0
    %453 = vmatpush1.msra.mxu0 0.0
    %454 = vmatprep.subr.mxu0 0.0
    %455 = vmatpush1.msra.mxu0 0.0
    %456 = vmatprep.mubr.f32.mxu0 0.0
    %457 = vmatmul.mubr.f32.gmra.mrb[0].mxu0 %v390
    %v458 = vpop.f32.mrb[0].mxu0
    %v459 = vadd.f32 0.0, %v458
    %v460 = vpop.f32.mrb[0].mxu0
    %461 = vdwg.mxu0
    %v462 = vadd.f32 %v389, %v459
    %v463 = vxor.u32 %v462, 2147483648
    %v464 = vmul.f32 %v463, 1.442695
    %v465 = vpow.pop %v464
    %v466 = vadd.f32 %v465, 1.0
    %v467 = vrcp.pop %v466
    %v468 = vmul.f32 1.0, %v467
    %v469 = vtanh.pop %v462
    %v470 = vmul.f32 %v468, %v377
    %472 = vrot.lane.b32.xlu0 %v469, 64
    %v473 = vpop.permute.xlu0 %472
    %v475 = vmul.f32 %v468, %v473
    %477 = vrot.lane.b32.xlu0 %v475, 32
    %v478 = vpop.permute.xlu0 %477
    %v480 = vadd.f32 %v470, %v478
    %v481 = vtanh.pop %v480
    %483 = vrot.lane.b32.xlu0 %v481, 64
    %v484 = vpop.permute.xlu0 %483
    %v486 = vmul.f32 %v468, %v484
    %488 = vrot.lane.b32.xlu0 %v486, 32
    %v489 = vpop.permute.xlu0 %488
    %491 = vst.msk [vmem:[#allocation3 + $0x4] sm:$0x3] %vm284, %v489
    %v492 = vld [vmem:[#allocation2 + $0x6] sm:$0x3]
    %v493 = vsel %vm181, %v489, 0
    %495 = vmatprep.subr.mxu0 0.0
    %496 = vmatpush1.msra.mxu0 %v176
    %497 = vmatprep.subr.mxu0 0.0
    %498 = vmatpush1.msra.mxu0 %v177
    %499 = vmatprep.subr.mxu0 0.0
    %500 = vmatpush1.msra.mxu0 %v178
    %501 = vmatprep.subr.mxu0 0.0
    %502 = vmatpush1.msra.mxu0 %v179
    %503 = vmatprep.subr.mxu0 0.0
    %504 = vmatpush1.msra.mxu0 0.0
    %505 = vmatprep.subr.mxu0 0.0
    %506 = vmatpush1.msra.mxu0 0.0
    %507 = vmatprep.subr.mxu0 0.0
    %508 = vmatpush1.msra.mxu0 0.0
    %509 = vmatprep.subr.mxu0 0.0
    %510 = vmatpush1.msra.mxu0 0.0
    %511 = vmatprep.subr.mxu0 0.0
    %512 = vmatpush1.msra.mxu0 0.0
    %513 = vmatprep.subr.mxu0 0.0
    %514 = vmatpush1.msra.mxu0 0.0
    %515 = vmatprep.subr.mxu0 0.0
    %516 = vmatpush1.msra.mxu0 0.0
    %517 = vmatprep.subr.mxu0 0.0
    %518 = vmatpush1.msra.mxu0 0.0
    %519 = vmatprep.subr.mxu0 0.0
    %520 = vmatpush1.msra.mxu0 0.0
    %521 = vmatprep.subr.mxu0 0.0
    %522 = vmatpush1.msra.mxu0 0.0
    %523 = vmatprep.subr.mxu0 0.0
    %524 = vmatpush1.msra.mxu0 0.0
    %525 = vmatprep.subr.mxu0 0.0
    %526 = vmatpush1.msra.mxu0 0.0
    %527 = vmatprep.subr.mxu0 0.0
    %528 = vmatpush1.msra.mxu0 0.0
    %529 = vmatprep.subr.mxu0 0.0
    %530 = vmatpush1.msra.mxu0 0.0
    %531 = vmatprep.subr.mxu0 0.0
    %532 = vmatpush1.msra.mxu0 0.0
    %533 = vmatprep.subr.mxu0 0.0
    %534 = vmatpush1.msra.mxu0 0.0
    %535 = vmatprep.subr.mxu0 0.0
    %536 = vmatpush1.msra.mxu0 0.0
    %537 = vmatprep.subr.mxu0 0.0
    %538 = vmatpush1.msra.mxu0 0.0
    %539 = vmatprep.subr.mxu0 0.0
    %540 = vmatpush1.msra.mxu0 0.0
    %541 = vmatprep.subr.mxu0 0.0
    %542 = vmatpush1.msra.mxu0 0.0
    %543 = vmatprep.subr.mxu0 0.0
    %544 = vmatpush1.msra.mxu0 0.0
    %545 = vmatprep.subr.mxu0 0.0
    %546 = vmatpush1.msra.mxu0 0.0
    %547 = vmatprep.subr.mxu0 0.0
    %548 = vmatpush1.msra.mxu0 0.0
    %549 = vmatprep.subr.mxu0 0.0
    %550 = vmatpush1.msra.mxu0 0.0
    %551 = vmatprep.subr.mxu0 0.0
    %552 = vmatpush1.msra.mxu0 0.0
    %553 = vmatprep.subr.mxu0 0.0
    %554 = vmatpush1.msra.mxu0 0.0
    %555 = vmatprep.subr.mxu0 0.0
    %556 = vmatpush1.msra.mxu0 0.0
    %557 = vmatprep.subr.mxu0 0.0
    %558 = vmatpush1.msra.mxu0 0.0
    %559 = vmatprep.mubr.f32.mxu0 0.0
    %560 = vmatmul.mubr.f32.gmra.mrb[0].mxu0 %v493
    %v561 = vpop.f32.mrb[0].mxu0
    %v562 = vadd.f32 0.0, %v561
    %v563 = vpop.f32.mrb[0].mxu0
    %564 = vdwg.mxu0
    %v565 = vadd.f32 %v492, %v562
    %v566 = vxor.u32 %v565, 2147483648
    %v567 = vmul.f32 %v566, 1.442695
    %v568 = vpow.pop %v567
    %v569 = vadd.f32 %v568, 1.0
    %v570 = vrcp.pop %v569
    %v571 = vmul.f32 1.0, %v570
    %v572 = vtanh.pop %v565
    %v573 = vmul.f32 %v571, %v480
    %575 = vrot.lane.b32.xlu0 %v572, 64
    %v576 = vpop.permute.xlu0 %575
    %v578 = vmul.f32 %v571, %v576
    %580 = vrot.lane.b32.xlu0 %v578, 32
    %v581 = vpop.permute.xlu0 %580
    %v583 = vadd.f32 %v573, %v581
    %v584 = vtanh.pop %v583
    %586 = vrot.lane.b32.xlu0 %v584, 64
    %v587 = vpop.permute.xlu0 %586
    %v589 = vmul.f32 %v571, %v587
    %591 = vrot.lane.b32.xlu0 %v589, 32
    %v592 = vpop.permute.xlu0 %591
    %594 = vst.msk [vmem:[#allocation3 + $0x6] sm:$0x3] %vm284, %v592
    %v595 = vld [vmem:[#allocation2 + $0x8] sm:$0x3]
    %v596 = vsel %vm181, %v592, 0
    %598 = vmatprep.subr.mxu0 0.0
    %599 = vmatpush1.msra.mxu0 %v176
    %600 = vmatprep.subr.mxu0 0.0
    %601 = vmatpush1.msra.mxu0 %v177
    %602 = vmatprep.subr.mxu0 0.0
    %603 = vmatpush1.msra.mxu0 %v178
    %604 = vmatprep.subr.mxu0 0.0
    %605 = vmatpush1.msra.mxu0 %v179
    %606 = vmatprep.subr.mxu0 0.0
    %607 = vmatpush1.msra.mxu0 0.0
    %608 = vmatprep.subr.mxu0 0.0
    %609 = vmatpush1.msra.mxu0 0.0
    %610 = vmatprep.subr.mxu0 0.0
    %611 = vmatpush1.msra.mxu0 0.0
    %612 = vmatprep.subr.mxu0 0.0
    %613 = vmatpush1.msra.mxu0 0.0
    %614 = vmatprep.subr.mxu0 0.0
    %615 = vmatpush1.msra.mxu0 0.0
    %616 = vmatprep.subr.mxu0 0.0
    %617 = vmatpush1.msra.mxu0 0.0
    %618 = vmatprep.subr.mxu0 0.0
    %619 = vmatpush1.msra.mxu0 0.0
    %620 = vmatprep.subr.mxu0 0.0
    %621 = vmatpush1.msra.mxu0 0.0
    %622 = vmatprep.subr.mxu0 0.0
    %623 = vmatpush1.msra.mxu0 0.0
    %624 = vmatprep.subr.mxu0 0.0
    %625 = vmatpush1.msra.mxu0 0.0
    %626 = vmatprep.subr.mxu0 0.0
    %627 = vmatpush1.msra.mxu0 0.0
    %628 = vmatprep.subr.mxu0 0.0
    %629 = vmatpush1.msra.mxu0 0.0
    %630 = vmatprep.subr.mxu0 0.0
    %631 = vmatpush1.msra.mxu0 0.0
    %632 = vmatprep.subr.mxu0 0.0
    %633 = vmatpush1.msra.mxu0 0.0
    %634 = vmatprep.subr.mxu0 0.0
    %635 = vmatpush1.msra.mxu0 0.0
    %636 = vmatprep.subr.mxu0 0.0
    %637 = vmatpush1.msra.mxu0 0.0
    %638 = vmatprep.subr.mxu0 0.0
    %639 = vmatpush1.msra.mxu0 0.0
    %640 = vmatprep.subr.mxu0 0.0
    %641 = vmatpush1.msra.mxu0 0.0
    %642 = vmatprep.subr.mxu0 0.0
    %643 = vmatpush1.msra.mxu0 0.0
    %644 = vmatprep.subr.mxu0 0.0
    %645 = vmatpush1.msra.mxu0 0.0
    %646 = vmatprep.subr.mxu0 0.0
    %647 = vmatpush1.msra.mxu0 0.0
    %648 = vmatprep.subr.mxu0 0.0
    %649 = vmatpush1.msra.mxu0 0.0
    %650 = vmatprep.subr.mxu0 0.0
    %651 = vmatpush1.msra.mxu0 0.0
    %652 = vmatprep.subr.mxu0 0.0
    %653 = vmatpush1.msra.mxu0 0.0
    %654 = vmatprep.subr.mxu0 0.0
    %655 = vmatpush1.msra.mxu0 0.0
    %656 = vmatprep.subr.mxu0 0.0
    %657 = vmatpush1.msra.mxu0 0.0
    %658 = vmatprep.subr.mxu0 0.0
    %659 = vmatpush1.msra.mxu0 0.0
    %660 = vmatprep.subr.mxu0 0.0
    %661 = vmatpush1.msra.mxu0 0.0
    %662 = vmatprep.mubr.f32.mxu0 0.0
    %663 = vmatmul.mubr.f32.gmra.mrb[0].mxu0 %v596
    %v664 = vpop.f32.mrb[0].mxu0
    %v665 = vadd.f32 0.0, %v664
    %v666 = vpop.f32.mrb[0].mxu0
    %667 = vdwg.mxu0
    %v668 = vadd.f32 %v595, %v665
    %v669 = vxor.u32 %v668, 2147483648
    %v670 = vmul.f32 %v669, 1.442695
    %v671 = vpow.pop %v670
    %v672 = vadd.f32 %v671, 1.0
    %v673 = vrcp.pop %v672
    %v674 = vmul.f32 1.0, %v673
    %v675 = vtanh.pop %v668
    %v676 = vmul.f32 %v674, %v583
    %678 = vrot.lane.b32.xlu0 %v675, 64
    %v679 = vpop.permute.xlu0 %678
    %v681 = vmul.f32 %v674, %v679
    %683 = vrot.lane.b32.xlu0 %v681, 32
    %v684 = vpop.permute.xlu0 %683
    %v686 = vadd.f32 %v676, %v684
    %v687 = vtanh.pop %v686
    %689 = vrot.lane.b32.xlu0 %v687, 64
    %v690 = vpop.permute.xlu0 %689
    %v692 = vmul.f32 %v674, %v690
    %694 = vrot.lane.b32.xlu0 %v692, 32
    %v695 = vpop.permute.xlu0 %694
    %697 = vst.msk [vmem:[#allocation3 + $0x8] sm:$0x3] %vm284, %v695
    %v698 = vld [vmem:[#allocation2 + $0xa] sm:$0x3]
    %v699 = vsel %vm181, %v695, 0
    %701 = vmatprep.subr.mxu0 0.0
    %702 = vmatpush1.msra.mxu0 %v176
    %703 = vmatprep.subr.mxu0 0.0
    %704 = vmatpush1.msra.mxu0 %v177
    %705 = vmatprep.subr.mxu0 0.0
    %706 = vmatpush1.msra.mxu0 %v178
    %707 = vmatprep.subr.mxu0 0.0
    %708 = vmatpush1.msra.mxu0 %v179
    %709 = vmatprep.subr.mxu0 0.0
    %710 = vmatpush1.msra.mxu0 0.0
    %711 = vmatprep.subr.mxu0 0.0
    %712 = vmatpush1.msra.mxu0 0.0
    %713 = vmatprep.subr.mxu0 0.0
    %714 = vmatpush1.msra.mxu0 0.0
    %715 = vmatprep.subr.mxu0 0.0
    %716 = vmatpush1.msra.mxu0 0.0
    %717 = vmatprep.subr.mxu0 0.0
    %718 = vmatpush1.msra.mxu0 0.0
    %719 = vmatprep.subr.mxu0 0.0
    %720 = vmatpush1.msra.mxu0 0.0
    %721 = vmatprep.subr.mxu0 0.0
    %722 = vmatpush1.msra.mxu0 0.0
    %723 = vmatprep.subr.mxu0 0.0
    %724 = vmatpush1.msra.mxu0 0.0
    %725 = vmatprep.subr.mxu0 0.0
    %726 = vmatpush1.msra.mxu0 0.0
    %727 = vmatprep.subr.mxu0 0.0
    %728 = vmatpush1.msra.mxu0 0.0
    %729 = vmatprep.subr.mxu0 0.0
    %730 = vmatpush1.msra.mxu0 0.0
    %731 = vmatprep.subr.mxu0 0.0
    %732 = vmatpush1.msra.mxu0 0.0
    %733 = vmatprep.subr.mxu0 0.0
    %734 = vmatpush1.msra.mxu0 0.0
    %735 = vmatprep.subr.mxu0 0.0
    %736 = vmatpush1.msra.mxu0 0.0
    %737 = vmatprep.subr.mxu0 0.0
    %738 = vmatpush1.msra.mxu0 0.0
    %739 = vmatprep.subr.mxu0 0.0
    %740 = vmatpush1.msra.mxu0 0.0
    %741 = vmatprep.subr.mxu0 0.0
    %742 = vmatpush1.msra.mxu0 0.0
    %743 = vmatprep.subr.mxu0 0.0
    %744 = vmatpush1.msra.mxu0 0.0
    %745 = vmatprep.subr.mxu0 0.0
    %746 = vmatpush1.msra.mxu0 0.0
    %747 = vmatprep.subr.mxu0 0.0
    %748 = vmatpush1.msra.mxu0 0.0
    %749 = vmatprep.subr.mxu0 0.0
    %750 = vmatpush1.msra.mxu0 0.0
    %751 = vmatprep.subr.mxu0 0.0
    %752 = vmatpush1.msra.mxu0 0.0
    %753 = vmatprep.subr.mxu0 0.0
    %754 = vmatpush1.msra.mxu0 0.0
    %755 = vmatprep.subr.mxu0 0.0
    %756 = vmatpush1.msra.mxu0 0.0
    %757 = vmatprep.subr.mxu0 0.0
    %758 = vmatpush1.msra.mxu0 0.0
    %759 = vmatprep.subr.mxu0 0.0
    %760 = vmatpush1.msra.mxu0 0.0
    %761 = vmatprep.subr.mxu0 0.0
    %762 = vmatpush1.msra.mxu0 0.0
    %763 = vmatprep.subr.mxu0 0.0
    %764 = vmatpush1.msra.mxu0 0.0
    %765 = vmatprep.mubr.f32.mxu0 0.0
    %766 = vmatmul.mubr.f32.gmra.mrb[0].mxu0 %v699
    %v767 = vpop.f32.mrb[0].mxu0
    %v768 = vadd.f32 0.0, %v767
    %v769 = vpop.f32.mrb[0].mxu0
    %770 = vdwg.mxu0
    %v771 = vadd.f32 %v698, %v768
    %v772 = vxor.u32 %v771, 2147483648
    %v773 = vmul.f32 %v772, 1.442695
    %v774 = vpow.pop %v773
    %v775 = vadd.f32 %v774, 1.0
    %v776 = vrcp.pop %v775
    %v777 = vmul.f32 1.0, %v776
    %v778 = vtanh.pop %v771
    %v779 = vmul.f32 %v777, %v686
    %781 = vrot.lane.b32.xlu0 %v778, 64
    %v782 = vpop.permute.xlu0 %781
    %v784 = vmul.f32 %v777, %v782
    %786 = vrot.lane.b32.xlu0 %v784, 32
    %v787 = vpop.permute.xlu0 %786
    %v789 = vadd.f32 %v779, %v787
    %v790 = vtanh.pop %v789
    %792 = vrot.lane.b32.xlu0 %v790, 64
    %v793 = vpop.permute.xlu0 %792
    %v795 = vmul.f32 %v777, %v793
    %797 = vrot.lane.b32.xlu0 %v795, 32
    %v798 = vpop.permute.xlu0 %797
    %800 = vst.msk [vmem:[#allocation3 + $0xa] sm:$0x3] %vm284, %v798
    %v801 = vld [vmem:[#allocation2 + $0xc] sm:$0x3]
    %v802 = vsel %vm181, %v798, 0
    %804 = vmatprep.subr.mxu0 0.0
    %805 = vmatpush1.msra.mxu0 %v176
    %806 = vmatprep.subr.mxu0 0.0
    %807 = vmatpush1.msra.mxu0 %v177
    %808 = vmatprep.subr.mxu0 0.0
    %809 = vmatpush1.msra.mxu0 %v178
    %810 = vmatprep.subr.mxu0 0.0
    %811 = vmatpush1.msra.mxu0 %v179
    %812 = vmatprep.subr.mxu0 0.0
    %813 = vmatpush1.msra.mxu0 0.0
    %814 = vmatprep.subr.mxu0 0.0
    %815 = vmatpush1.msra.mxu0 0.0
    %816 = vmatprep.subr.mxu0 0.0
    %817 = vmatpush1.msra.mxu0 0.0
    %818 = vmatprep.subr.mxu0 0.0
    %819 = vmatpush1.msra.mxu0 0.0
    %820 = vmatprep.subr.mxu0 0.0
    %821 = vmatpush1.msra.mxu0 0.0
    %822 = vmatprep.subr.mxu0 0.0
    %823 = vmatpush1.msra.mxu0 0.0
    %824 = vmatprep.subr.mxu0 0.0
    %825 = vmatpush1.msra.mxu0 0.0
    %826 = vmatprep.subr.mxu0 0.0
    %827 = vmatpush1.msra.mxu0 0.0
    %828 = vmatprep.subr.mxu0 0.0
    %829 = vmatpush1.msra.mxu0 0.0
    %830 = vmatprep.subr.mxu0 0.0
    %831 = vmatpush1.msra.mxu0 0.0
    %832 = vmatprep.subr.mxu0 0.0
    %833 = vmatpush1.msra.mxu0 0.0
    %834 = vmatprep.subr.mxu0 0.0
    %835 = vmatpush1.msra.mxu0 0.0
    %836 = vmatprep.subr.mxu0 0.0
    %837 = vmatpush1.msra.mxu0 0.0
    %838 = vmatprep.subr.mxu0 0.0
    %839 = vmatpush1.msra.mxu0 0.0
    %840 = vmatprep.subr.mxu0 0.0
    %841 = vmatpush1.msra.mxu0 0.0
    %842 = vmatprep.subr.mxu0 0.0
    %843 = vmatpush1.msra.mxu0 0.0
    %844 = vmatprep.subr.mxu0 0.0
    %845 = vmatpush1.msra.mxu0 0.0
    %846 = vmatprep.subr.mxu0 0.0
    %847 = vmatpush1.msra.mxu0 0.0
    %848 = vmatprep.subr.mxu0 0.0
    %849 = vmatpush1.msra.mxu0 0.0
    %850 = vmatprep.subr.mxu0 0.0
    %851 = vmatpush1.msra.mxu0 0.0
    %852 = vmatprep.subr.mxu0 0.0
    %853 = vmatpush1.msra.mxu0 0.0
    %854 = vmatprep.subr.mxu0 0.0
    %855 = vmatpush1.msra.mxu0 0.0
    %856 = vmatprep.subr.mxu0 0.0
    %857 = vmatpush1.msra.mxu0 0.0
    %858 = vmatprep.subr.mxu0 0.0
    %859 = vmatpush1.msra.mxu0 0.0
    %860 = vmatprep.subr.mxu0 0.0
    %861 = vmatpush1.msra.mxu0 0.0
    %862 = vmatprep.subr.mxu0 0.0
    %863 = vmatpush1.msra.mxu0 0.0
    %864 = vmatprep.subr.mxu0 0.0
    %865 = vmatpush1.msra.mxu0 0.0
    %866 = vmatprep.subr.mxu0 0.0
    %867 = vmatpush1.msra.mxu0 0.0
    %868 = vmatprep.mubr.f32.mxu0 0.0
    %869 = vmatmul.mubr.f32.gmra.mrb[0].mxu0 %v802
    %v870 = vpop.f32.mrb[0].mxu0
    %v871 = vadd.f32 0.0, %v870
    %v872 = vpop.f32.mrb[0].mxu0
    %873 = vdwg.mxu0
    %v874 = vadd.f32 %v801, %v871
    %v875 = vxor.u32 %v874, 2147483648
    %v876 = vmul.f32 %v875, 1.442695
    %v877 = vpow.pop %v876
    %v878 = vadd.f32 %v877, 1.0
    %v879 = vrcp.pop %v878
    %v880 = vmul.f32 1.0, %v879
    %v881 = vtanh.pop %v874
    %v882 = vmul.f32 %v880, %v789
    %884 = vrot.lane.b32.xlu0 %v881, 64
    %v885 = vpop.permute.xlu0 %884
    %v887 = vmul.f32 %v880, %v885
    %889 = vrot.lane.b32.xlu0 %v887, 32
    %v890 = vpop.permute.xlu0 %889
    %v892 = vadd.f32 %v882, %v890
    %v893 = vtanh.pop %v892
    %895 = vrot.lane.b32.xlu0 %v893, 64
    %v896 = vpop.permute.xlu0 %895
    %v898 = vmul.f32 %v880, %v896
    %900 = vrot.lane.b32.xlu0 %v898, 32
    %v901 = vpop.permute.xlu0 %900
    %903 = vst.msk [vmem:[#allocation3 + $0xc] sm:$0x3] %vm284, %v901
    %v904 = vld [vmem:[#allocation2 + $0xe] sm:$0x3]
    %v905 = vsel %vm181, %v901, 0
    %907 = vmatprep.subr.mxu0 0.0
    %908 = vmatpush1.msra.mxu0 %v176
    %909 = vmatprep.subr.mxu0 0.0
    %910 = vmatpush1.msra.mxu0 %v177
    %911 = vmatprep.subr.mxu0 0.0
    %912 = vmatpush1.msra.mxu0 %v178
    %913 = vmatprep.subr.mxu0 0.0
    %914 = vmatpush1.msra.mxu0 %v179
    %915 = vmatprep.subr.mxu0 0.0
    %916 = vmatpush1.msra.mxu0 0.0
    %917 = vmatprep.subr.mxu0 0.0
    %918 = vmatpush1.msra.mxu0 0.0
    %919 = vmatprep.subr.mxu0 0.0
    %920 = vmatpush1.msra.mxu0 0.0
    %921 = vmatprep.subr.mxu0 0.0
    %922 = vmatpush1.msra.mxu0 0.0
    %923 = vmatprep.subr.mxu0 0.0
    %924 = vmatpush1.msra.mxu0 0.0
    %925 = vmatprep.subr.mxu0 0.0
    %926 = vmatpush1.msra.mxu0 0.0
    %927 = vmatprep.subr.mxu0 0.0
    %928 = vmatpush1.msra.mxu0 0.0
    %929 = vmatprep.subr.mxu0 0.0
    %930 = vmatpush1.msra.mxu0 0.0
    %931 = vmatprep.subr.mxu0 0.0
    %932 = vmatpush1.msra.mxu0 0.0
    %933 = vmatprep.subr.mxu0 0.0
    %934 = vmatpush1.msra.mxu0 0.0
    %935 = vmatprep.subr.mxu0 0.0
    %936 = vmatpush1.msra.mxu0 0.0
    %937 = vmatprep.subr.mxu0 0.0
    %938 = vmatpush1.msra.mxu0 0.0
    %939 = vmatprep.subr.mxu0 0.0
    %940 = vmatpush1.msra.mxu0 0.0
    %941 = vmatprep.subr.mxu0 0.0
    %942 = vmatpush1.msra.mxu0 0.0
    %943 = vmatprep.subr.mxu0 0.0
    %944 = vmatpush1.msra.mxu0 0.0
    %945 = vmatprep.subr.mxu0 0.0
    %946 = vmatpush1.msra.mxu0 0.0
    %947 = vmatprep.subr.mxu0 0.0
    %948 = vmatpush1.msra.mxu0 0.0
    %949 = vmatprep.subr.mxu0 0.0
    %950 = vmatpush1.msra.mxu0 0.0
    %951 = vmatprep.subr.mxu0 0.0
    %952 = vmatpush1.msra.mxu0 0.0
    %953 = vmatprep.subr.mxu0 0.0
    %954 = vmatpush1.msra.mxu0 0.0
    %955 = vmatprep.subr.mxu0 0.0
    %956 = vmatpush1.msra.mxu0 0.0
    %957 = vmatprep.subr.mxu0 0.0
    %958 = vmatpush1.msra.mxu0 0.0
    %959 = vmatprep.subr.mxu0 0.0
    %960 = vmatpush1.msra.mxu0 0.0
    %961 = vmatprep.subr.mxu0 0.0
    %962 = vmatpush1.msra.mxu0 0.0
    %963 = vmatprep.subr.mxu0 0.0
    %964 = vmatpush1.msra.mxu0 0.0
    %965 = vmatprep.subr.mxu0 0.0
    %966 = vmatpush1.msra.mxu0 0.0
    %967 = vmatprep.subr.mxu0 0.0
    %968 = vmatpush1.msra.mxu0 0.0
    %969 = vmatprep.subr.mxu0 0.0
    %970 = vmatpush1.msra.mxu0 0.0
    %971 = vmatprep.mubr.f32.mxu0 0.0
    %972 = vmatmul.mubr.f32.gmra.mrb[0].mxu0 %v905
    %v973 = vpop.f32.mrb[0].mxu0
    %v974 = vadd.f32 0.0, %v973
    %v975 = vpop.f32.mrb[0].mxu0
    %976 = vdwg.mxu0
    %v977 = vadd.f32 %v904, %v974
    %v978 = vxor.u32 %v977, 2147483648
    %v979 = vmul.f32 %v978, 1.442695
    %v980 = vpow.pop %v979
    %v981 = vadd.f32 %v980, 1.0
    %v982 = vrcp.pop %v981
    %v983 = vmul.f32 1.0, %v982
    %v984 = vtanh.pop %v977
    %v985 = vmul.f32 %v983, %v892
    %987 = vrot.lane.b32.xlu0 %v984, 64
    %v988 = vpop.permute.xlu0 %987
    %v990 = vmul.f32 %v983, %v988
    %992 = vrot.lane.b32.xlu0 %v990, 32
    %v993 = vpop.permute.xlu0 %992
    %v995 = vadd.f32 %v985, %v993
    %v996 = vtanh.pop %v995
    %998 = vrot.lane.b32.xlu0 %v996, 64
    %v999 = vpop.permute.xlu0 %998
    %v1001 = vmul.f32 %v983, %v999
    %1003 = vrot.lane.b32.xlu0 %v1001, 32
    %v1004 = vpop.permute.xlu0 %1003
    %1006 = vst.msk [vmem:[#allocation3 + $0xe] sm:$0x3] %vm284, %v1004
    %v1007 = vld [vmem:[#allocation3] sm:$0xff]
    %v1008 = vld [vmem:[#allocation3 + $0x8] sm:$0xff]
    %v1009 = vld [vmem:[%s4] sm:$0xff]
    %v1010 = vld [vmem:[%s4 + $0x8] sm:$0xff]
    %v1011 = vld [vmem:[%s4 + $0x10] sm:$0xff]
    %v1012 = vld [vmem:[%s4 + $0x18] sm:$0xff]
    %v1013 = vld [vmem:[%s6] sm:$0x1]
    %v1015 = vlaneseq
    %v1016 = vshrl.u32 %v1015, 7
    %v1017 = vsub.s32 0, %v1016
    %v1018 = vrot.slane %v1013, %v1017
    %v1021 = vsel %vm181, %v1007, 0
    %v1024 = vsel %vm181, %v1008, 0
    %1026 = vmatprep.subr.mxu0 0.0
    %1027 = vmatpush1.msra.mxu0 %v1009
    %1028 = vmatprep.subr.mxu0 0.0
    %1029 = vmatpush1.msra.mxu0 %v1010
    %1030 = vmatprep.subr.mxu0 0.0
    %1031 = vmatpush1.msra.mxu0 %v1011
    %1032 = vmatprep.subr.mxu0 0.0
    %1033 = vmatpush1.msra.mxu0 %v1012
    %1034 = vmatprep.subr.mxu0 0.0
    %1035 = vmatpush1.msra.mxu0 0.0
    %1036 = vmatprep.subr.mxu0 0.0
    %1037 = vmatpush1.msra.mxu0 0.0
    %1038 = vmatprep.subr.mxu0 0.0
    %1039 = vmatpush1.msra.mxu0 0.0
    %1040 = vmatprep.subr.mxu0 0.0
    %1041 = vmatpush1.msra.mxu0 0.0
    %1042 = vmatprep.subr.mxu0 0.0
    %1043 = vmatpush1.msra.mxu0 0.0
    %1044 = vmatprep.subr.mxu0 0.0
    %1045 = vmatpush1.msra.mxu0 0.0
    %1046 = vmatprep.subr.mxu0 0.0
    %1047 = vmatpush1.msra.mxu0 0.0
    %1048 = vmatprep.subr.mxu0 0.0
    %1049 = vmatpush1.msra.mxu0 0.0
    %1050 = vmatprep.subr.mxu0 0.0
    %1051 = vmatpush1.msra.mxu0 0.0
    %1052 = vmatprep.subr.mxu0 0.0
    %1053 = vmatpush1.msra.mxu0 0.0
    %1054 = vmatprep.subr.mxu0 0.0
    %1055 = vmatpush1.msra.mxu0 0.0
    %1056 = vmatprep.subr.mxu0 0.0
    %1057 = vmatpush1.msra.mxu0 0.0
    %1058 = vmatprep.subr.mxu0 0.0
    %1059 = vmatpush1.msra.mxu0 0.0
    %1060 = vmatprep.subr.mxu0 0.0
    %1061 = vmatpush1.msra.mxu0 0.0
    %1062 = vmatprep.subr.mxu0 0.0
    %1063 = vmatpush1.msra.mxu0 0.0
    %1064 = vmatprep.subr.mxu0 0.0
    %1065 = vmatpush1.msra.mxu0 0.0
    %1066 = vmatprep.subr.mxu0 0.0
    %1067 = vmatpush1.msra.mxu0 0.0
    %1068 = vmatprep.subr.mxu0 0.0
    %1069 = vmatpush1.msra.mxu0 0.0
    %1070 = vmatprep.subr.mxu0 0.0
    %1071 = vmatpush1.msra.mxu0 0.0
    %1072 = vmatprep.subr.mxu0 0.0
    %1073 = vmatpush1.msra.mxu0 0.0
    %1074 = vmatprep.subr.mxu0 0.0
    %1075 = vmatpush1.msra.mxu0 0.0
    %1076 = vmatprep.subr.mxu0 0.0
    %1077 = vmatpush1.msra.mxu0 0.0
    %1078 = vmatprep.subr.mxu0 0.0
    %1079 = vmatpush1.msra.mxu0 0.0
    %1080 = vmatprep.subr.mxu0 0.0
    %1081 = vmatpush1.msra.mxu0 0.0
    %1082 = vmatprep.subr.mxu0 0.0
    %1083 = vmatpush1.msra.mxu0 0.0
    %1084 = vmatprep.subr.mxu0 0.0
    %1085 = vmatpush1.msra.mxu0 0.0
    %1086 = vmatprep.subr.mxu0 0.0
    %1087 = vmatpush1.msra.mxu0 0.0
    %1088 = vmatprep.subr.mxu0 0.0
    %1089 = vmatpush1.msra.mxu0 0.0
    %1090 = vmatprep.mubr.f32.mxu0 0.0
    %1091 = vmatmul.mubr.f32.gmra.mrb[0].mxu0 %v1021
    %v1092 = vpop.f32.mrb[0].mxu0
    %v1093 = vadd.f32 %v1018, %v1092
    %v1094 = vpop.f32.mrb[0].mxu0
    %1095 = vmatprep.mubr.f32.mxu0 0.0
    %1096 = vmatmul.mubr.f32.gmra.mrb[0].mxu0 %v1024
    %v1097 = vpop.f32.mrb[0].mxu0
    %v1098 = vadd.f32 %v1018, %v1097
    %v1099 = vpop.f32.mrb[0].mxu0
    %1100 = vdwg.mxu0
    %1101 = vst [vmem:[#allocation2] sm:$0xff] %v1093
    %1102 = vst [vmem:[#allocation2 + $0x8] sm:$0xff] %v1098
    %v1103 = vld [vmem:[%s5] sm:$0xff]
    %v1104 = vld [vmem:[%s5 + $0x8] sm:$0xff]
    %v1105 = vld [vmem:[%s5 + $0x10] sm:$0xff]
    %v1106 = vld [vmem:[%s5 + $0x18] sm:$0xff]
    %v1107 = vld [vmem:[#allocation2] sm:$0x3]
    %1108 = vmatprep.subr.mxu0 0.0
    %1109 = vmatpush1.msra.mxu0 %v1103
    %1110 = vmatprep.subr.mxu0 0.0
    %1111 = vmatpush1.msra.mxu0 %v1104
    %1112 = vmatprep.subr.mxu0 0.0
    %1113 = vmatpush1.msra.mxu0 %v1105
    %1114 = vmatprep.subr.mxu0 0.0
    %1115 = vmatpush1.msra.mxu0 %v1106
    %1116 = vmatprep.subr.mxu0 0.0
    %1117 = vmatpush1.msra.mxu0 0.0
    %1118 = vmatprep.subr.mxu0 0.0
    %1119 = vmatpush1.msra.mxu0 0.0
    %1120 = vmatprep.subr.mxu0 0.0
    %1121 = vmatpush1.msra.mxu0 0.0
    %1122 = vmatprep.subr.mxu0 0.0
    %1123 = vmatpush1.msra.mxu0 0.0
    %1124 = vmatprep.subr.mxu0 0.0
    %1125 = vmatpush1.msra.mxu0 0.0
    %1126 = vmatprep.subr.mxu0 0.0
    %1127 = vmatpush1.msra.mxu0 0.0
    %1128 = vmatprep.subr.mxu0 0.0
    %1129 = vmatpush1.msra.mxu0 0.0
    %1130 = vmatprep.subr.mxu0 0.0
    %1131 = vmatpush1.msra.mxu0 0.0
    %1132 = vmatprep.subr.mxu0 0.0
    %1133 = vmatpush1.msra.mxu0 0.0
    %1134 = vmatprep.subr.mxu0 0.0
    %1135 = vmatpush1.msra.mxu0 0.0
    %1136 = vmatprep.subr.mxu0 0.0
    %1137 = vmatpush1.msra.mxu0 0.0
    %1138 = vmatprep.subr.mxu0 0.0
    %1139 = vmatpush1.msra.mxu0 0.0
    %1140 = vmatprep.subr.mxu0 0.0
    %1141 = vmatpush1.msra.mxu0 0.0
    %1142 = vmatprep.subr.mxu0 0.0
    %1143 = vmatpush1.msra.mxu0 0.0
    %1144 = vmatprep.subr.mxu0 0.0
    %1145 = vmatpush1.msra.mxu0 0.0
    %1146 = vmatprep.subr.mxu0 0.0
    %1147 = vmatpush1.msra.mxu0 0.0
    %1148 = vmatprep.subr.mxu0 0.0
    %1149 = vmatpush1.msra.mxu0 0.0
    %1150 = vmatprep.subr.mxu0 0.0
    %1151 = vmatpush1.msra.mxu0 0.0
    %1152 = vmatprep.subr.mxu0 0.0
    %1153 = vmatpush1.msra.mxu0 0.0
    %1154 = vmatprep.subr.mxu0 0.0
    %1155 = vmatpush1.msra.mxu0 0.0
    %1156 = vmatprep.subr.mxu0 0.0
    %1157 = vmatpush1.msra.mxu0 0.0
    %1158 = vmatprep.subr.mxu0 0.0
    %1159 = vmatpush1.msra.mxu0 0.0
    %1160 = vmatprep.subr.mxu0 0.0
    %1161 = vmatpush1.msra.mxu0 0.0
    %1162 = vmatprep.subr.mxu0 0.0
    %1163 = vmatpush1.msra.mxu0 0.0
    %1164 = vmatprep.subr.mxu0 0.0
    %1165 = vmatpush1.msra.mxu0 0.0
    %1166 = vmatprep.subr.mxu0 0.0
    %1167 = vmatpush1.msra.mxu0 0.0
    %1168 = vmatprep.subr.mxu0 0.0
    %1169 = vmatpush1.msra.mxu0 0.0
    %1170 = vmatprep.subr.mxu0 0.0
    %1171 = vmatpush1.msra.mxu0 0.0
    %1172 = vmatprep.mubr.f32.mxu0 0.0
    %1173 = vmatmul.mubr.f32.gmra.mrb[0].mxu0 %v183
    %v1174 = vpop.f32.mrb[0].mxu0
    %v1175 = vadd.f32 0.0, %v1174
    %v1176 = vpop.f32.mrb[0].mxu0
    %1177 = vdwg.mxu0
    %v1178 = vadd.f32 %v1107, %v1175
    %v1179 = vxor.u32 %v1178, 2147483648
    %v1180 = vmul.f32 %v1179, 1.442695
    %v1181 = vpow.pop %v1180
    %v1182 = vadd.f32 %v1181, 1.0
    %v1183 = vrcp.pop %v1182
    %v1184 = vmul.f32 1.0, %v1183
    %v1185 = vtanh.pop %v1178
    %v1186 = vmul.f32 %v1184, 0.0
    %1188 = vrot.lane.b32.xlu0 %v1185, 64
    %v1189 = vpop.permute.xlu0 %1188
    %v1191 = vmul.f32 %v1184, %v1189
    %1193 = vrot.lane.b32.xlu0 %v1191, 32
    %v1194 = vpop.permute.xlu0 %1193
    %v1196 = vadd.f32 %v1186, %v1194
    %v1197 = vtanh.pop %v1196
    %1199 = vrot.lane.b32.xlu0 %v1197, 64
    %v1200 = vpop.permute.xlu0 %1199
    %v1202 = vmul.f32 %v1184, %v1200
    %1204 = vrot.lane.b32.xlu0 %v1202, 32
    %v1205 = vpop.permute.xlu0 %1204
    %1207 = vst.msk [vmem:[#allocation3] sm:$0x3] %vm284, %v1205
    %v1208 = vld [vmem:[#allocation2 + $0x2] sm:$0x3]
    %v1209 = vsel %vm181, %v1205, 0
    %1211 = vmatprep.subr.mxu0 0.0
    %1212 = vmatpush1.msra.mxu0 %v1103
    %1213 = vmatprep.subr.mxu0 0.0
    %1214 = vmatpush1.msra.mxu0 %v1104
    %1215 = vmatprep.subr.mxu0 0.0
    %1216 = vmatpush1.msra.mxu0 %v1105
    %1217 = vmatprep.subr.mxu0 0.0
    %1218 = vmatpush1.msra.mxu0 %v1106
    %1219 = vmatprep.subr.mxu0 0.0
    %1220 = vmatpush1.msra.mxu0 0.0
    %1221 = vmatprep.subr.mxu0 0.0
    %1222 = vmatpush1.msra.mxu0 0.0
    %1223 = vmatprep.subr.mxu0 0.0
    %1224 = vmatpush1.msra.mxu0 0.0
    %1225 = vmatprep.subr.mxu0 0.0
    %1226 = vmatpush1.msra.mxu0 0.0
    %1227 = vmatprep.subr.mxu0 0.0
    %1228 = vmatpush1.msra.mxu0 0.0
    %1229 = vmatprep.subr.mxu0 0.0
    %1230 = vmatpush1.msra.mxu0 0.0
    %1231 = vmatprep.subr.mxu0 0.0
    %1232 = vmatpush1.msra.mxu0 0.0
    %1233 = vmatprep.subr.mxu0 0.0
    %1234 = vmatpush1.msra.mxu0 0.0
    %1235 = vmatprep.subr.mxu0 0.0
    %1236 = vmatpush1.msra.mxu0 0.0
    %1237 = vmatprep.subr.mxu0 0.0
    %1238 = vmatpush1.msra.mxu0 0.0
    %1239 = vmatprep.subr.mxu0 0.0
    %1240 = vmatpush1.msra.mxu0 0.0
    %1241 = vmatprep.subr.mxu0 0.0
    %1242 = vmatpush1.msra.mxu0 0.0
    %1243 = vmatprep.subr.mxu0 0.0
    %1244 = vmatpush1.msra.mxu0 0.0
    %1245 = vmatprep.subr.mxu0 0.0
    %1246 = vmatpush1.msra.mxu0 0.0
    %1247 = vmatprep.subr.mxu0 0.0
    %1248 = vmatpush1.msra.mxu0 0.0
    %1249 = vmatprep.subr.mxu0 0.0
    %1250 = vmatpush1.msra.mxu0 0.0
    %1251 = vmatprep.subr.mxu0 0.0
    %1252 = vmatpush1.msra.mxu0 0.0
    %1253 = vmatprep.subr.mxu0 0.0
    %1254 = vmatpush1.msra.mxu0 0.0
    %1255 = vmatprep.subr.mxu0 0.0
    %1256 = vmatpush1.msra.mxu0 0.0
    %1257 = vmatprep.subr.mxu0 0.0
    %1258 = vmatpush1.msra.mxu0 0.0
    %1259 = vmatprep.subr.mxu0 0.0
    %1260 = vmatpush1.msra.mxu0 0.0
    %1261 = vmatprep.subr.mxu0 0.0
    %1262 = vmatpush1.msra.mxu0 0.0
    %1263 = vmatprep.subr.mxu0 0.0
    %1264 = vmatpush1.msra.mxu0 0.0
    %1265 = vmatprep.subr.mxu0 0.0
    %1266 = vmatpush1.msra.mxu0 0.0
    %1267 = vmatprep.subr.mxu0 0.0
    %1268 = vmatpush1.msra.mxu0 0.0
    %1269 = vmatprep.subr.mxu0 0.0
    %1270 = vmatpush1.msra.mxu0 0.0
    %1271 = vmatprep.subr.mxu0 0.0
    %1272 = vmatpush1.msra.mxu0 0.0
    %1273 = vmatprep.subr.mxu0 0.0
    %1274 = vmatpush1.msra.mxu0 0.0
    %1275 = vmatprep.mubr.f32.mxu0 0.0
    %1276 = vmatmul.mubr.f32.gmra.mrb[0].mxu0 %v1209
    %v1277 = vpop.f32.mrb[0].mxu0
    %v1278 = vadd.f32 0.0, %v1277
    %v1279 = vpop.f32.mrb[0].mxu0
    %1280 = vdwg.mxu0
    %v1281 = vadd.f32 %v1208, %v1278
    %v1282 = vxor.u32 %v1281, 2147483648
    %v1283 = vmul.f32 %v1282, 1.442695
    %v1284 = vpow.pop %v1283
    %v1285 = vadd.f32 %v1284, 1.0
    %v1286 = vrcp.pop %v1285
    %v1287 = vmul.f32 1.0, %v1286
    %v1288 = vtanh.pop %v1281
    %v1289 = vmul.f32 %v1287, %v1196
    %1291 = vrot.lane.b32.xlu0 %v1288, 64
    %v1292 = vpop.permute.xlu0 %1291
    %v1294 = vmul.f32 %v1287, %v1292
    %1296 = vrot.lane.b32.xlu0 %v1294, 32
    %v1297 = vpop.permute.xlu0 %1296
    %v1299 = vadd.f32 %v1289, %v1297
    %v1300 = vtanh.pop %v1299
    %1302 = vrot.lane.b32.xlu0 %v1300, 64
    %v1303 = vpop.permute.xlu0 %1302
    %v1305 = vmul.f32 %v1287, %v1303
    %1307 = vrot.lane.b32.xlu0 %v1305, 32
    %v1308 = vpop.permute.xlu0 %1307
    %1310 = vst.msk [vmem:[#allocation3 + $0x2] sm:$0x3] %vm284, %v1308
    %v1311 = vld [vmem:[#allocation2 + $0x4] sm:$0x3]
    %v1312 = vsel %vm181, %v1308, 0
    %1314 = vmatprep.subr.mxu0 0.0
    %1315 = vmatpush1.msra.mxu0 %v1103
    %1316 = vmatprep.subr.mxu0 0.0
    %1317 = vmatpush1.msra.mxu0 %v1104
    %1318 = vmatprep.subr.mxu0 0.0
    %1319 = vmatpush1.msra.mxu0 %v1105
    %1320 = vmatprep.subr.mxu0 0.0
    %1321 = vmatpush1.msra.mxu0 %v1106
    %1322 = vmatprep.subr.mxu0 0.0
    %1323 = vmatpush1.msra.mxu0 0.0
    %1324 = vmatprep.subr.mxu0 0.0
    %1325 = vmatpush1.msra.mxu0 0.0
    %1326 = vmatprep.subr.mxu0 0.0
    %1327 = vmatpush1.msra.mxu0 0.0
    %1328 = vmatprep.subr.mxu0 0.0
    %1329 = vmatpush1.msra.mxu0 0.0
    %1330 = vmatprep.subr.mxu0 0.0
    %1331 = vmatpush1.msra.mxu0 0.0
    %1332 = vmatprep.subr.mxu0 0.0
    %1333 = vmatpush1.msra.mxu0 0.0
    %1334 = vmatprep.subr.mxu0 0.0
    %1335 = vmatpush1.msra.mxu0 0.0
    %1336 = vmatprep.subr.mxu0 0.0
    %1337 = vmatpush1.msra.mxu0 0.0
    %1338 = vmatprep.subr.mxu0 0.0
    %1339 = vmatpush1.msra.mxu0 0.0
    %1340 = vmatprep.subr.mxu0 0.0
    %1341 = vmatpush1.msra.mxu0 0.0
    %1342 = vmatprep.subr.mxu0 0.0
    %1343 = vmatpush1.msra.mxu0 0.0
    %1344 = vmatprep.subr.mxu0 0.0
    %1345 = vmatpush1.msra.mxu0 0.0
    %1346 = vmatprep.subr.mxu0 0.0
    %1347 = vmatpush1.msra.mxu0 0.0
    %1348 = vmatprep.subr.mxu0 0.0
    %1349 = vmatpush1.msra.mxu0 0.0
    %1350 = vmatprep.subr.mxu0 0.0
    %1351 = vmatpush1.msra.mxu0 0.0
    %1352 = vmatprep.subr.mxu0 0.0
    %1353 = vmatpush1.msra.mxu0 0.0
    %1354 = vmatprep.subr.mxu0 0.0
    %1355 = vmatpush1.msra.mxu0 0.0
    %1356 = vmatprep.subr.mxu0 0.0
    %1357 = vmatpush1.msra.mxu0 0.0
    %1358 = vmatprep.subr.mxu0 0.0
    %1359 = vmatpush1.msra.mxu0 0.0
    %1360 = vmatprep.subr.mxu0 0.0
    %1361 = vmatpush1.msra.mxu0 0.0
    %1362 = vmatprep.subr.mxu0 0.0
    %1363 = vmatpush1.msra.mxu0 0.0
    %1364 = vmatprep.subr.mxu0 0.0
    %1365 = vmatpush1.msra.mxu0 0.0
    %1366 = vmatprep.subr.mxu0 0.0
    %1367 = vmatpush1.msra.mxu0 0.0
    %1368 = vmatprep.subr.mxu0 0.0
    %1369 = vmatpush1.msra.mxu0 0.0
    %1370 = vmatprep.subr.mxu0 0.0
    %1371 = vmatpush1.msra.mxu0 0.0
    %1372 = vmatprep.subr.mxu0 0.0
    %1373 = vmatpush1.msra.mxu0 0.0
    %1374 = vmatprep.subr.mxu0 0.0
    %1375 = vmatpush1.msra.mxu0 0.0
    %1376 = vmatprep.subr.mxu0 0.0
    %1377 = vmatpush1.msra.mxu0 0.0
    %1378 = vmatprep.mubr.f32.mxu0 0.0
    %1379 = vmatmul.mubr.f32.gmra.mrb[0].mxu0 %v1312
    %v1380 = vpop.f32.mrb[0].mxu0
    %v1381 = vadd.f32 0.0, %v1380
    %v1382 = vpop.f32.mrb[0].mxu0
    %1383 = vdwg.mxu0
    %v1384 = vadd.f32 %v1311, %v1381
    %v1385 = vxor.u32 %v1384, 2147483648
    %v1386 = vmul.f32 %v1385, 1.442695
    %v1387 = vpow.pop %v1386
    %v1388 = vadd.f32 %v1387, 1.0
    %v1389 = vrcp.pop %v1388
    %v1390 = vmul.f32 1.0, %v1389
    %v1391 = vtanh.pop %v1384
    %v1392 = vmul.f32 %v1390, %v1299
    %1394 = vrot.lane.b32.xlu0 %v1391, 64
    %v1395 = vpop.permute.xlu0 %1394
    %v1397 = vmul.f32 %v1390, %v1395
    %1399 = vrot.lane.b32.xlu0 %v1397, 32
    %v1400 = vpop.permute.xlu0 %1399
    %v1402 = vadd.f32 %v1392, %v1400
    %v1403 = vtanh.pop %v1402
    %1405 = vrot.lane.b32.xlu0 %v1403, 64
    %v1406 = vpop.permute.xlu0 %1405
    %v1408 = vmul.f32 %v1390, %v1406
    %1410 = vrot.lane.b32.xlu0 %v1408, 32
    %v1411 = vpop.permute.xlu0 %1410
    %1413 = vst.msk [vmem:[#allocation3 + $0x4] sm:$0x3] %vm284, %v1411
    %v1414 = vld [vmem:[#allocation2 + $0x6] sm:$0x3]
    %v1415 = vsel %vm181, %v1411, 0
    %1417 = vmatprep.subr.mxu0 0.0
    %1418 = vmatpush1.msra.mxu0 %v1103
    %1419 = vmatprep.subr.mxu0 0.0
    %1420 = vmatpush1.msra.mxu0 %v1104
    %1421 = vmatprep.subr.mxu0 0.0
    %1422 = vmatpush1.msra.mxu0 %v1105
    %1423 = vmatprep.subr.mxu0 0.0
    %1424 = vmatpush1.msra.mxu0 %v1106
    %1425 = vmatprep.subr.mxu0 0.0
    %1426 = vmatpush1.msra.mxu0 0.0
    %1427 = vmatprep.subr.mxu0 0.0
    %1428 = vmatpush1.msra.mxu0 0.0
    %1429 = vmatprep.subr.mxu0 0.0
    %1430 = vmatpush1.msra.mxu0 0.0
    %1431 = vmatprep.subr.mxu0 0.0
    %1432 = vmatpush1.msra.mxu0 0.0
    %1433 = vmatprep.subr.mxu0 0.0
    %1434 = vmatpush1.msra.mxu0 0.0
    %1435 = vmatprep.subr.mxu0 0.0
    %1436 = vmatpush1.msra.mxu0 0.0
    %1437 = vmatprep.subr.mxu0 0.0
    %1438 = vmatpush1.msra.mxu0 0.0
    %1439 = vmatprep.subr.mxu0 0.0
    %1440 = vmatpush1.msra.mxu0 0.0
    %1441 = vmatprep.subr.mxu0 0.0
    %1442 = vmatpush1.msra.mxu0 0.0
    %1443 = vmatprep.subr.mxu0 0.0
    %1444 = vmatpush1.msra.mxu0 0.0
    %1445 = vmatprep.subr.mxu0 0.0
    %1446 = vmatpush1.msra.mxu0 0.0
    %1447 = vmatprep.subr.mxu0 0.0
    %1448 = vmatpush1.msra.mxu0 0.0
    %1449 = vmatprep.subr.mxu0 0.0
    %1450 = vmatpush1.msra.mxu0 0.0
    %1451 = vmatprep.subr.mxu0 0.0
    %1452 = vmatpush1.msra.mxu0 0.0
    %1453 = vmatprep.subr.mxu0 0.0
    %1454 = vmatpush1.msra.mxu0 0.0
    %1455 = vmatprep.subr.mxu0 0.0
    %1456 = vmatpush1.msra.mxu0 0.0
    %1457 = vmatprep.subr.mxu0 0.0
    %1458 = vmatpush1.msra.mxu0 0.0
    %1459 = vmatprep.subr.mxu0 0.0
    %1460 = vmatpush1.msra.mxu0 0.0
    %1461 = vmatprep.subr.mxu0 0.0
    %1462 = vmatpush1.msra.mxu0 0.0
    %1463 = vmatprep.subr.mxu0 0.0
    %1464 = vmatpush1.msra.mxu0 0.0
    %1465 = vmatprep.subr.mxu0 0.0
    %1466 = vmatpush1.msra.mxu0 0.0
    %1467 = vmatprep.subr.mxu0 0.0
    %1468 = vmatpush1.msra.mxu0 0.0
    %1469 = vmatprep.subr.mxu0 0.0
    %1470 = vmatpush1.msra.mxu0 0.0
    %1471 = vmatprep.subr.mxu0 0.0
    %1472 = vmatpush1.msra.mxu0 0.0
    %1473 = vmatprep.subr.mxu0 0.0
    %1474 = vmatpush1.msra.mxu0 0.0
    %1475 = vmatprep.subr.mxu0 0.0
    %1476 = vmatpush1.msra.mxu0 0.0
    %1477 = vmatprep.subr.mxu0 0.0
    %1478 = vmatpush1.msra.mxu0 0.0
    %1479 = vmatprep.subr.mxu0 0.0
    %1480 = vmatpush1.msra.mxu0 0.0
    %1481 = vmatprep.mubr.f32.mxu0 0.0
    %1482 = vmatmul.mubr.f32.gmra.mrb[0].mxu0 %v1415
    %v1483 = vpop.f32.mrb[0].mxu0
    %v1484 = vadd.f32 0.0, %v1483
    %v1485 = vpop.f32.mrb[0].mxu0
    %1486 = vdwg.mxu0
    %v1487 = vadd.f32 %v1414, %v1484
    %v1488 = vxor.u32 %v1487, 2147483648
    %v1489 = vmul.f32 %v1488, 1.442695
    %v1490 = vpow.pop %v1489
    %v1491 = vadd.f32 %v1490, 1.0
    %v1492 = vrcp.pop %v1491
    %v1493 = vmul.f32 1.0, %v1492
    %v1494 = vtanh.pop %v1487
    %v1495 = vmul.f32 %v1493, %v1402
    %1497 = vrot.lane.b32.xlu0 %v1494, 64
    %v1498 = vpop.permute.xlu0 %1497
    %v1500 = vmul.f32 %v1493, %v1498
    %1502 = vrot.lane.b32.xlu0 %v1500, 32
    %v1503 = vpop.permute.xlu0 %1502
    %v1505 = vadd.f32 %v1495, %v1503
    %v1506 = vtanh.pop %v1505
    %1508 = vrot.lane.b32.xlu0 %v1506, 64
    %v1509 = vpop.permute.xlu0 %1508
    %v1511 = vmul.f32 %v1493, %v1509
    %1513 = vrot.lane.b32.xlu0 %v1511, 32
    %v1514 = vpop.permute.xlu0 %1513
    %1516 = vst.msk [vmem:[#allocation3 + $0x6] sm:$0x3] %vm284, %v1514
    %v1517 = vld [vmem:[#allocation2 + $0x8] sm:$0x3]
    %v1518 = vsel %vm181, %v1514, 0
    %1520 = vmatprep.subr.mxu0 0.0
    %1521 = vmatpush1.msra.mxu0 %v1103
    %1522 = vmatprep.subr.mxu0 0.0
    %1523 = vmatpush1.msra.mxu0 %v1104
    %1524 = vmatprep.subr.mxu0 0.0
    %1525 = vmatpush1.msra.mxu0 %v1105
    %1526 = vmatprep.subr.mxu0 0.0
    %1527 = vmatpush1.msra.mxu0 %v1106
    %1528 = vmatprep.subr.mxu0 0.0
    %1529 = vmatpush1.msra.mxu0 0.0
    %1530 = vmatprep.subr.mxu0 0.0
    %1531 = vmatpush1.msra.mxu0 0.0
    %1532 = vmatprep.subr.mxu0 0.0
    %1533 = vmatpush1.msra.mxu0 0.0
    %1534 = vmatprep.subr.mxu0 0.0
    %1535 = vmatpush1.msra.mxu0 0.0
    %1536 = vmatprep.subr.mxu0 0.0
    %1537 = vmatpush1.msra.mxu0 0.0
    %1538 = vmatprep.subr.mxu0 0.0
    %1539 = vmatpush1.msra.mxu0 0.0
    %1540 = vmatprep.subr.mxu0 0.0
    %1541 = vmatpush1.msra.mxu0 0.0
    %1542 = vmatprep.subr.mxu0 0.0
    %1543 = vmatpush1.msra.mxu0 0.0
    %1544 = vmatprep.subr.mxu0 0.0
    %1545 = vmatpush1.msra.mxu0 0.0
    %1546 = vmatprep.subr.mxu0 0.0
    %1547 = vmatpush1.msra.mxu0 0.0
    %1548 = vmatprep.subr.mxu0 0.0
    %1549 = vmatpush1.msra.mxu0 0.0
    %1550 = vmatprep.subr.mxu0 0.0
    %1551 = vmatpush1.msra.mxu0 0.0
    %1552 = vmatprep.subr.mxu0 0.0
    %1553 = vmatpush1.msra.mxu0 0.0
    %1554 = vmatprep.subr.mxu0 0.0
    %1555 = vmatpush1.msra.mxu0 0.0
    %1556 = vmatprep.subr.mxu0 0.0
    %1557 = vmatpush1.msra.mxu0 0.0
    %1558 = vmatprep.subr.mxu0 0.0
    %1559 = vmatpush1.msra.mxu0 0.0
    %1560 = vmatprep.subr.mxu0 0.0
    %1561 = vmatpush1.msra.mxu0 0.0
    %1562 = vmatprep.subr.mxu0 0.0
    %1563 = vmatpush1.msra.mxu0 0.0
    %1564 = vmatprep.subr.mxu0 0.0
    %1565 = vmatpush1.msra.mxu0 0.0
    %1566 = vmatprep.subr.mxu0 0.0
    %1567 = vmatpush1.msra.mxu0 0.0
    %1568 = vmatprep.subr.mxu0 0.0
    %1569 = vmatpush1.msra.mxu0 0.0
    %1570 = vmatprep.subr.mxu0 0.0
    %1571 = vmatpush1.msra.mxu0 0.0
    %1572 = vmatprep.subr.mxu0 0.0
    %1573 = vmatpush1.msra.mxu0 0.0
    %1574 = vmatprep.subr.mxu0 0.0
    %1575 = vmatpush1.msra.mxu0 0.0
    %1576 = vmatprep.subr.mxu0 0.0
    %1577 = vmatpush1.msra.mxu0 0.0
    %1578 = vmatprep.subr.mxu0 0.0
    %1579 = vmatpush1.msra.mxu0 0.0
    %1580 = vmatprep.subr.mxu0 0.0
    %1581 = vmatpush1.msra.mxu0 0.0
    %1582 = vmatprep.subr.mxu0 0.0
    %1583 = vmatpush1.msra.mxu0 0.0
    %1584 = vmatprep.mubr.f32.mxu0 0.0
    %1585 = vmatmul.mubr.f32.gmra.mrb[0].mxu0 %v1518
    %v1586 = vpop.f32.mrb[0].mxu0
    %v1587 = vadd.f32 0.0, %v1586
    %v1588 = vpop.f32.mrb[0].mxu0
    %1589 = vdwg.mxu0
    %v1590 = vadd.f32 %v1517, %v1587
    %v1591 = vxor.u32 %v1590, 2147483648
    %v1592 = vmul.f32 %v1591, 1.442695
    %v1593 = vpow.pop %v1592
    %v1594 = vadd.f32 %v1593, 1.0
    %v1595 = vrcp.pop %v1594
    %v1596 = vmul.f32 1.0, %v1595
    %v1597 = vtanh.pop %v1590
    %v1598 = vmul.f32 %v1596, %v1505
    %1600 = vrot.lane.b32.xlu0 %v1597, 64
    %v1601 = vpop.permute.xlu0 %1600
    %v1603 = vmul.f32 %v1596, %v1601
    %1605 = vrot.lane.b32.xlu0 %v1603, 32
    %v1606 = vpop.permute.xlu0 %1605
    %v1608 = vadd.f32 %v1598, %v1606
    %v1609 = vtanh.pop %v1608
    %1611 = vrot.lane.b32.xlu0 %v1609, 64
    %v1612 = vpop.permute.xlu0 %1611
    %v1614 = vmul.f32 %v1596, %v1612
    %1616 = vrot.lane.b32.xlu0 %v1614, 32
    %v1617 = vpop.permute.xlu0 %1616
    %1619 = vst.msk [vmem:[#allocation3 + $0x8] sm:$0x3] %vm284, %v1617
    %v1620 = vld [vmem:[#allocation2 + $0xa] sm:$0x3]
    %v1621 = vsel %vm181, %v1617, 0
    %1623 = vmatprep.subr.mxu0 0.0
    %1624 = vmatpush1.msra.mxu0 %v1103
    %1625 = vmatprep.subr.mxu0 0.0
    %1626 = vmatpush1.msra.mxu0 %v1104
    %1627 = vmatprep.subr.mxu0 0.0
    %1628 = vmatpush1.msra.mxu0 %v1105
    %1629 = vmatprep.subr.mxu0 0.0
    %1630 = vmatpush1.msra.mxu0 %v1106
    %1631 = vmatprep.subr.mxu0 0.0
    %1632 = vmatpush1.msra.mxu0 0.0
    %1633 = vmatprep.subr.mxu0 0.0
    %1634 = vmatpush1.msra.mxu0 0.0
    %1635 = vmatprep.subr.mxu0 0.0
    %1636 = vmatpush1.msra.mxu0 0.0
    %1637 = vmatprep.subr.mxu0 0.0
    %1638 = vmatpush1.msra.mxu0 0.0
    %1639 = vmatprep.subr.mxu0 0.0
    %1640 = vmatpush1.msra.mxu0 0.0
    %1641 = vmatprep.subr.mxu0 0.0
    %1642 = vmatpush1.msra.mxu0 0.0
    %1643 = vmatprep.subr.mxu0 0.0
    %1644 = vmatpush1.msra.mxu0 0.0
    %1645 = vmatprep.subr.mxu0 0.0
    %1646 = vmatpush1.msra.mxu0 0.0
    %1647 = vmatprep.subr.mxu0 0.0
    %1648 = vmatpush1.msra.mxu0 0.0
    %1649 = vmatprep.subr.mxu0 0.0
    %1650 = vmatpush1.msra.mxu0 0.0
    %1651 = vmatprep.subr.mxu0 0.0
    %1652 = vmatpush1.msra.mxu0 0.0
    %1653 = vmatprep.subr.mxu0 0.0
    %1654 = vmatpush1.msra.mxu0 0.0
    %1655 = vmatprep.subr.mxu0 0.0
    %1656 = vmatpush1.msra.mxu0 0.0
    %1657 = vmatprep.subr.mxu0 0.0
    %1658 = vmatpush1.msra.mxu0 0.0
    %1659 = vmatprep.subr.mxu0 0.0
    %1660 = vmatpush1.msra.mxu0 0.0
    %1661 = vmatprep.subr.mxu0 0.0
    %1662 = vmatpush1.msra.mxu0 0.0
    %1663 = vmatprep.subr.mxu0 0.0
    %1664 = vmatpush1.msra.mxu0 0.0
    %1665 = vmatprep.subr.mxu0 0.0
    %1666 = vmatpush1.msra.mxu0 0.0
    %1667 = vmatprep.subr.mxu0 0.0
    %1668 = vmatpush1.msra.mxu0 0.0
    %1669 = vmatprep.subr.mxu0 0.0
    %1670 = vmatpush1.msra.mxu0 0.0
    %1671 = vmatprep.subr.mxu0 0.0
    %1672 = vmatpush1.msra.mxu0 0.0
    %1673 = vmatprep.subr.mxu0 0.0
    %1674 = vmatpush1.msra.mxu0 0.0
    %1675 = vmatprep.subr.mxu0 0.0
    %1676 = vmatpush1.msra.mxu0 0.0
    %1677 = vmatprep.subr.mxu0 0.0
    %1678 = vmatpush1.msra.mxu0 0.0
    %1679 = vmatprep.subr.mxu0 0.0
    %1680 = vmatpush1.msra.mxu0 0.0
    %1681 = vmatprep.subr.mxu0 0.0
    %1682 = vmatpush1.msra.mxu0 0.0
    %1683 = vmatprep.subr.mxu0 0.0
    %1684 = vmatpush1.msra.mxu0 0.0
    %1685 = vmatprep.subr.mxu0 0.0
    %1686 = vmatpush1.msra.mxu0 0.0
    %1687 = vmatprep.mubr.f32.mxu0 0.0
    %1688 = vmatmul.mubr.f32.gmra.mrb[0].mxu0 %v1621
    %v1689 = vpop.f32.mrb[0].mxu0
    %v1690 = vadd.f32 0.0, %v1689
    %v1691 = vpop.f32.mrb[0].mxu0
    %1692 = vdwg.mxu0
    %v1693 = vadd.f32 %v1620, %v1690
    %v1694 = vxor.u32 %v1693, 2147483648
    %v1695 = vmul.f32 %v1694, 1.442695
    %v1696 = vpow.pop %v1695
    %v1697 = vadd.f32 %v1696, 1.0
    %v1698 = vrcp.pop %v1697
    %v1699 = vmul.f32 1.0, %v1698
    %v1700 = vtanh.pop %v1693
    %v1701 = vmul.f32 %v1699, %v1608
    %1703 = vrot.lane.b32.xlu0 %v1700, 64
    %v1704 = vpop.permute.xlu0 %1703
    %v1706 = vmul.f32 %v1699, %v1704
    %1708 = vrot.lane.b32.xlu0 %v1706, 32
    %v1709 = vpop.permute.xlu0 %1708
    %v1711 = vadd.f32 %v1701, %v1709
    %v1712 = vtanh.pop %v1711
    %1714 = vrot.lane.b32.xlu0 %v1712, 64
    %v1715 = vpop.permute.xlu0 %1714
    %v1717 = vmul.f32 %v1699, %v1715
    %1719 = vrot.lane.b32.xlu0 %v1717, 32
    %v1720 = vpop.permute.xlu0 %1719
    %1722 = vst.msk [vmem:[#allocation3 + $0xa] sm:$0x3] %vm284, %v1720
    %v1723 = vld [vmem:[#allocation2 + $0xc] sm:$0x3]
    %v1724 = vsel %vm181, %v1720, 0
    %1726 = vmatprep.subr.mxu0 0.0
    %1727 = vmatpush1.msra.mxu0 %v1103
    %1728 = vmatprep.subr.mxu0 0.0
    %1729 = vmatpush1.msra.mxu0 %v1104
    %1730 = vmatprep.subr.mxu0 0.0
    %1731 = vmatpush1.msra.mxu0 %v1105
    %1732 = vmatprep.subr.mxu0 0.0
    %1733 = vmatpush1.msra.mxu0 %v1106
    %1734 = vmatprep.subr.mxu0 0.0
    %1735 = vmatpush1.msra.mxu0 0.0
    %1736 = vmatprep.subr.mxu0 0.0
    %1737 = vmatpush1.msra.mxu0 0.0
    %1738 = vmatprep.subr.mxu0 0.0
    %1739 = vmatpush1.msra.mxu0 0.0
    %1740 = vmatprep.subr.mxu0 0.0
    %1741 = vmatpush1.msra.mxu0 0.0
    %1742 = vmatprep.subr.mxu0 0.0
    %1743 = vmatpush1.msra.mxu0 0.0
    %1744 = vmatprep.subr.mxu0 0.0
    %1745 = vmatpush1.msra.mxu0 0.0
    %1746 = vmatprep.subr.mxu0 0.0
    %1747 = vmatpush1.msra.mxu0 0.0
    %1748 = vmatprep.subr.mxu0 0.0
    %1749 = vmatpush1.msra.mxu0 0.0
    %1750 = vmatprep.subr.mxu0 0.0
    %1751 = vmatpush1.msra.mxu0 0.0
    %1752 = vmatprep.subr.mxu0 0.0
    %1753 = vmatpush1.msra.mxu0 0.0
    %1754 = vmatprep.subr.mxu0 0.0
    %1755 = vmatpush1.msra.mxu0 0.0
    %1756 = vmatprep.subr.mxu0 0.0
    %1757 = vmatpush1.msra.mxu0 0.0
    %1758 = vmatprep.subr.mxu0 0.0
    %1759 = vmatpush1.msra.mxu0 0.0
    %1760 = vmatprep.subr.mxu0 0.0
    %1761 = vmatpush1.msra.mxu0 0.0
    %1762 = vmatprep.subr.mxu0 0.0
    %1763 = vmatpush1.msra.mxu0 0.0
    %1764 = vmatprep.subr.mxu0 0.0
    %1765 = vmatpush1.msra.mxu0 0.0
    %1766 = vmatprep.subr.mxu0 0.0
    %1767 = vmatpush1.msra.mxu0 0.0
    %1768 = vmatprep.subr.mxu0 0.0
    %1769 = vmatpush1.msra.mxu0 0.0
    %1770 = vmatprep.subr.mxu0 0.0
    %1771 = vmatpush1.msra.mxu0 0.0
    %1772 = vmatprep.subr.mxu0 0.0
    %1773 = vmatpush1.msra.mxu0 0.0
    %1774 = vmatprep.subr.mxu0 0.0
    %1775 = vmatpush1.msra.mxu0 0.0
    %1776 = vmatprep.subr.mxu0 0.0
    %1777 = vmatpush1.msra.mxu0 0.0
    %1778 = vmatprep.subr.mxu0 0.0
    %1779 = vmatpush1.msra.mxu0 0.0
    %1780 = vmatprep.subr.mxu0 0.0
    %1781 = vmatpush1.msra.mxu0 0.0
    %1782 = vmatprep.subr.mxu0 0.0
    %1783 = vmatpush1.msra.mxu0 0.0
    %1784 = vmatprep.subr.mxu0 0.0
    %1785 = vmatpush1.msra.mxu0 0.0
    %1786 = vmatprep.subr.mxu0 0.0
    %1787 = vmatpush1.msra.mxu0 0.0
    %1788 = vmatprep.subr.mxu0 0.0
    %1789 = vmatpush1.msra.mxu0 0.0
    %1790 = vmatprep.mubr.f32.mxu0 0.0
    %1791 = vmatmul.mubr.f32.gmra.mrb[0].mxu0 %v1724
    %v1792 = vpop.f32.mrb[0].mxu0
    %v1793 = vadd.f32 0.0, %v1792
    %v1794 = vpop.f32.mrb[0].mxu0
    %1795 = vdwg.mxu0
    %v1796 = vadd.f32 %v1723, %v1793
    %v1797 = vxor.u32 %v1796, 2147483648
    %v1798 = vmul.f32 %v1797, 1.442695
    %v1799 = vpow.pop %v1798
    %v1800 = vadd.f32 %v1799, 1.0
    %v1801 = vrcp.pop %v1800
    %v1802 = vmul.f32 1.0, %v1801
    %v1803 = vtanh.pop %v1796
    %v1804 = vmul.f32 %v1802, %v1711
    %1806 = vrot.lane.b32.xlu0 %v1803, 64
    %v1807 = vpop.permute.xlu0 %1806
    %v1809 = vmul.f32 %v1802, %v1807
    %1811 = vrot.lane.b32.xlu0 %v1809, 32
    %v1812 = vpop.permute.xlu0 %1811
    %v1814 = vadd.f32 %v1804, %v1812
    %v1815 = vtanh.pop %v1814
    %1817 = vrot.lane.b32.xlu0 %v1815, 64
    %v1818 = vpop.permute.xlu0 %1817
    %v1820 = vmul.f32 %v1802, %v1818
    %1822 = vrot.lane.b32.xlu0 %v1820, 32
    %v1823 = vpop.permute.xlu0 %1822
    %1825 = vst.msk [vmem:[#allocation3 + $0xc] sm:$0x3] %vm284, %v1823
    %v1826 = vld [vmem:[#allocation2 + $0xe] sm:$0x3]
    %v1827 = vsel %vm181, %v1823, 0
    %1829 = vmatprep.subr.mxu0 0.0
    %1830 = vmatpush1.msra.mxu0 %v1103
    %1831 = vmatprep.subr.mxu0 0.0
    %1832 = vmatpush1.msra.mxu0 %v1104
    %1833 = vmatprep.subr.mxu0 0.0
    %1834 = vmatpush1.msra.mxu0 %v1105
    %1835 = vmatprep.subr.mxu0 0.0
    %1836 = vmatpush1.msra.mxu0 %v1106
    %1837 = vmatprep.subr.mxu0 0.0
    %1838 = vmatpush1.msra.mxu0 0.0
    %1839 = vmatprep.subr.mxu0 0.0
    %1840 = vmatpush1.msra.mxu0 0.0
    %1841 = vmatprep.subr.mxu0 0.0
    %1842 = vmatpush1.msra.mxu0 0.0
    %1843 = vmatprep.subr.mxu0 0.0
    %1844 = vmatpush1.msra.mxu0 0.0
    %1845 = vmatprep.subr.mxu0 0.0
    %1846 = vmatpush1.msra.mxu0 0.0
    %1847 = vmatprep.subr.mxu0 0.0
    %1848 = vmatpush1.msra.mxu0 0.0
    %1849 = vmatprep.subr.mxu0 0.0
    %1850 = vmatpush1.msra.mxu0 0.0
    %1851 = vmatprep.subr.mxu0 0.0
    %1852 = vmatpush1.msra.mxu0 0.0
    %1853 = vmatprep.subr.mxu0 0.0
    %1854 = vmatpush1.msra.mxu0 0.0
    %1855 = vmatprep.subr.mxu0 0.0
    %1856 = vmatpush1.msra.mxu0 0.0
    %1857 = vmatprep.subr.mxu0 0.0
    %1858 = vmatpush1.msra.mxu0 0.0
    %1859 = vmatprep.subr.mxu0 0.0
    %1860 = vmatpush1.msra.mxu0 0.0
    %1861 = vmatprep.subr.mxu0 0.0
    %1862 = vmatpush1.msra.mxu0 0.0
    %1863 = vmatprep.subr.mxu0 0.0
    %1864 = vmatpush1.msra.mxu0 0.0
    %1865 = vmatprep.subr.mxu0 0.0
    %1866 = vmatpush1.msra.mxu0 0.0
    %1867 = vmatprep.subr.mxu0 0.0
    %1868 = vmatpush1.msra.mxu0 0.0
    %1869 = vmatprep.subr.mxu0 0.0
    %1870 = vmatpush1.msra.mxu0 0.0
    %1871 = vmatprep.subr.mxu0 0.0
    %1872 = vmatpush1.msra.mxu0 0.0
    %1873 = vmatprep.subr.mxu0 0.0
    %1874 = vmatpush1.msra.mxu0 0.0
    %1875 = vmatprep.subr.mxu0 0.0
    %1876 = vmatpush1.msra.mxu0 0.0
    %1877 = vmatprep.subr.mxu0 0.0
    %1878 = vmatpush1.msra.mxu0 0.0
    %1879 = vmatprep.subr.mxu0 0.0
    %1880 = vmatpush1.msra.mxu0 0.0
    %1881 = vmatprep.subr.mxu0 0.0
    %1882 = vmatpush1.msra.mxu0 0.0
    %1883 = vmatprep.subr.mxu0 0.0
    %1884 = vmatpush1.msra.mxu0 0.0
    %1885 = vmatprep.subr.mxu0 0.0
    %1886 = vmatpush1.msra.mxu0 0.0
    %1887 = vmatprep.subr.mxu0 0.0
    %1888 = vmatpush1.msra.mxu0 0.0
    %1889 = vmatprep.subr.mxu0 0.0
    %1890 = vmatpush1.msra.mxu0 0.0
    %1891 = vmatprep.subr.mxu0 0.0
    %1892 = vmatpush1.msra.mxu0 0.0
    %1893 = vmatprep.mubr.f32.mxu0 0.0
    %1894 = vmatmul.mubr.f32.gmra.mrb[0].mxu0 %v1827
    %v1895 = vpop.f32.mrb[0].mxu0
    %v1896 = vadd.f32 0.0, %v1895
    %v1897 = vpop.f32.mrb[0].mxu0
    %1898 = vdwg.mxu0
    %v1899 = vadd.f32 %v1826, %v1896
    %v1900 = vxor.u32 %v1899, 2147483648
    %v1901 = vmul.f32 %v1900, 1.442695
    %v1902 = vpow.pop %v1901
    %v1903 = vadd.f32 %v1902, 1.0
    %v1904 = vrcp.pop %v1903
    %v1905 = vmul.f32 1.0, %v1904
    %v1906 = vtanh.pop %v1899
    %v1907 = vmul.f32 %v1905, %v1814
    %1909 = vrot.lane.b32.xlu0 %v1906, 64
    %v1910 = vpop.permute.xlu0 %1909
    %v1912 = vmul.f32 %v1905, %v1910
    %1914 = vrot.lane.b32.xlu0 %v1912, 32
    %v1915 = vpop.permute.xlu0 %1914
    %v1917 = vadd.f32 %v1907, %v1915
    %v1918 = vtanh.pop %v1917
    %1920 = vrot.lane.b32.xlu0 %v1918, 64
    %v1921 = vpop.permute.xlu0 %1920
    %v1923 = vmul.f32 %v1905, %v1921
    %1925 = vrot.lane.b32.xlu0 %v1923, 32
    %v1926 = vpop.permute.xlu0 %1925
    %1928 = vst.msk [vmem:[#allocation3 + $0xe] sm:$0x3] %vm284, %v1926
    %v1929 = vld [vmem:[#allocation3] sm:$0xff]
    %v1930 = vld [vmem:[#allocation3 + $0x8] sm:$0xff]
    %v1931 = vld [vmem:[#allocation7] sm:$0xff]
    %v1932 = vld [vmem:[#allocation7 + $0x8] sm:$0xff]
    %v1933 = vld [vmem:[#allocation7 + $0x10] sm:$0xff]
    %v1934 = vld [vmem:[#allocation7 + $0x18] sm:$0xff]
    %v1935 = vld [vmem:[%s9] sm:$0x1]
    %v1937 = vlaneseq
    %v1938 = vshrl.u32 %v1937, 7
    %v1939 = vsub.s32 0, %v1938
    %v1940 = vrot.slane %v1935, %v1939
    %v1943 = vsel %vm181, %v1929, 0
    %v1946 = vsel %vm181, %v1930, 0
    %1948 = vmatprep.subr.mxu0 0.0
    %1949 = vmatpush1.msra.mxu0 %v1931
    %1950 = vmatprep.subr.mxu0 0.0
    %1951 = vmatpush1.msra.mxu0 %v1932
    %1952 = vmatprep.subr.mxu0 0.0
    %1953 = vmatpush1.msra.mxu0 %v1933
    %1954 = vmatprep.subr.mxu0 0.0
    %1955 = vmatpush1.msra.mxu0 %v1934
    %1956 = vmatprep.subr.mxu0 0.0
    %1957 = vmatpush1.msra.mxu0 0.0
    %1958 = vmatprep.subr.mxu0 0.0
    %1959 = vmatpush1.msra.mxu0 0.0
    %1960 = vmatprep.subr.mxu0 0.0
    %1961 = vmatpush1.msra.mxu0 0.0
    %1962 = vmatprep.subr.mxu0 0.0
    %1963 = vmatpush1.msra.mxu0 0.0
    %1964 = vmatprep.subr.mxu0 0.0
    %1965 = vmatpush1.msra.mxu0 0.0
    %1966 = vmatprep.subr.mxu0 0.0
    %1967 = vmatpush1.msra.mxu0 0.0
    %1968 = vmatprep.subr.mxu0 0.0
    %1969 = vmatpush1.msra.mxu0 0.0
    %1970 = vmatprep.subr.mxu0 0.0
    %1971 = vmatpush1.msra.mxu0 0.0
    %1972 = vmatprep.subr.mxu0 0.0
    %1973 = vmatpush1.msra.mxu0 0.0
    %1974 = vmatprep.subr.mxu0 0.0
    %1975 = vmatpush1.msra.mxu0 0.0
    %1976 = vmatprep.subr.mxu0 0.0
    %1977 = vmatpush1.msra.mxu0 0.0
    %1978 = vmatprep.subr.mxu0 0.0
    %1979 = vmatpush1.msra.mxu0 0.0
    %1980 = vmatprep.subr.mxu0 0.0
    %1981 = vmatpush1.msra.mxu0 0.0
    %1982 = vmatprep.subr.mxu0 0.0
    %1983 = vmatpush1.msra.mxu0 0.0
    %1984 = vmatprep.subr.mxu0 0.0
    %1985 = vmatpush1.msra.mxu0 0.0
    %1986 = vmatprep.subr.mxu0 0.0
    %1987 = vmatpush1.msra.mxu0 0.0
    %1988 = vmatprep.subr.mxu0 0.0
    %1989 = vmatpush1.msra.mxu0 0.0
    %1990 = vmatprep.subr.mxu0 0.0
    %1991 = vmatpush1.msra.mxu0 0.0
    %1992 = vmatprep.subr.mxu0 0.0
    %1993 = vmatpush1.msra.mxu0 0.0
    %1994 = vmatprep.subr.mxu0 0.0
    %1995 = vmatpush1.msra.mxu0 0.0
    %1996 = vmatprep.subr.mxu0 0.0
    %1997 = vmatpush1.msra.mxu0 0.0
    %1998 = vmatprep.subr.mxu0 0.0
    %1999 = vmatpush1.msra.mxu0 0.0
    %2000 = vmatprep.subr.mxu0 0.0
    %2001 = vmatpush1.msra.mxu0 0.0
    %2002 = vmatprep.subr.mxu0 0.0
    %2003 = vmatpush1.msra.mxu0 0.0
    %2004 = vmatprep.subr.mxu0 0.0
    %2005 = vmatpush1.msra.mxu0 0.0
    %2006 = vmatprep.subr.mxu0 0.0
    %2007 = vmatpush1.msra.mxu0 0.0
    %2008 = vmatprep.subr.mxu0 0.0
    %2009 = vmatpush1.msra.mxu0 0.0
    %2010 = vmatprep.subr.mxu0 0.0
    %2011 = vmatpush1.msra.mxu0 0.0
    %2012 = vmatprep.mubr.f32.mxu0 0.0
    %2013 = vmatmul.mubr.f32.gmra.mrb[0].mxu0 %v1943
    %v2014 = vpop.f32.mrb[0].mxu0
    %v2015 = vadd.f32 %v1940, %v2014
    %v2016 = vpop.f32.mrb[0].mxu0
    %2017 = vmatprep.mubr.f32.mxu0 0.0
    %2018 = vmatmul.mubr.f32.gmra.mrb[0].mxu0 %v1946
    %v2019 = vpop.f32.mrb[0].mxu0
    %v2020 = vadd.f32 %v1940, %v2019
    %v2021 = vpop.f32.mrb[0].mxu0
    %2022 = vdwg.mxu0
    %2023 = vst [vmem:[#allocation2] sm:$0xff] %v2015
    %2024 = vst [vmem:[#allocation2 + $0x8] sm:$0xff] %v2020
    %v2025 = vld [vmem:[#allocation9] sm:$0xff]
    %v2026 = vld [vmem:[#allocation9 + $0x8] sm:$0xff]
    %v2027 = vld [vmem:[#allocation9 + $0x10] sm:$0xff]
    %v2028 = vld [vmem:[#allocation9 + $0x18] sm:$0xff]
    %v2029 = vld [vmem:[#allocation2] sm:$0x3]
    %2030 = vmatprep.subr.mxu0 0.0
    %2031 = vmatpush1.msra.mxu0 %v2025
    %2032 = vmatprep.subr.mxu0 0.0
    %2033 = vmatpush1.msra.mxu0 %v2026
    %2034 = vmatprep.subr.mxu0 0.0
    %2035 = vmatpush1.msra.mxu0 %v2027
    %2036 = vmatprep.subr.mxu0 0.0
    %2037 = vmatpush1.msra.mxu0 %v2028
    %2038 = vmatprep.subr.mxu0 0.0
    %2039 = vmatpush1.msra.mxu0 0.0
    %2040 = vmatprep.subr.mxu0 0.0
    %2041 = vmatpush1.msra.mxu0 0.0
    %2042 = vmatprep.subr.mxu0 0.0
    %2043 = vmatpush1.msra.mxu0 0.0
    %2044 = vmatprep.subr.mxu0 0.0
    %2045 = vmatpush1.msra.mxu0 0.0
    %2046 = vmatprep.subr.mxu0 0.0
    %2047 = vmatpush1.msra.mxu0 0.0
    %2048 = vmatprep.subr.mxu0 0.0
    %2049 = vmatpush1.msra.mxu0 0.0
    %2050 = vmatprep.subr.mxu0 0.0
    %2051 = vmatpush1.msra.mxu0 0.0
    %2052 = vmatprep.subr.mxu0 0.0
    %2053 = vmatpush1.msra.mxu0 0.0
    %2054 = vmatprep.subr.mxu0 0.0
    %2055 = vmatpush1.msra.mxu0 0.0
    %2056 = vmatprep.subr.mxu0 0.0
    %2057 = vmatpush1.msra.mxu0 0.0
    %2058 = vmatprep.subr.mxu0 0.0
    %2059 = vmatpush1.msra.mxu0 0.0
    %2060 = vmatprep.subr.mxu0 0.0
    %2061 = vmatpush1.msra.mxu0 0.0
    %2062 = vmatprep.subr.mxu0 0.0
    %2063 = vmatpush1.msra.mxu0 0.0
    %2064 = vmatprep.subr.mxu0 0.0
    %2065 = vmatpush1.msra.mxu0 0.0
    %2066 = vmatprep.subr.mxu0 0.0
    %2067 = vmatpush1.msra.mxu0 0.0
    %2068 = vmatprep.subr.mxu0 0.0
    %2069 = vmatpush1.msra.mxu0 0.0
    %2070 = vmatprep.subr.mxu0 0.0
    %2071 = vmatpush1.msra.mxu0 0.0
    %2072 = vmatprep.subr.mxu0 0.0
    %2073 = vmatpush1.msra.mxu0 0.0
    %2074 = vmatprep.subr.mxu0 0.0
    %2075 = vmatpush1.msra.mxu0 0.0
    %2076 = vmatprep.subr.mxu0 0.0
    %2077 = vmatpush1.msra.mxu0 0.0
    %2078 = vmatprep.subr.mxu0 0.0
    %2079 = vmatpush1.msra.mxu0 0.0
    %2080 = vmatprep.subr.mxu0 0.0
    %2081 = vmatpush1.msra.mxu0 0.0
    %2082 = vmatprep.subr.mxu0 0.0
    %2083 = vmatpush1.msra.mxu0 0.0
    %2084 = vmatprep.subr.mxu0 0.0
    %2085 = vmatpush1.msra.mxu0 0.0
    %2086 = vmatprep.subr.mxu0 0.0
    %2087 = vmatpush1.msra.mxu0 0.0
    %2088 = vmatprep.subr.mxu0 0.0
    %2089 = vmatpush1.msra.mxu0 0.0
    %2090 = vmatprep.subr.mxu0 0.0
    %2091 = vmatpush1.msra.mxu0 0.0
    %2092 = vmatprep.subr.mxu0 0.0
    %2093 = vmatpush1.msra.mxu0 0.0
    %2094 = vmatprep.mubr.f32.mxu0 0.0
    %2095 = vmatmul.mubr.f32.gmra.mrb[0].mxu0 %v183
    %v2096 = vpop.f32.mrb[0].mxu0
    %v2097 = vadd.f32 0.0, %v2096
    %v2098 = vpop.f32.mrb[0].mxu0
    %2099 = vdwg.mxu0
    %v2100 = vadd.f32 %v2029, %v2097
    %v2101 = vxor.u32 %v2100, 2147483648
    %v2102 = vmul.f32 %v2101, 1.442695
    %v2103 = vpow.pop %v2102
    %v2104 = vadd.f32 %v2103, 1.0
    %v2105 = vrcp.pop %v2104
    %v2106 = vmul.f32 1.0, %v2105
    %v2107 = vtanh.pop %v2100
    %v2108 = vmul.f32 %v2106, 0.0
    %2110 = vrot.lane.b32.xlu0 %v2107, 64
    %v2111 = vpop.permute.xlu0 %2110
    %v2113 = vmul.f32 %v2106, %v2111
    %2115 = vrot.lane.b32.xlu0 %v2113, 32
    %v2116 = vpop.permute.xlu0 %2115
    %v2118 = vadd.f32 %v2108, %v2116
    %v2119 = vtanh.pop %v2118
    %2121 = vrot.lane.b32.xlu0 %v2119, 64
    %v2122 = vpop.permute.xlu0 %2121
    %v2124 = vmul.f32 %v2106, %v2122
    %2126 = vrot.lane.b32.xlu0 %v2124, 32
    %v2127 = vpop.permute.xlu0 %2126
    %2129 = vst.msk [vmem:[#allocation3] sm:$0x3] %vm284, %v2127
    %v2130 = vld [vmem:[#allocation2 + $0x2] sm:$0x3]
    %v2131 = vsel %vm181, %v2127, 0
    %2133 = vmatprep.subr.mxu0 0.0
    %2134 = vmatpush1.msra.mxu0 %v2025
    %2135 = vmatprep.subr.mxu0 0.0
    %2136 = vmatpush1.msra.mxu0 %v2026
    %2137 = vmatprep.subr.mxu0 0.0
    %2138 = vmatpush1.msra.mxu0 %v2027
    %2139 = vmatprep.subr.mxu0 0.0
    %2140 = vmatpush1.msra.mxu0 %v2028
    %2141 = vmatprep.subr.mxu0 0.0
    %2142 = vmatpush1.msra.mxu0 0.0
    %2143 = vmatprep.subr.mxu0 0.0
    %2144 = vmatpush1.msra.mxu0 0.0
    %2145 = vmatprep.subr.mxu0 0.0
    %2146 = vmatpush1.msra.mxu0 0.0
    %2147 = vmatprep.subr.mxu0 0.0
    %2148 = vmatpush1.msra.mxu0 0.0
    %2149 = vmatprep.subr.mxu0 0.0
    %2150 = vmatpush1.msra.mxu0 0.0
    %2151 = vmatprep.subr.mxu0 0.0
    %2152 = vmatpush1.msra.mxu0 0.0
    %2153 = vmatprep.subr.mxu0 0.0
    %2154 = vmatpush1.msra.mxu0 0.0
    %2155 = vmatprep.subr.mxu0 0.0
    %2156 = vmatpush1.msra.mxu0 0.0
    %2157 = vmatprep.subr.mxu0 0.0
    %2158 = vmatpush1.msra.mxu0 0.0
    %2159 = vmatprep.subr.mxu0 0.0
    %2160 = vmatpush1.msra.mxu0 0.0
    %2161 = vmatprep.subr.mxu0 0.0
    %2162 = vmatpush1.msra.mxu0 0.0
    %2163 = vmatprep.subr.mxu0 0.0
    %2164 = vmatpush1.msra.mxu0 0.0
    %2165 = vmatprep.subr.mxu0 0.0
    %2166 = vmatpush1.msra.mxu0 0.0
    %2167 = vmatprep.subr.mxu0 0.0
    %2168 = vmatpush1.msra.mxu0 0.0
    %2169 = vmatprep.subr.mxu0 0.0
    %2170 = vmatpush1.msra.mxu0 0.0
    %2171 = vmatprep.subr.mxu0 0.0
    %2172 = vmatpush1.msra.mxu0 0.0
    %2173 = vmatprep.subr.mxu0 0.0
    %2174 = vmatpush1.msra.mxu0 0.0
    %2175 = vmatprep.subr.mxu0 0.0
    %2176 = vmatpush1.msra.mxu0 0.0
    %2177 = vmatprep.subr.mxu0 0.0
    %2178 = vmatpush1.msra.mxu0 0.0
    %2179 = vmatprep.subr.mxu0 0.0
    %2180 = vmatpush1.msra.mxu0 0.0
    %2181 = vmatprep.subr.mxu0 0.0
    %2182 = vmatpush1.msra.mxu0 0.0
    %2183 = vmatprep.subr.mxu0 0.0
    %2184 = vmatpush1.msra.mxu0 0.0
    %2185 = vmatprep.subr.mxu0 0.0
    %2186 = vmatpush1.msra.mxu0 0.0
    %2187 = vmatprep.subr.mxu0 0.0
    %2188 = vmatpush1.msra.mxu0 0.0
    %2189 = vmatprep.subr.mxu0 0.0
    %2190 = vmatpush1.msra.mxu0 0.0
    %2191 = vmatprep.subr.mxu0 0.0
    %2192 = vmatpush1.msra.mxu0 0.0
    %2193 = vmatprep.subr.mxu0 0.0
    %2194 = vmatpush1.msra.mxu0 0.0
    %2195 = vmatprep.subr.mxu0 0.0
    %2196 = vmatpush1.msra.mxu0 0.0
    %2197 = vmatprep.mubr.f32.mxu0 0.0
    %2198 = vmatmul.mubr.f32.gmra.mrb[0].mxu0 %v2131
    %v2199 = vpop.f32.mrb[0].mxu0
    %v2200 = vadd.f32 0.0, %v2199
    %v2201 = vpop.f32.mrb[0].mxu0
    %2202 = vdwg.mxu0
    %v2203 = vadd.f32 %v2130, %v2200
    %v2204 = vxor.u32 %v2203, 2147483648
    %v2205 = vmul.f32 %v2204, 1.442695
    %v2206 = vpow.pop %v2205
    %v2207 = vadd.f32 %v2206, 1.0
    %v2208 = vrcp.pop %v2207
    %v2209 = vmul.f32 1.0, %v2208
    %v2210 = vtanh.pop %v2203
    %v2211 = vmul.f32 %v2209, %v2118
    %2213 = vrot.lane.b32.xlu0 %v2210, 64
    %v2214 = vpop.permute.xlu0 %2213
    %v2216 = vmul.f32 %v2209, %v2214
    %2218 = vrot.lane.b32.xlu0 %v2216, 32
    %v2219 = vpop.permute.xlu0 %2218
    %v2221 = vadd.f32 %v2211, %v2219
    %v2222 = vtanh.pop %v2221
    %2224 = vrot.lane.b32.xlu0 %v2222, 64
    %v2225 = vpop.permute.xlu0 %2224
    %v2227 = vmul.f32 %v2209, %v2225
    %2229 = vrot.lane.b32.xlu0 %v2227, 32
    %v2230 = vpop.permute.xlu0 %2229
    %2232 = vst.msk [vmem:[#allocation3 + $0x2] sm:$0x3] %vm284, %v2230
    %v2233 = vld [vmem:[#allocation2 + $0x4] sm:$0x3]
    %v2234 = vsel %vm181, %v2230, 0
    %2236 = vmatprep.subr.mxu0 0.0
    %2237 = vmatpush1.msra.mxu0 %v2025
    %2238 = vmatprep.subr.mxu0 0.0
    %2239 = vmatpush1.msra.mxu0 %v2026
    %2240 = vmatprep.subr.mxu0 0.0
    %2241 = vmatpush1.msra.mxu0 %v2027
    %2242 = vmatprep.subr.mxu0 0.0
    %2243 = vmatpush1.msra.mxu0 %v2028
    %2244 = vmatprep.subr.mxu0 0.0
    %2245 = vmatpush1.msra.mxu0 0.0
    %2246 = vmatprep.subr.mxu0 0.0
    %2247 = vmatpush1.msra.mxu0 0.0
    %2248 = vmatprep.subr.mxu0 0.0
    %2249 = vmatpush1.msra.mxu0 0.0
    %2250 = vmatprep.subr.mxu0 0.0
    %2251 = vmatpush1.msra.mxu0 0.0
    %2252 = vmatprep.subr.mxu0 0.0
    %2253 = vmatpush1.msra.mxu0 0.0
    %2254 = vmatprep.subr.mxu0 0.0
    %2255 = vmatpush1.msra.mxu0 0.0
    %2256 = vmatprep.subr.mxu0 0.0
    %2257 = vmatpush1.msra.mxu0 0.0
    %2258 = vmatprep.subr.mxu0 0.0
    %2259 = vmatpush1.msra.mxu0 0.0
    %2260 = vmatprep.subr.mxu0 0.0
    %2261 = vmatpush1.msra.mxu0 0.0
    %2262 = vmatprep.subr.mxu0 0.0
    %2263 = vmatpush1.msra.mxu0 0.0
    %2264 = vmatprep.subr.mxu0 0.0
    %2265 = vmatpush1.msra.mxu0 0.0
    %2266 = vmatprep.subr.mxu0 0.0
    %2267 = vmatpush1.msra.mxu0 0.0
    %2268 = vmatprep.subr.mxu0 0.0
    %2269 = vmatpush1.msra.mxu0 0.0
    %2270 = vmatprep.subr.mxu0 0.0
    %2271 = vmatpush1.msra.mxu0 0.0
    %2272 = vmatprep.subr.mxu0 0.0
    %2273 = vmatpush1.msra.mxu0 0.0
    %2274 = vmatprep.subr.mxu0 0.0
    %2275 = vmatpush1.msra.mxu0 0.0
    %2276 = vmatprep.subr.mxu0 0.0
    %2277 = vmatpush1.msra.mxu0 0.0
    %2278 = vmatprep.subr.mxu0 0.0
    %2279 = vmatpush1.msra.mxu0 0.0
    %2280 = vmatprep.subr.mxu0 0.0
    %2281 = vmatpush1.msra.mxu0 0.0
    %2282 = vmatprep.subr.mxu0 0.0
    %2283 = vmatpush1.msra.mxu0 0.0
    %2284 = vmatprep.subr.mxu0 0.0
    %2285 = vmatpush1.msra.mxu0 0.0
    %2286 = vmatprep.subr.mxu0 0.0
    %2287 = vmatpush1.msra.mxu0 0.0
    %2288 = vmatprep.subr.mxu0 0.0
    %2289 = vmatpush1.msra.mxu0 0.0
    %2290 = vmatprep.subr.mxu0 0.0
    %2291 = vmatpush1.msra.mxu0 0.0
    %2292 = vmatprep.subr.mxu0 0.0
    %2293 = vmatpush1.msra.mxu0 0.0
    %2294 = vmatprep.subr.mxu0 0.0
    %2295 = vmatpush1.msra.mxu0 0.0
    %2296 = vmatprep.subr.mxu0 0.0
    %2297 = vmatpush1.msra.mxu0 0.0
    %2298 = vmatprep.subr.mxu0 0.0
    %2299 = vmatpush1.msra.mxu0 0.0
    %2300 = vmatprep.mubr.f32.mxu0 0.0
    %2301 = vmatmul.mubr.f32.gmra.mrb[0].mxu0 %v2234
    %v2302 = vpop.f32.mrb[0].mxu0
    %v2303 = vadd.f32 0.0, %v2302
    %v2304 = vpop.f32.mrb[0].mxu0
    %2305 = vdwg.mxu0
    %v2306 = vadd.f32 %v2233, %v2303
    %v2307 = vxor.u32 %v2306, 2147483648
    %v2308 = vmul.f32 %v2307, 1.442695
    %v2309 = vpow.pop %v2308
    %v2310 = vadd.f32 %v2309, 1.0
    %v2311 = vrcp.pop %v2310
    %v2312 = vmul.f32 1.0, %v2311
    %v2313 = vtanh.pop %v2306
    %v2314 = vmul.f32 %v2312, %v2221
    %2316 = vrot.lane.b32.xlu0 %v2313, 64
    %v2317 = vpop.permute.xlu0 %2316
    %v2319 = vmul.f32 %v2312, %v2317
    %2321 = vrot.lane.b32.xlu0 %v2319, 32
    %v2322 = vpop.permute.xlu0 %2321
    %v2324 = vadd.f32 %v2314, %v2322
    %v2325 = vtanh.pop %v2324
    %2327 = vrot.lane.b32.xlu0 %v2325, 64
    %v2328 = vpop.permute.xlu0 %2327
    %v2330 = vmul.f32 %v2312, %v2328
    %2332 = vrot.lane.b32.xlu0 %v2330, 32
    %v2333 = vpop.permute.xlu0 %2332
    %2335 = vst.msk [vmem:[#allocation3 + $0x4] sm:$0x3] %vm284, %v2333
    %v2336 = vld [vmem:[#allocation2 + $0x6] sm:$0x3]
    %v2337 = vsel %vm181, %v2333, 0
    %2339 = vmatprep.subr.mxu0 0.0
    %2340 = vmatpush1.msra.mxu0 %v2025
    %2341 = vmatprep.subr.mxu0 0.0
    %2342 = vmatpush1.msra.mxu0 %v2026
    %2343 = vmatprep.subr.mxu0 0.0
    %2344 = vmatpush1.msra.mxu0 %v2027
    %2345 = vmatprep.subr.mxu0 0.0
    %2346 = vmatpush1.msra.mxu0 %v2028
    %2347 = vmatprep.subr.mxu0 0.0
    %2348 = vmatpush1.msra.mxu0 0.0
    %2349 = vmatprep.subr.mxu0 0.0
    %2350 = vmatpush1.msra.mxu0 0.0
    %2351 = vmatprep.subr.mxu0 0.0
    %2352 = vmatpush1.msra.mxu0 0.0
    %2353 = vmatprep.subr.mxu0 0.0
    %2354 = vmatpush1.msra.mxu0 0.0
    %2355 = vmatprep.subr.mxu0 0.0
    %2356 = vmatpush1.msra.mxu0 0.0
    %2357 = vmatprep.subr.mxu0 0.0
    %2358 = vmatpush1.msra.mxu0 0.0
    %2359 = vmatprep.subr.mxu0 0.0
    %2360 = vmatpush1.msra.mxu0 0.0
    %2361 = vmatprep.subr.mxu0 0.0
    %2362 = vmatpush1.msra.mxu0 0.0
    %2363 = vmatprep.subr.mxu0 0.0
    %2364 = vmatpush1.msra.mxu0 0.0
    %2365 = vmatprep.subr.mxu0 0.0
    %2366 = vmatpush1.msra.mxu0 0.0
    %2367 = vmatprep.subr.mxu0 0.0
    %2368 = vmatpush1.msra.mxu0 0.0
    %2369 = vmatprep.subr.mxu0 0.0
    %2370 = vmatpush1.msra.mxu0 0.0
    %2371 = vmatprep.subr.mxu0 0.0
    %2372 = vmatpush1.msra.mxu0 0.0
    %2373 = vmatprep.subr.mxu0 0.0
    %2374 = vmatpush1.msra.mxu0 0.0
    %2375 = vmatprep.subr.mxu0 0.0
    %2376 = vmatpush1.msra.mxu0 0.0
    %2377 = vmatprep.subr.mxu0 0.0
    %2378 = vmatpush1.msra.mxu0 0.0
    %2379 = vmatprep.subr.mxu0 0.0
    %2380 = vmatpush1.msra.mxu0 0.0
    %2381 = vmatprep.subr.mxu0 0.0
    %2382 = vmatpush1.msra.mxu0 0.0
    %2383 = vmatprep.subr.mxu0 0.0
    %2384 = vmatpush1.msra.mxu0 0.0
    %2385 = vmatprep.subr.mxu0 0.0
    %2386 = vmatpush1.msra.mxu0 0.0
    %2387 = vmatprep.subr.mxu0 0.0
    %2388 = vmatpush1.msra.mxu0 0.0
    %2389 = vmatprep.subr.mxu0 0.0
    %2390 = vmatpush1.msra.mxu0 0.0
    %2391 = vmatprep.subr.mxu0 0.0
    %2392 = vmatpush1.msra.mxu0 0.0
    %2393 = vmatprep.subr.mxu0 0.0
    %2394 = vmatpush1.msra.mxu0 0.0
    %2395 = vmatprep.subr.mxu0 0.0
    %2396 = vmatpush1.msra.mxu0 0.0
    %2397 = vmatprep.subr.mxu0 0.0
    %2398 = vmatpush1.msra.mxu0 0.0
    %2399 = vmatprep.subr.mxu0 0.0
    %2400 = vmatpush1.msra.mxu0 0.0
    %2401 = vmatprep.subr.mxu0 0.0
    %2402 = vmatpush1.msra.mxu0 0.0
    %2403 = vmatprep.mubr.f32.mxu0 0.0
    %2404 = vmatmul.mubr.f32.gmra.mrb[0].mxu0 %v2337
    %v2405 = vpop.f32.mrb[0].mxu0
    %v2406 = vadd.f32 0.0, %v2405
    %v2407 = vpop.f32.mrb[0].mxu0
    %2408 = vdwg.mxu0
    %v2409 = vadd.f32 %v2336, %v2406
    %v2410 = vxor.u32 %v2409, 2147483648
    %v2411 = vmul.f32 %v2410, 1.442695
    %v2412 = vpow.pop %v2411
    %v2413 = vadd.f32 %v2412, 1.0
    %v2414 = vrcp.pop %v2413
    %v2415 = vmul.f32 1.0, %v2414
    %v2416 = vtanh.pop %v2409
    %v2417 = vmul.f32 %v2415, %v2324
    %2419 = vrot.lane.b32.xlu0 %v2416, 64
    %v2420 = vpop.permute.xlu0 %2419
    %v2422 = vmul.f32 %v2415, %v2420
    %2424 = vrot.lane.b32.xlu0 %v2422, 32
    %v2425 = vpop.permute.xlu0 %2424
    %v2427 = vadd.f32 %v2417, %v2425
    %v2428 = vtanh.pop %v2427
    %2430 = vrot.lane.b32.xlu0 %v2428, 64
    %v2431 = vpop.permute.xlu0 %2430
    %v2433 = vmul.f32 %v2415, %v2431
    %2435 = vrot.lane.b32.xlu0 %v2433, 32
    %v2436 = vpop.permute.xlu0 %2435
    %2438 = vst.msk [vmem:[#allocation3 + $0x6] sm:$0x3] %vm284, %v2436
    %v2439 = vld [vmem:[#allocation2 + $0x8] sm:$0x3]
    %v2440 = vsel %vm181, %v2436, 0
    %2442 = vmatprep.subr.mxu0 0.0
    %2443 = vmatpush1.msra.mxu0 %v2025
    %2444 = vmatprep.subr.mxu0 0.0
    %2445 = vmatpush1.msra.mxu0 %v2026
    %2446 = vmatprep.subr.mxu0 0.0
    %2447 = vmatpush1.msra.mxu0 %v2027
    %2448 = vmatprep.subr.mxu0 0.0
    %2449 = vmatpush1.msra.mxu0 %v2028
    %2450 = vmatprep.subr.mxu0 0.0
    %2451 = vmatpush1.msra.mxu0 0.0
    %2452 = vmatprep.subr.mxu0 0.0
    %2453 = vmatpush1.msra.mxu0 0.0
    %2454 = vmatprep.subr.mxu0 0.0
    %2455 = vmatpush1.msra.mxu0 0.0
    %2456 = vmatprep.subr.mxu0 0.0
    %2457 = vmatpush1.msra.mxu0 0.0
    %2458 = vmatprep.subr.mxu0 0.0
    %2459 = vmatpush1.msra.mxu0 0.0
    %2460 = vmatprep.subr.mxu0 0.0
    %2461 = vmatpush1.msra.mxu0 0.0
    %2462 = vmatprep.subr.mxu0 0.0
    %2463 = vmatpush1.msra.mxu0 0.0
    %2464 = vmatprep.subr.mxu0 0.0
    %2465 = vmatpush1.msra.mxu0 0.0
    %2466 = vmatprep.subr.mxu0 0.0
    %2467 = vmatpush1.msra.mxu0 0.0
    %2468 = vmatprep.subr.mxu0 0.0
    %2469 = vmatpush1.msra.mxu0 0.0
    %2470 = vmatprep.subr.mxu0 0.0
    %2471 = vmatpush1.msra.mxu0 0.0
    %2472 = vmatprep.subr.mxu0 0.0
    %2473 = vmatpush1.msra.mxu0 0.0
    %2474 = vmatprep.subr.mxu0 0.0
    %2475 = vmatpush1.msra.mxu0 0.0
    %2476 = vmatprep.subr.mxu0 0.0
    %2477 = vmatpush1.msra.mxu0 0.0
    %2478 = vmatprep.subr.mxu0 0.0
    %2479 = vmatpush1.msra.mxu0 0.0
    %2480 = vmatprep.subr.mxu0 0.0
    %2481 = vmatpush1.msra.mxu0 0.0
    %2482 = vmatprep.subr.mxu0 0.0
    %2483 = vmatpush1.msra.mxu0 0.0
    %2484 = vmatprep.subr.mxu0 0.0
    %2485 = vmatpush1.msra.mxu0 0.0
    %2486 = vmatprep.subr.mxu0 0.0
    %2487 = vmatpush1.msra.mxu0 0.0
    %2488 = vmatprep.subr.mxu0 0.0
    %2489 = vmatpush1.msra.mxu0 0.0
    %2490 = vmatprep.subr.mxu0 0.0
    %2491 = vmatpush1.msra.mxu0 0.0
    %2492 = vmatprep.subr.mxu0 0.0
    %2493 = vmatpush1.msra.mxu0 0.0
    %2494 = vmatprep.subr.mxu0 0.0
    %2495 = vmatpush1.msra.mxu0 0.0
    %2496 = vmatprep.subr.mxu0 0.0
    %2497 = vmatpush1.msra.mxu0 0.0
    %2498 = vmatprep.subr.mxu0 0.0
    %2499 = vmatpush1.msra.mxu0 0.0
    %2500 = vmatprep.subr.mxu0 0.0
    %2501 = vmatpush1.msra.mxu0 0.0
    %2502 = vmatprep.subr.mxu0 0.0
    %2503 = vmatpush1.msra.mxu0 0.0
    %2504 = vmatprep.subr.mxu0 0.0
    %2505 = vmatpush1.msra.mxu0 0.0
    %2506 = vmatprep.mubr.f32.mxu0 0.0
    %2507 = vmatmul.mubr.f32.gmra.mrb[0].mxu0 %v2440
    %v2508 = vpop.f32.mrb[0].mxu0
    %v2509 = vadd.f32 0.0, %v2508
    %v2510 = vpop.f32.mrb[0].mxu0
    %2511 = vdwg.mxu0
    %v2512 = vadd.f32 %v2439, %v2509
    %v2513 = vxor.u32 %v2512, 2147483648
    %v2514 = vmul.f32 %v2513, 1.442695
    %v2515 = vpow.pop %v2514
    %v2516 = vadd.f32 %v2515, 1.0
    %v2517 = vrcp.pop %v2516
    %v2518 = vmul.f32 1.0, %v2517
    %v2519 = vtanh.pop %v2512
    %v2520 = vmul.f32 %v2518, %v2427
    %2522 = vrot.lane.b32.xlu0 %v2519, 64
    %v2523 = vpop.permute.xlu0 %2522
    %v2525 = vmul.f32 %v2518, %v2523
    %2527 = vrot.lane.b32.xlu0 %v2525, 32
    %v2528 = vpop.permute.xlu0 %2527
    %v2530 = vadd.f32 %v2520, %v2528
    %v2531 = vtanh.pop %v2530
    %2533 = vrot.lane.b32.xlu0 %v2531, 64
    %v2534 = vpop.permute.xlu0 %2533
    %v2536 = vmul.f32 %v2518, %v2534
    %2538 = vrot.lane.b32.xlu0 %v2536, 32
    %v2539 = vpop.permute.xlu0 %2538
    %2541 = vst.msk [vmem:[#allocation3 + $0x8] sm:$0x3] %vm284, %v2539
    %v2542 = vld [vmem:[#allocation2 + $0xa] sm:$0x3]
    %v2543 = vsel %vm181, %v2539, 0
    %2545 = vmatprep.subr.mxu0 0.0
    %2546 = vmatpush1.msra.mxu0 %v2025
    %2547 = vmatprep.subr.mxu0 0.0
    %2548 = vmatpush1.msra.mxu0 %v2026
    %2549 = vmatprep.subr.mxu0 0.0
    %2550 = vmatpush1.msra.mxu0 %v2027
    %2551 = vmatprep.subr.mxu0 0.0
    %2552 = vmatpush1.msra.mxu0 %v2028
    %2553 = vmatprep.subr.mxu0 0.0
    %2554 = vmatpush1.msra.mxu0 0.0
    %2555 = vmatprep.subr.mxu0 0.0
    %2556 = vmatpush1.msra.mxu0 0.0
    %2557 = vmatprep.subr.mxu0 0.0
    %2558 = vmatpush1.msra.mxu0 0.0
    %2559 = vmatprep.subr.mxu0 0.0
    %2560 = vmatpush1.msra.mxu0 0.0
    %2561 = vmatprep.subr.mxu0 0.0
    %2562 = vmatpush1.msra.mxu0 0.0
    %2563 = vmatprep.subr.mxu0 0.0
    %2564 = vmatpush1.msra.mxu0 0.0
    %2565 = vmatprep.subr.mxu0 0.0
    %2566 = vmatpush1.msra.mxu0 0.0
    %2567 = vmatprep.subr.mxu0 0.0
    %2568 = vmatpush1.msra.mxu0 0.0
    %2569 = vmatprep.subr.mxu0 0.0
    %2570 = vmatpush1.msra.mxu0 0.0
    %2571 = vmatprep.subr.mxu0 0.0
    %2572 = vmatpush1.msra.mxu0 0.0
    %2573 = vmatprep.subr.mxu0 0.0
    %2574 = vmatpush1.msra.mxu0 0.0
    %2575 = vmatprep.subr.mxu0 0.0
    %2576 = vmatpush1.msra.mxu0 0.0
    %2577 = vmatprep.subr.mxu0 0.0
    %2578 = vmatpush1.msra.mxu0 0.0
    %2579 = vmatprep.subr.mxu0 0.0
    %2580 = vmatpush1.msra.mxu0 0.0
    %2581 = vmatprep.subr.mxu0 0.0
    %2582 = vmatpush1.msra.mxu0 0.0
    %2583 = vmatprep.subr.mxu0 0.0
    %2584 = vmatpush1.msra.mxu0 0.0
    %2585 = vmatprep.subr.mxu0 0.0
    %2586 = vmatpush1.msra.mxu0 0.0
    %2587 = vmatprep.subr.mxu0 0.0
    %2588 = vmatpush1.msra.mxu0 0.0
    %2589 = vmatprep.subr.mxu0 0.0
    %2590 = vmatpush1.msra.mxu0 0.0
    %2591 = vmatprep.subr.mxu0 0.0
    %2592 = vmatpush1.msra.mxu0 0.0
    %2593 = vmatprep.subr.mxu0 0.0
    %2594 = vmatpush1.msra.mxu0 0.0
    %2595 = vmatprep.subr.mxu0 0.0
    %2596 = vmatpush1.msra.mxu0 0.0
    %2597 = vmatprep.subr.mxu0 0.0
    %2598 = vmatpush1.msra.mxu0 0.0
    %2599 = vmatprep.subr.mxu0 0.0
    %2600 = vmatpush1.msra.mxu0 0.0
    %2601 = vmatprep.subr.mxu0 0.0
    %2602 = vmatpush1.msra.mxu0 0.0
    %2603 = vmatprep.subr.mxu0 0.0
    %2604 = vmatpush1.msra.mxu0 0.0
    %2605 = vmatprep.subr.mxu0 0.0
    %2606 = vmatpush1.msra.mxu0 0.0
    %2607 = vmatprep.subr.mxu0 0.0
    %2608 = vmatpush1.msra.mxu0 0.0
    %2609 = vmatprep.mubr.f32.mxu0 0.0
    %2610 = vmatmul.mubr.f32.gmra.mrb[0].mxu0 %v2543
    %v2611 = vpop.f32.mrb[0].mxu0
    %v2612 = vadd.f32 0.0, %v2611
    %v2613 = vpop.f32.mrb[0].mxu0
    %2614 = vdwg.mxu0
    %v2615 = vadd.f32 %v2542, %v2612
    %v2616 = vxor.u32 %v2615, 2147483648
    %v2617 = vmul.f32 %v2616, 1.442695
    %v2618 = vpow.pop %v2617
    %v2619 = vadd.f32 %v2618, 1.0
    %v2620 = vrcp.pop %v2619
    %v2621 = vmul.f32 1.0, %v2620
    %v2622 = vtanh.pop %v2615
    %v2623 = vmul.f32 %v2621, %v2530
    %2625 = vrot.lane.b32.xlu0 %v2622, 64
    %v2626 = vpop.permute.xlu0 %2625
    %v2628 = vmul.f32 %v2621, %v2626
    %2630 = vrot.lane.b32.xlu0 %v2628, 32
    %v2631 = vpop.permute.xlu0 %2630
    %v2633 = vadd.f32 %v2623, %v2631
    %v2634 = vtanh.pop %v2633
    %2636 = vrot.lane.b32.xlu0 %v2634, 64
    %v2637 = vpop.permute.xlu0 %2636
    %v2639 = vmul.f32 %v2621, %v2637
    %2641 = vrot.lane.b32.xlu0 %v2639, 32
    %v2642 = vpop.permute.xlu0 %2641
    %2644 = vst.msk [vmem:[#allocation3 + $0xa] sm:$0x3] %vm284, %v2642
    %v2645 = vld [vmem:[#allocation2 + $0xc] sm:$0x3]
    %v2646 = vsel %vm181, %v2642, 0
    %2648 = vmatprep.subr.mxu0 0.0
    %2649 = vmatpush1.msra.mxu0 %v2025
    %2650 = vmatprep.subr.mxu0 0.0
    %2651 = vmatpush1.msra.mxu0 %v2026
    %2652 = vmatprep.subr.mxu0 0.0
    %2653 = vmatpush1.msra.mxu0 %v2027
    %2654 = vmatprep.subr.mxu0 0.0
    %2655 = vmatpush1.msra.mxu0 %v2028
    %2656 = vmatprep.subr.mxu0 0.0
    %2657 = vmatpush1.msra.mxu0 0.0
    %2658 = vmatprep.subr.mxu0 0.0
    %2659 = vmatpush1.msra.mxu0 0.0
    %2660 = vmatprep.subr.mxu0 0.0
    %2661 = vmatpush1.msra.mxu0 0.0
    %2662 = vmatprep.subr.mxu0 0.0
    %2663 = vmatpush1.msra.mxu0 0.0
    %2664 = vmatprep.subr.mxu0 0.0
    %2665 = vmatpush1.msra.mxu0 0.0
    %2666 = vmatprep.subr.mxu0 0.0
    %2667 = vmatpush1.msra.mxu0 0.0
    %2668 = vmatprep.subr.mxu0 0.0
    %2669 = vmatpush1.msra.mxu0 0.0
    %2670 = vmatprep.subr.mxu0 0.0
    %2671 = vmatpush1.msra.mxu0 0.0
    %2672 = vmatprep.subr.mxu0 0.0
    %2673 = vmatpush1.msra.mxu0 0.0
    %2674 = vmatprep.subr.mxu0 0.0
    %2675 = vmatpush1.msra.mxu0 0.0
    %2676 = vmatprep.subr.mxu0 0.0
    %2677 = vmatpush1.msra.mxu0 0.0
    %2678 = vmatprep.subr.mxu0 0.0
    %2679 = vmatpush1.msra.mxu0 0.0
    %2680 = vmatprep.subr.mxu0 0.0
    %2681 = vmatpush1.msra.mxu0 0.0
    %2682 = vmatprep.subr.mxu0 0.0
    %2683 = vmatpush1.msra.mxu0 0.0
    %2684 = vmatprep.subr.mxu0 0.0
    %2685 = vmatpush1.msra.mxu0 0.0
    %2686 = vmatprep.subr.mxu0 0.0
    %2687 = vmatpush1.msra.mxu0 0.0
    %2688 = vmatprep.subr.mxu0 0.0
    %2689 = vmatpush1.msra.mxu0 0.0
    %2690 = vmatprep.subr.mxu0 0.0
    %2691 = vmatpush1.msra.mxu0 0.0
    %2692 = vmatprep.subr.mxu0 0.0
    %2693 = vmatpush1.msra.mxu0 0.0
    %2694 = vmatprep.subr.mxu0 0.0
    %2695 = vmatpush1.msra.mxu0 0.0
    %2696 = vmatprep.subr.mxu0 0.0
    %2697 = vmatpush1.msra.mxu0 0.0
    %2698 = vmatprep.subr.mxu0 0.0
    %2699 = vmatpush1.msra.mxu0 0.0
    %2700 = vmatprep.subr.mxu0 0.0
    %2701 = vmatpush1.msra.mxu0 0.0
    %2702 = vmatprep.subr.mxu0 0.0
    %2703 = vmatpush1.msra.mxu0 0.0
    %2704 = vmatprep.subr.mxu0 0.0
    %2705 = vmatpush1.msra.mxu0 0.0
    %2706 = vmatprep.subr.mxu0 0.0
    %2707 = vmatpush1.msra.mxu0 0.0
    %2708 = vmatprep.subr.mxu0 0.0
    %2709 = vmatpush1.msra.mxu0 0.0
    %2710 = vmatprep.subr.mxu0 0.0
    %2711 = vmatpush1.msra.mxu0 0.0
    %2712 = vmatprep.mubr.f32.mxu0 0.0
    %2713 = vmatmul.mubr.f32.gmra.mrb[0].mxu0 %v2646
    %v2714 = vpop.f32.mrb[0].mxu0
    %v2715 = vadd.f32 0.0, %v2714
    %v2716 = vpop.f32.mrb[0].mxu0
    %2717 = vdwg.mxu0
    %v2718 = vadd.f32 %v2645, %v2715
    %v2719 = vxor.u32 %v2718, 2147483648
    %v2720 = vmul.f32 %v2719, 1.442695
    %v2721 = vpow.pop %v2720
    %v2722 = vadd.f32 %v2721, 1.0
    %v2723 = vrcp.pop %v2722
    %v2724 = vmul.f32 1.0, %v2723
    %v2725 = vtanh.pop %v2718
    %v2726 = vmul.f32 %v2724, %v2633
    %2728 = vrot.lane.b32.xlu0 %v2725, 64
    %v2729 = vpop.permute.xlu0 %2728
    %v2731 = vmul.f32 %v2724, %v2729
    %2733 = vrot.lane.b32.xlu0 %v2731, 32
    %v2734 = vpop.permute.xlu0 %2733
    %v2736 = vadd.f32 %v2726, %v2734
    %v2737 = vtanh.pop %v2736
    %2739 = vrot.lane.b32.xlu0 %v2737, 64
    %v2740 = vpop.permute.xlu0 %2739
    %v2742 = vmul.f32 %v2724, %v2740
    %2744 = vrot.lane.b32.xlu0 %v2742, 32
    %v2745 = vpop.permute.xlu0 %2744
    %2747 = vst.msk [vmem:[#allocation3 + $0xc] sm:$0x3] %vm284, %v2745
    %v2748 = vld [vmem:[#allocation2 + $0xe] sm:$0x3]
    %v2749 = vsel %vm181, %v2745, 0
    %2751 = vmatprep.subr.mxu0 0.0
    %2752 = vmatpush1.msra.mxu0 %v2025
    %2753 = vmatprep.subr.mxu0 0.0
    %2754 = vmatpush1.msra.mxu0 %v2026
    %2755 = vmatprep.subr.mxu0 0.0
    %2756 = vmatpush1.msra.mxu0 %v2027
    %2757 = vmatprep.subr.mxu0 0.0
    %2758 = vmatpush1.msra.mxu0 %v2028
    %2759 = vmatprep.subr.mxu0 0.0
    %2760 = vmatpush1.msra.mxu0 0.0
    %2761 = vmatprep.subr.mxu0 0.0
    %2762 = vmatpush1.msra.mxu0 0.0
    %2763 = vmatprep.subr.mxu0 0.0
    %2764 = vmatpush1.msra.mxu0 0.0
    %2765 = vmatprep.subr.mxu0 0.0
    %2766 = vmatpush1.msra.mxu0 0.0
    %2767 = vmatprep.subr.mxu0 0.0
    %2768 = vmatpush1.msra.mxu0 0.0
    %2769 = vmatprep.subr.mxu0 0.0
    %2770 = vmatpush1.msra.mxu0 0.0
    %2771 = vmatprep.subr.mxu0 0.0
    %2772 = vmatpush1.msra.mxu0 0.0
    %2773 = vmatprep.subr.mxu0 0.0
    %2774 = vmatpush1.msra.mxu0 0.0
    %2775 = vmatprep.subr.mxu0 0.0
    %2776 = vmatpush1.msra.mxu0 0.0
    %2777 = vmatprep.subr.mxu0 0.0
    %2778 = vmatpush1.msra.mxu0 0.0
    %2779 = vmatprep.subr.mxu0 0.0
    %2780 = vmatpush1.msra.mxu0 0.0
    %2781 = vmatprep.subr.mxu0 0.0
    %2782 = vmatpush1.msra.mxu0 0.0
    %2783 = vmatprep.subr.mxu0 0.0
    %2784 = vmatpush1.msra.mxu0 0.0
    %2785 = vmatprep.subr.mxu0 0.0
    %2786 = vmatpush1.msra.mxu0 0.0
    %2787 = vmatprep.subr.mxu0 0.0
    %2788 = vmatpush1.msra.mxu0 0.0
    %2789 = vmatprep.subr.mxu0 0.0
    %2790 = vmatpush1.msra.mxu0 0.0
    %2791 = vmatprep.subr.mxu0 0.0
    %2792 = vmatpush1.msra.mxu0 0.0
    %2793 = vmatprep.subr.mxu0 0.0
    %2794 = vmatpush1.msra.mxu0 0.0
    %2795 = vmatprep.subr.mxu0 0.0
    %2796 = vmatpush1.msra.mxu0 0.0
    %2797 = vmatprep.subr.mxu0 0.0
    %2798 = vmatpush1.msra.mxu0 0.0
    %2799 = vmatprep.subr.mxu0 0.0
    %2800 = vmatpush1.msra.mxu0 0.0
    %2801 = vmatprep.subr.mxu0 0.0
    %2802 = vmatpush1.msra.mxu0 0.0
    %2803 = vmatprep.subr.mxu0 0.0
    %2804 = vmatpush1.msra.mxu0 0.0
    %2805 = vmatprep.subr.mxu0 0.0
    %2806 = vmatpush1.msra.mxu0 0.0
    %2807 = vmatprep.subr.mxu0 0.0
    %2808 = vmatpush1.msra.mxu0 0.0
    %2809 = vmatprep.subr.mxu0 0.0
    %2810 = vmatpush1.msra.mxu0 0.0
    %2811 = vmatprep.subr.mxu0 0.0
    %2812 = vmatpush1.msra.mxu0 0.0
    %2813 = vmatprep.subr.mxu0 0.0
    %2814 = vmatpush1.msra.mxu0 0.0
    %2815 = vmatprep.mubr.f32.mxu0 0.0
    %2816 = vmatmul.mubr.f32.gmra.mrb[0].mxu0 %v2749
    %v2817 = vpop.f32.mrb[0].mxu0
    %v2818 = vadd.f32 0.0, %v2817
    %v2819 = vpop.f32.mrb[0].mxu0
    %2820 = vdwg.mxu0
    %v2821 = vadd.f32 %v2748, %v2818
    %v2822 = vxor.u32 %v2821, 2147483648
    %v2823 = vmul.f32 %v2822, 1.442695
    %v2824 = vpow.pop %v2823
    %v2825 = vadd.f32 %v2824, 1.0
    %v2826 = vrcp.pop %v2825
    %v2827 = vmul.f32 1.0, %v2826
    %v2828 = vtanh.pop %v2821
    %v2829 = vmul.f32 %v2827, %v2736
    %2831 = vrot.lane.b32.xlu0 %v2828, 64
    %v2832 = vpop.permute.xlu0 %2831
    %v2834 = vmul.f32 %v2827, %v2832
    %2836 = vrot.lane.b32.xlu0 %v2834, 32
    %v2837 = vpop.permute.xlu0 %2836
    %v2839 = vadd.f32 %v2829, %v2837
    %v2840 = vtanh.pop %v2839
    %2842 = vrot.lane.b32.xlu0 %v2840, 64
    %v2843 = vpop.permute.xlu0 %2842
    %v2845 = vmul.f32 %v2827, %v2843
    %2847 = vrot.lane.b32.xlu0 %v2845, 32
    %v2848 = vpop.permute.xlu0 %2847
    %2850 = vst.msk [vmem:[#allocation3 + $0xe] sm:$0x3] %vm284, %v2848
    %v2851 = vld [vmem:[%s10] sm:$0xff]
    %v2852 = vld [vmem:[%s10 + $0x8] sm:$0xff]
    %v2853 = vld [vmem:[%s10 + $0x10] sm:$0xff]
    %v2854 = vld [vmem:[%s10 + $0x18] sm:$0xff]
    %v2855 = vld [vmem:[#allocation4] sm:$0x1]
    %v2857 = vlaneseq
    %v2858 = vshrl.u32 %v2857, 7
    %v2859 = vsub.s32 0, %v2858
    %v2860 = vrot.slane %v2855, %v2859
    %v2862 = vsel %vm181, %v2848, 0
    %2864 = vmatprep.subr.mxu0 0.0
    %2865 = vmatpush1.msra.mxu0 %v2851
    %2866 = vmatprep.subr.mxu0 0.0
    %2867 = vmatpush1.msra.mxu0 %v2852
    %2868 = vmatprep.subr.mxu0 0.0
    %2869 = vmatpush1.msra.mxu0 %v2853
    %2870 = vmatprep.subr.mxu0 0.0
    %2871 = vmatpush1.msra.mxu0 %v2854
    %2872 = vmatprep.subr.mxu0 0.0
    %2873 = vmatpush1.msra.mxu0 0.0
    %2874 = vmatprep.subr.mxu0 0.0
    %2875 = vmatpush1.msra.mxu0 0.0
    %2876 = vmatprep.subr.mxu0 0.0
    %2877 = vmatpush1.msra.mxu0 0.0
    %2878 = vmatprep.subr.mxu0 0.0
    %2879 = vmatpush1.msra.mxu0 0.0
    %2880 = vmatprep.subr.mxu0 0.0
    %2881 = vmatpush1.msra.mxu0 0.0
    %2882 = vmatprep.subr.mxu0 0.0
    %2883 = vmatpush1.msra.mxu0 0.0
    %2884 = vmatprep.subr.mxu0 0.0
    %2885 = vmatpush1.msra.mxu0 0.0
    %2886 = vmatprep.subr.mxu0 0.0
    %2887 = vmatpush1.msra.mxu0 0.0
    %2888 = vmatprep.subr.mxu0 0.0
    %2889 = vmatpush1.msra.mxu0 0.0
    %2890 = vmatprep.subr.mxu0 0.0
    %2891 = vmatpush1.msra.mxu0 0.0
    %2892 = vmatprep.subr.mxu0 0.0
    %2893 = vmatpush1.msra.mxu0 0.0
    %2894 = vmatprep.subr.mxu0 0.0
    %2895 = vmatpush1.msra.mxu0 0.0
    %2896 = vmatprep.subr.mxu0 0.0
    %2897 = vmatpush1.msra.mxu0 0.0
    %2898 = vmatprep.subr.mxu0 0.0
    %2899 = vmatpush1.msra.mxu0 0.0
    %2900 = vmatprep.subr.mxu0 0.0
    %2901 = vmatpush1.msra.mxu0 0.0
    %2902 = vmatprep.subr.mxu0 0.0
    %2903 = vmatpush1.msra.mxu0 0.0
    %2904 = vmatprep.subr.mxu0 0.0
    %2905 = vmatpush1.msra.mxu0 0.0
    %2906 = vmatprep.subr.mxu0 0.0
    %2907 = vmatpush1.msra.mxu0 0.0
    %2908 = vmatprep.subr.mxu0 0.0
    %2909 = vmatpush1.msra.mxu0 0.0
    %2910 = vmatprep.subr.mxu0 0.0
    %2911 = vmatpush1.msra.mxu0 0.0
    %2912 = vmatprep.subr.mxu0 0.0
    %2913 = vmatpush1.msra.mxu0 0.0
    %2914 = vmatprep.subr.mxu0 0.0
    %2915 = vmatpush1.msra.mxu0 0.0
    %2916 = vmatprep.subr.mxu0 0.0
    %2917 = vmatpush1.msra.mxu0 0.0
    %2918 = vmatprep.subr.mxu0 0.0
    %2919 = vmatpush1.msra.mxu0 0.0
    %2920 = vmatprep.subr.mxu0 0.0
    %2921 = vmatpush1.msra.mxu0 0.0
    %2922 = vmatprep.subr.mxu0 0.0
    %2923 = vmatpush1.msra.mxu0 0.0
    %2924 = vmatprep.subr.mxu0 0.0
    %2925 = vmatpush1.msra.mxu0 0.0
    %2926 = vmatprep.subr.mxu0 0.0
    %2927 = vmatpush1.msra.mxu0 0.0
    %2928 = vmatprep.mubr.f32.mxu0 0.0
    %2929 = vmatmul.mubr.f32.gmra.mrb[0].mxu0 %v2862
    %v2930 = vpop.f32.mrb[0].mxu0
    %v2931 = vadd.f32 %v2860, %v2930
    %v2932 = vpop.f32.mrb[0].mxu0
    %2933 = vdwg.mxu0
    %vm2934 = vcmask 1024
    %2935 = vst.msk [vmem:[%s12] sm:$0x3] %vm2934, %v2931
    // Predicated region
    $region62: #{my_model_forward.1} parent=1 // pred_check
      _
    $region63: #{my_model_forward.1} parent=1 // pred_check_branch
      %2937 = sbr.rel (0) target = $region65
    $region64: #{my_model_forward.1} parent=1 // pred_region
      _
    $region65: #{my_model_forward.1} parent=1 // pred_fallthru
      _
    // Predicated region
    $region66: #{my_model_forward.1} parent=1 // pred_check
      _
    $region67: #{my_model_forward.1} parent=1 // pred_check_branch
      %2939 = sbr.rel (0) target = $region69
    $region68: #{my_model_forward.1} parent=1 // pred_region
      _
    $region69: #{my_model_forward.1} parent=1 // pred_fallthru
      _
    %2940 = vsyncpa [#allocation6], 1
    %2941 = vsyncpa [#allocation8], 1

</llo_original>
